<compile_context>
chip_gen: v7x
topology: tpu7x:2x2x1
jax: 0.10.0
libtpu: 0.0.40
codegen_flags: <defaults>
</compile_context>

<pallas_src>
import functools

import jax
import jax.numpy as jnp
import numpy as np
from jax import lax
from jax.experimental import pallas as pl
from jax.experimental.pallas import tpu as pltpu


def _round_up(n, m):
    return -(-n // m) * m


# ---------------- fused projection + recurrence kernel (one grid step = one time chunk) ----------------
def _lstm_chunk_kernel(x_ref, wih_ref, whh_ref, b_ref,
                       out_ref, hN_ref, cN_ref,
                       gx_sc, h_sc, c_sc,
                       *, seq_len, t_chunk, b_pad, h_pad, needs_mask, unroll):
    ci = pl.program_id(0)
    Bp, Hp = b_pad, h_pad

    @pl.when(ci == 0)
    def _():
        h_sc[...] = jnp.zeros_like(h_sc)
        c_sc[...] = jnp.zeros_like(c_sc)

    # (1) Fused input projection for the whole chunk: one big MXU matmul with
    # the bias folded in.  gx lives only in VMEM (previously an HBM round-trip
    # through a second pallas_call).
    gx_sc[...] = (jnp.dot(x_ref[...], wih_ref[...],
                          preferred_element_type=jnp.float32)
                  + b_ref[...])

    base = ci * t_chunk

    def step(t, carry):
        h, c = carry
        off = pl.multiple_of(t * Bp, Bp)
        gates = gx_sc[pl.ds(off, Bp), :] + jnp.dot(
            h, whh_ref[...], preferred_element_type=jnp.float32)
        # One wide EUP pass: g-gate columns were pre-scaled by 2 in the
        # wrapper, so tanh(z) == 2*sigmoid(2z) - 1 falls out of this sigmoid.
        s = jax.nn.sigmoid(gates)                        # (Bp, 4Hp)
        i_g = s[:, 0 * Hp:1 * Hp]
        f_g = s[:, 1 * Hp:2 * Hp]
        g_g = 2.0 * s[:, 2 * Hp:3 * Hp] - 1.0            # == tanh(g pre-activation)
        o_g = s[:, 3 * Hp:4 * Hp]
        c_new = f_g * c + i_g * g_g
        h_new = o_g * jnp.tanh(c_new)
        out_ref[pl.ds(off, Bp), :] = h_new               # lane-dense (Bp, Hp) store
        if needs_mask:
            # Freeze h/c once past the true sequence length (padded tail steps).
            m = ((base + t) < seq_len).astype(jnp.float32)
            h_new = m * h_new + (1.0 - m) * h
            c_new = m * c_new + (1.0 - m) * c
        return h_new, c_new

    h_fin, c_fin = lax.fori_loop(0, t_chunk, step, (h_sc[...], c_sc[...]),
                                 unroll=unroll)
    h_sc[...] = h_fin
    c_sc[...] = c_fin

    # hN/cN use a constant index_map, so these output blocks stay resident in
    # VMEM across the whole grid and are written back to HBM once at the end;
    # writing them only on the final chunk is therefore correct.
    @pl.when(ci == pl.num_programs(0) - 1)
    def _():
        hN_ref[...] = h_fin
        cN_ref[...] = c_fin


def _pad_gate_blocks(w, H, Hp):
    """Zero-pad each of the 4 gate blocks in the last dim from H to Hp columns."""
    if Hp == H:
        return w
    pad = [(0, 0)] * (w.ndim - 1) + [(0, Hp - H)]
    return jnp.concatenate([jnp.pad(w[..., k * H:(k + 1) * H], pad)
                            for k in range(4)], axis=-1)


def lstm_layer_pallas(x, w_ih_t, w_hh_t, b, *, seq_len, t_chunk, unroll=8):
    """One LSTM layer over a (time, batch)-padded sequence.

    x:       (Tp, Bp, D_in) f32, zero-padded in time (Tp >= seq_len) and batch.
    w_ih_t:  (D_raw, 4H) f32 (transposed PyTorch weight_ih; D_raw <= D_in).
    w_hh_t:  (H, 4H)     f32 (transposed PyTorch weight_hh).
    b:       (1, 4H)     f32 (b_ih + b_hh).
    returns: outputs (Tp, Bp, Hp), h_T (Bp, Hp), c_T (Bp, Hp)   [Hp = lane-padded H]
    """
    Tp, Bp, D_in = x.shape
    H = w_hh_t.shape[0]
    Hp = _round_up(H, 128)
    G = 4 * Hp
    n_chunks = Tp // t_chunk
    needs_mask = (Tp != seq_len)

    # tanh-via-sigmoid: pre-scale the g-gate columns by 2 (exact algebra, done
    # once on small weights); then lane-pad each gate block from H to Hp.
    gate_scale = jnp.concatenate([jnp.ones((2 * H,), jnp.float32),
                                  jnp.full((H,), 2.0, jnp.float32),
                                  jnp.ones((H,), jnp.float32)])
    w_ih_p = _pad_gate_blocks(w_ih_t * gate_scale, H, Hp)
    w_hh_p = _pad_gate_blocks(w_hh_t * gate_scale, H, Hp)
    b_p = _pad_gate_blocks(b * gate_scale, H, Hp)
    # Padded h / x columns are exactly zero, so zero weight rows keep the math
    # exact (padded gate columns stay at 0 through the recurrence).
    w_hh_p = jnp.pad(w_hh_p, ((0, Hp - H), (0, 0)))
    if w_ih_p.shape[0] < D_in:          # x is the Hp-padded output of a previous layer
        w_ih_p = jnp.pad(w_ih_p, ((0, D_in - w_ih_p.shape[0]), (0, 0)))

    # Leading-dim merge only (row-major): free, keeps lanes dense.
    x2 = x.reshape(Tp * Bp, D_in)

    # Explicit VMEM budget (double-buffered x/out + resident weights + gx
    # scratch); capped well under v7x's 64 MiB physical VMEM.
    est = 4 * (2 * t_chunk * Bp * D_in + 2 * t_chunk * Bp * Hp
               + t_chunk * Bp * G + 2 * (D_in * G + Hp * G + G)
               + 6 * Bp * Hp)
    vmem_limit = int(min(max(2 * est, 16 << 20), 48 << 20))

    kernel = functools.partial(
        _lstm_chunk_kernel, seq_len=seq_len, t_chunk=t_chunk, b_pad=Bp,
        h_pad=Hp, needs_mask=needs_mask, unroll=max(1, min(unroll, t_chunk)))

    grid_spec = pltpu.PrefetchScalarGridSpec(
        num_scalar_prefetch=0,
        grid=(n_chunks,),
        in_specs=[
            pl.BlockSpec((t_chunk * Bp, D_in), lambda c: (c, 0)),   # x chunk
            pl.BlockSpec((D_in, G), lambda c: (0, 0)),              # W_ih (resident)
            pl.BlockSpec((Hp, G), lambda c: (0, 0)),                # W_hh (resident)
            pl.BlockSpec((1, G), lambda c: (0, 0)),                 # bias
        ],
        out_specs=[
            pl.BlockSpec((t_chunk * Bp, Hp), lambda c: (c, 0)),     # outputs chunk
            pl.BlockSpec((Bp, Hp), lambda c: (0, 0)),               # h_T
            pl.BlockSpec((Bp, Hp), lambda c: (0, 0)),               # c_T
        ],
        scratch_shapes=[
            pltpu.VMEM((t_chunk * Bp, G), jnp.float32),   # gx for the chunk (VMEM only)
            pltpu.VMEM((Bp, Hp), jnp.float32),            # h carried across chunks
            pltpu.VMEM((Bp, Hp), jnp.float32),            # c carried across chunks
        ],
    )

    outputs, h_T, c_T = pl.pallas_call(
        kernel,
        grid_spec=grid_spec,
        out_shape=(
            jax.ShapeDtypeStruct((Tp * Bp, Hp), jnp.float32),
            jax.ShapeDtypeStruct((Bp, Hp), jnp.float32),
            jax.ShapeDtypeStruct((Bp, Hp), jnp.float32),
        ),
        compiler_params=pltpu.CompilerParams(
            dimension_semantics=("arbitrary",),
            vmem_limit_bytes=vmem_limit),
    )(x2, w_ih_p, w_hh_p, b_p)

    return outputs.reshape(Tp, Bp, Hp), h_T, c_T


# ---------------- Encoder forward ----------------
def encoder_forward(tokens, params, *, t_chunk_cap=64):
    """tokens: (T, B) int32 -> (hidden_state, cell_state), each (n_layers, B, H)."""
    T, B = tokens.shape
    H = params["lstm"][0]["w_hh_t"].shape[0]
    # TODO(synk): embedding gather left to XLA (tiny, data-dependent row gather).
    emb = jnp.take(params["embedding"], tokens, axis=0)            # (T, B, E)
    # Dropout: eval-mode identity (nn.Dropout / inter-layer LSTM dropout disabled).
    t_chunk = min(t_chunk_cap, T)
    Tp = _round_up(T, t_chunk)
    Bp = _round_up(B, 8)
    # Pad batch rows & tail timesteps once (zeros).  Padded batch rows evolve
    # independently (they only ever see the bias) and are sliced off at the end;
    # padded tail timesteps are masked inside the kernel.
    x = jnp.pad(emb, ((0, Tp - T), (0, Bp - B), (0, 0)))
    h_list, c_list = [], []
    for layer in params["lstm"]:
        x, h_T, c_T = lstm_layer_pallas(x, layer["w_ih_t"], layer["w_hh_t"],
                                        layer["b"], seq_len=T, t_chunk=t_chunk)
        h_list.append(h_T[:B, :H])
        c_list.append(c_T[:B, :H])
    return jnp.stack(h_list, axis=0), jnp.stack(c_list, axis=0)


# ---------------- Pure-JAX reference (for correctness check) ----------------
def _lstm_layer_ref(x, w_ih_t, w_hh_t, b):
    T, B, _ = x.shape
    H = w_hh_t.shape[0]
    h = jnp.zeros((B, H), jnp.float32)
    c = jnp.zeros((B, H), jnp.float32)
    outs = []
    for t in range(T):
        gates = x[t] @ w_ih_t + h @ w_hh_t + b
        i = jax.nn.sigmoid(gates[:, 0 * H:1 * H])
        f = jax.nn.sigmoid(gates[:, 1 * H:2 * H])
        g = jnp.tanh(gates[:, 2 * H:3 * H])
        o = jax.nn.sigmoid(gates[:, 3 * H:4 * H])
        c = f * c + i * g
        h = o * jnp.tanh(c)
        outs.append(h)
    return jnp.stack(outs), h, c


def encoder_forward_ref(tokens, params):
    x = jnp.take(params["embedding"], tokens, axis=0)
    h_list, c_list = [], []
    for layer in params["lstm"]:
        x, h_T, c_T = _lstm_layer_ref(x, layer["w_ih_t"], layer["w_hh_t"], layer["b"])
        h_list.append(h_T)
        c_list.append(c_T)
    return jnp.stack(h_list), jnp.stack(c_list)


# ---------------- Parameter init (deterministic, PyTorch-like shapes) ----------------
def init_params(key, input_dim, emb_dim, hidden_dim, n_layers):
    keys = jax.random.split(key, 1 + 4 * n_layers)
    params = {"embedding": jax.random.normal(keys[0], (input_dim, emb_dim), jnp.float32)}
    lstm = []
    bound = 1.0 / np.sqrt(hidden_dim)
    k = 1
    for layer in range(n_layers):
        d_in = emb_dim if layer == 0 else hidden_dim
        w_ih = jax.random.uniform(keys[k], (4 * hidden_dim, d_in), jnp.float32, -bound, bound)
        w_hh = jax.random.uniform(keys[k + 1], (4 * hidden_dim, hidden_dim), jnp.float32, -bound, bound)
        b_ih = jax.random.uniform(keys[k + 2], (4 * hidden_dim,), jnp.float32, -bound, bound)
        b_hh = jax.random.uniform(keys[k + 3], (4 * hidden_dim,), jnp.float32, -bound, bound)
        k += 4
        lstm.append({
            "w_ih_t": w_ih.T,                       # (d_in, 4H)
            "w_hh_t": w_hh.T,                       # (H, 4H)
            "b": (b_ih + b_hh)[None, :],            # (1, 4H)
        })
    params["lstm"] = lstm
    return params


if __name__ == "__main__":
    # Small shapes consistent with the module (Encoder(input_dim, 128, 256, 2) scaled down).
    INPUT_DIM, EMB_DIM, HIDDEN_DIM, N_LAYERS = 50, 32, 32, 2

    key = jax.random.PRNGKey(0)
    pkey, tkey, tkey2 = jax.random.split(key, 3)
    params = init_params(pkey, INPUT_DIM, EMB_DIM, HIDDEN_DIM, N_LAYERS)

    # Case 1: T fits in one chunk (no time padding / masking).
    T, B = 8, 2
    tokens = jax.random.randint(tkey, (T, B), 0, INPUT_DIM, dtype=jnp.int32)
    hidden_state, cell_state = encoder_forward(tokens, params)
    jax.block_until_ready((hidden_state, cell_state))
    h_ref, c_ref = encoder_forward_ref(tokens, params)
    assert hidden_state.shape == (N_LAYERS, B, HIDDEN_DIM)
    assert cell_state.shape == (N_LAYERS, B, HIDDEN_DIM)
    np.testing.assert_allclose(np.asarray(hidden_state), np.asarray(h_ref), rtol=1e-4, atol=1e-4)
    np.testing.assert_allclose(np.asarray(cell_state), np.asarray(c_ref), rtol=1e-4, atol=1e-4)

    # Case 2: prime T + small chunk cap -> multi-chunk grid, padded/masked tail
    # timesteps, and batch padding (3 -> 8).
    T2, B2 = 11, 3
    tokens2 = jax.random.randint(tkey2, (T2, B2), 0, INPUT_DIM, dtype=jnp.int32)
    h2, c2 = encoder_forward(tokens2, params, t_chunk_cap=4)
    jax.block_until_ready((h2, c2))
    h2_ref, c2_ref = encoder_forward_ref(tokens2, params)
    np.testing.assert_allclose(np.asarray(h2), np.asarray(h2_ref), rtol=1e-4, atol=1e-4)
    np.testing.assert_allclose(np.asarray(c2), np.asarray(c2_ref), rtol=1e-4, atol=1e-4)

    print("KERNEL_OK")
</pallas_src>

<mosaic_0001>
module attributes {stable_mosaic.version = 11 : i64} {
  func.func @_lstm_chunk_kernel(%arg0: i32, %arg1: memref<64x32xf32, #tpu.memory_space<vmem>>, %arg2: memref<32x512xf32, #tpu.memory_space<vmem>>, %arg3: memref<128x512xf32, #tpu.memory_space<vmem>>, %arg4: memref<1x512xf32, #tpu.memory_space<vmem>>, %arg5: memref<64x128xf32, #tpu.memory_space<vmem>>, %arg6: memref<8x128xf32, #tpu.memory_space<vmem>>, %arg7: memref<8x128xf32, #tpu.memory_space<vmem>>, %arg8: memref<64x512xf32, #tpu.memory_space<vmem>>, %arg9: memref<8x128xf32, #tpu.memory_space<vmem>>, %arg10: memref<8x128xf32, #tpu.memory_space<vmem>>) attributes {dimension_semantics = [#tpu.dimension_semantics<arbitrary>], iteration_bounds = array<i64: 1>, scalar_prefetch = 0 : i64, scratch_operands = 3 : i64, tpu.core_type = #tpu.core_type<tc>, window_params = [{transform_indices = @transform_0, window_bounds = array<i64: 64, 32>}, {pipeline_mode = #tpu.pipeline_mode<synchronous>, transform_indices = @transform_1, window_bounds = array<i64: 32, 512>}, {pipeline_mode = #tpu.pipeline_mode<synchronous>, transform_indices = @transform_2, window_bounds = array<i64: 128, 512>}, {pipeline_mode = #tpu.pipeline_mode<synchronous>, transform_indices = @transform_3, window_bounds = array<i64: 1, 512>}, {transform_indices = @transform_4, window_bounds = array<i64: 64, 128>}, {pipeline_mode = #tpu.pipeline_mode<synchronous>, transform_indices = @transform_5, window_bounds = array<i64: 8, 128>}, {pipeline_mode = #tpu.pipeline_mode<synchronous>, transform_indices = @transform_6, window_bounds = array<i64: 8, 128>}]} {
    %c0_i32 = arith.constant 0 : i32
    %0 = arith.cmpi eq, %arg0, %c0_i32 : i32
    %1 = arith.extui %0 : i1 to i32
    %c0_i32_0 = arith.constant 0 : i32
    %2 = arith.cmpi ne, %1, %c0_i32_0 : i32
    scf.if %2 {
      %cst_91 = arith.constant 0.000000e+00 : f32
      %233 = vector.broadcast %cst_91 : f32 to vector<8x128xf32>
      %c0_92 = arith.constant 0 : index
      %c0_93 = arith.constant 0 : index
      %234 = vector.load %arg9[%c0_92, %c0_93] : memref<8x128xf32, #tpu.memory_space<vmem>>, vector<8x128xf32>
      tpu.vector_store %arg9[%c0_92, %c0_93], %233 {strides = array<i32>} : memref<8x128xf32, #tpu.memory_space<vmem>>, vector<8x128xf32>,
      %cst_94 = arith.constant 0.000000e+00 : f32
      %235 = vector.broadcast %cst_94 : f32 to vector<8x128xf32>
      %c0_95 = arith.constant 0 : index
      %c0_96 = arith.constant 0 : index
      %236 = vector.load %arg10[%c0_95, %c0_96] : memref<8x128xf32, #tpu.memory_space<vmem>>, vector<8x128xf32>
      tpu.vector_store %arg10[%c0_95, %c0_96], %235 {strides = array<i32>} : memref<8x128xf32, #tpu.memory_space<vmem>>, vector<8x128xf32>,
    } else {
    }
    %c0 = arith.constant 0 : index
    %c0_1 = arith.constant 0 : index
    %3 = vector.load %arg1[%c0, %c0_1] : memref<64x32xf32, #tpu.memory_space<vmem>>, vector<64x32xf32>
    %c0_2 = arith.constant 0 : index
    %c0_3 = arith.constant 0 : index
    %4 = vector.load %arg2[%c0_2, %c0_3] : memref<32x512xf32, #tpu.memory_space<vmem>>, vector<32x512xf32>
    %cst = arith.constant dense<0.000000e+00> : vector<64x512xf32>
    %5 = tpu.matmul %3, %4, %cst {dimension_numbers = #tpu.dot_dimension_numbers<[1], [0], [0], [1], [0, 0, 1, 1], [], []>} : vector<64x32xf32>, vector<32x512xf32>, vector<64x512xf32> -> vector<64x512xf32>
    %c0_4 = arith.constant 0 : index
    %c0_5 = arith.constant 0 : index
    %6 = vector.load %arg4[%c0_4, %c0_5] : memref<1x512xf32, #tpu.memory_space<vmem>>, vector<1x512xf32>
    %7 = vector.broadcast %6 : vector<1x512xf32> to vector<64x512xf32>
    %8 = arith.addf %5, %7 : vector<64x512xf32>
    %c0_6 = arith.constant 0 : index
    %c0_7 = arith.constant 0 : index
    %9 = vector.load %arg8[%c0_6, %c0_7] : memref<64x512xf32, #tpu.memory_space<vmem>>, vector<64x512xf32>
    tpu.vector_store %arg8[%c0_6, %c0_7], %8 {strides = array<i32>} : memref<64x512xf32, #tpu.memory_space<vmem>>, vector<64x512xf32>,
    %c0_8 = arith.constant 0 : index
    %c0_9 = arith.constant 0 : index
    %10 = vector.load %arg9[%c0_8, %c0_9] : memref<8x128xf32, #tpu.memory_space<vmem>>, vector<8x128xf32>
    %c0_10 = arith.constant 0 : index
    %c0_11 = arith.constant 0 : index
    %11 = vector.load %arg10[%c0_10, %c0_11] : memref<8x128xf32, #tpu.memory_space<vmem>>, vector<8x128xf32>
    %c0_i32_12 = arith.constant 0 : i32
    %c8_i32 = arith.constant 8 : i32
    %12 = arith.muli %c0_i32_12, %c8_i32 : i32
    %13 = tpu.assume_multiple %12, 8 : i32
    %14 = arith.index_cast %13 : i32 to index
    %c0_13 = arith.constant 0 : index
    %15 = vector.load %arg8[%14, %c0_13] : memref<64x512xf32, #tpu.memory_space<vmem>>, vector<8x512xf32>
    %c0_14 = arith.constant 0 : index
    %c0_15 = arith.constant 0 : index
    %16 = vector.load %arg3[%c0_14, %c0_15] : memref<128x512xf32, #tpu.memory_space<vmem>>, vector<128x512xf32>
    %cst_16 = arith.constant dense<0.000000e+00> : vector<8x512xf32>
    %17 = tpu.matmul %10, %16, %cst_16 {dimension_numbers = #tpu.dot_dimension_numbers<[1], [0], [0], [1], [0, 0, 1, 1], [], []>} : vector<8x128xf32>, vector<128x512xf32>, vector<8x512xf32> -> vector<8x512xf32>
    %18 = arith.addf %15, %17 : vector<8x512xf32>
    %19 = arith.negf %18 : vector<8x512xf32>
    %20 = math.exp %19 : vector<8x512xf32>
    %cst_17 = arith.constant 1.000000e+00 : f32
    %21 = vector.broadcast %cst_17 : f32 to vector<8x512xf32>
    %22 = arith.addf %21, %20 : vector<8x512xf32>
    %23 = arith.divf %21, %22 : vector<8x512xf32>
    %24 = vector.extract_strided_slice %23 {offsets = [0, 0], sizes = [8, 128], strides = [1, 1]} : vector<8x512xf32> to vector<8x128xf32>
    %25 = vector.extract_strided_slice %23 {offsets = [0, 128], sizes = [8, 128], strides = [1, 1]} : vector<8x512xf32> to vector<8x128xf32>
    %26 = vector.extract_strided_slice %23 {offsets = [0, 256], sizes = [8, 128], strides = [1, 1]} : vector<8x512xf32> to vector<8x128xf32>
    %cst_18 = arith.constant 2.000000e+00 : f32
    %27 = vector.broadcast %cst_18 : f32 to vector<8x128xf32>
    %28 = arith.mulf %27, %26 : vector<8x128xf32>
    %cst_19 = arith.constant 1.000000e+00 : f32
    %29 = vector.broadcast %cst_19 : f32 to vector<8x128xf32>
    %30 = arith.subf %28, %29 : vector<8x128xf32>
    %31 = vector.extract_strided_slice %23 {offsets = [0, 384], sizes = [8, 128], strides = [1, 1]} : vector<8x512xf32> to vector<8x128xf32>
    %32 = arith.mulf %25, %11 : vector<8x128xf32>
    %33 = arith.mulf %24, %30 : vector<8x128xf32>
    %34 = arith.addf %32, %33 : vector<8x128xf32>
    %35 = math.tanh %34 : vector<8x128xf32>
    %36 = arith.mulf %31, %35 : vector<8x128xf32>
    %37 = arith.index_cast %13 : i32 to index
    %c0_20 = arith.constant 0 : index
    %38 = vector.load %arg5[%37, %c0_20] : memref<64x128xf32, #tpu.memory_space<vmem>>, vector<8x128xf32>
    tpu.vector_store %arg5[%37, %c0_20], %36 {strides = array<i32>} : memref<64x128xf32, #tpu.memory_space<vmem>>, vector<8x128xf32>,
    %c1_i32 = arith.constant 1 : i32
    %c8_i32_21 = arith.constant 8 : i32
    %39 = arith.muli %c1_i32, %c8_i32_21 : i32
    %40 = tpu.assume_multiple %39, 8 : i32
    %41 = arith.index_cast %40 : i32 to index
    %c0_22 = arith.constant 0 : index
    %42 = vector.load %arg8[%41, %c0_22] : memref<64x512xf32, #tpu.memory_space<vmem>>, vector<8x512xf32>
    %c0_23 = arith.constant 0 : index
    %c0_24 = arith.constant 0 : index
    %43 = vector.load %arg3[%c0_23, %c0_24] : memref<128x512xf32, #tpu.memory_space<vmem>>, vector<128x512xf32>
    %cst_25 = arith.constant dense<0.000000e+00> : vector<8x512xf32>
    %44 = tpu.matmul %36, %43, %cst_25 {dimension_numbers = #tpu.dot_dimension_numbers<[1], [0], [0], [1], [0, 0, 1, 1], [], []>} : vector<8x128xf32>, vector<128x512xf32>, vector<8x512xf32> -> vector<8x512xf32>
    %45 = arith.addf %42, %44 : vector<8x512xf32>
    %46 = arith.negf %45 : vector<8x512xf32>
    %47 = math.exp %46 : vector<8x512xf32>
    %cst_26 = arith.constant 1.000000e+00 : f32
    %48 = vector.broadcast %cst_26 : f32 to vector<8x512xf32>
    %49 = arith.addf %48, %47 : vector<8x512xf32>
    %50 = arith.divf %48, %49 : vector<8x512xf32>
    %51 = vector.extract_strided_slice %50 {offsets = [0, 0], sizes = [8, 128], strides = [1, 1]} : vector<8x512xf32> to vector<8x128xf32>
    %52 = vector.extract_strided_slice %50 {offsets = [0, 128], sizes = [8, 128], strides = [1, 1]} : vector<8x512xf32> to vector<8x128xf32>
    %53 = vector.extract_strided_slice %50 {offsets = [0, 256], sizes = [8, 128], strides = [1, 1]} : vector<8x512xf32> to vector<8x128xf32>
    %cst_27 = arith.constant 2.000000e+00 : f32
    %54 = vector.broadcast %cst_27 : f32 to vector<8x128xf32>
    %55 = arith.mulf %54, %53 : vector<8x128xf32>
    %cst_28 = arith.constant 1.000000e+00 : f32
    %56 = vector.broadcast %cst_28 : f32 to vector<8x128xf32>
    %57 = arith.subf %55, %56 : vector<8x128xf32>
    %58 = vector.extract_strided_slice %50 {offsets = [0, 384], sizes = [8, 128], strides = [1, 1]} : vector<8x512xf32> to vector<8x128xf32>
    %59 = arith.mulf %52, %34 : vector<8x128xf32>
    %60 = arith.mulf %51, %57 : vector<8x128xf32>
    %61 = arith.addf %59, %60 : vector<8x128xf32>
    %62 = math.tanh %61 : vector<8x128xf32>
    %63 = arith.mulf %58, %62 : vector<8x128xf32>
    %64 = arith.index_cast %40 : i32 to index
    %c0_29 = arith.constant 0 : index
    %65 = vector.load %arg5[%64, %c0_29] : memref<64x128xf32, #tpu.memory_space<vmem>>, vector<8x128xf32>
    tpu.vector_store %arg5[%64, %c0_29], %63 {strides = array<i32>} : memref<64x128xf32, #tpu.memory_space<vmem>>, vector<8x128xf32>,
    %c2_i32 = arith.constant 2 : i32
    %c8_i32_30 = arith.constant 8 : i32
    %66 = arith.muli %c2_i32, %c8_i32_30 : i32
    %67 = tpu.assume_multiple %66, 8 : i32
    %68 = arith.index_cast %67 : i32 to index
    %c0_31 = arith.constant 0 : index
    %69 = vector.load %arg8[%68, %c0_31] : memref<64x512xf32, #tpu.memory_space<vmem>>, vector<8x512xf32>
    %c0_32 = arith.constant 0 : index
    %c0_33 = arith.constant 0 : index
    %70 = vector.load %arg3[%c0_32, %c0_33] : memref<128x512xf32, #tpu.memory_space<vmem>>, vector<128x512xf32>
    %cst_34 = arith.constant dense<0.000000e+00> : vector<8x512xf32>
    %71 = tpu.matmul %63, %70, %cst_34 {dimension_numbers = #tpu.dot_dimension_numbers<[1], [0], [0], [1], [0, 0, 1, 1], [], []>} : vector<8x128xf32>, vector<128x512xf32>, vector<8x512xf32> -> vector<8x512xf32>
    %72 = arith.addf %69, %71 : vector<8x512xf32>
    %73 = arith.negf %72 : vector<8x512xf32>
    %74 = math.exp %73 : vector<8x512xf32>
    %cst_35 = arith.constant 1.000000e+00 : f32
    %75 = vector.broadcast %cst_35 : f32 to vector<8x512xf32>
    %76 = arith.addf %75, %74 : vector<8x512xf32>
    %77 = arith.divf %75, %76 : vector<8x512xf32>
    %78 = vector.extract_strided_slice %77 {offsets = [0, 0], sizes = [8, 128], strides = [1, 1]} : vector<8x512xf32> to vector<8x128xf32>
    %79 = vector.extract_strided_slice %77 {offsets = [0, 128], sizes = [8, 128], strides = [1, 1]} : vector<8x512xf32> to vector<8x128xf32>
    %80 = vector.extract_strided_slice %77 {offsets = [0, 256], sizes = [8, 128], strides = [1, 1]} : vector<8x512xf32> to vector<8x128xf32>
    %cst_36 = arith.constant 2.000000e+00 : f32
    %81 = vector.broadcast %cst_36 : f32 to vector<8x128xf32>
    %82 = arith.mulf %81, %80 : vector<8x128xf32>
    %cst_37 = arith.constant 1.000000e+00 : f32
    %83 = vector.broadcast %cst_37 : f32 to vector<8x128xf32>
    %84 = arith.subf %82, %83 : vector<8x128xf32>
    %85 = vector.extract_strided_slice %77 {offsets = [0, 384], sizes = [8, 128], strides = [1, 1]} : vector<8x512xf32> to vector<8x128xf32>
    %86 = arith.mulf %79, %61 : vector<8x128xf32>
    %87 = arith.mulf %78, %84 : vector<8x128xf32>
    %88 = arith.addf %86, %87 : vector<8x128xf32>
    %89 = math.tanh %88 : vector<8x128xf32>
    %90 = arith.mulf %85, %89 : vector<8x128xf32>
    %91 = arith.index_cast %67 : i32 to index
    %c0_38 = arith.constant 0 : index
    %92 = vector.load %arg5[%91, %c0_38] : memref<64x128xf32, #tpu.memory_space<vmem>>, vector<8x128xf32>
    tpu.vector_store %arg5[%91, %c0_38], %90 {strides = array<i32>} : memref<64x128xf32, #tpu.memory_space<vmem>>, vector<8x128xf32>,
    %c3_i32 = arith.constant 3 : i32
    %c8_i32_39 = arith.constant 8 : i32
    %93 = arith.muli %c3_i32, %c8_i32_39 : i32
    %94 = tpu.assume_multiple %93, 8 : i32
    %95 = arith.index_cast %94 : i32 to index
    %c0_40 = arith.constant 0 : index
    %96 = vector.load %arg8[%95, %c0_40] : memref<64x512xf32, #tpu.memory_space<vmem>>, vector<8x512xf32>
    %c0_41 = arith.constant 0 : index
    %c0_42 = arith.constant 0 : index
    %97 = vector.load %arg3[%c0_41, %c0_42] : memref<128x512xf32, #tpu.memory_space<vmem>>, vector<128x512xf32>
    %cst_43 = arith.constant dense<0.000000e+00> : vector<8x512xf32>
    %98 = tpu.matmul %90, %97, %cst_43 {dimension_numbers = #tpu.dot_dimension_numbers<[1], [0], [0], [1], [0, 0, 1, 1], [], []>} : vector<8x128xf32>, vector<128x512xf32>, vector<8x512xf32> -> vector<8x512xf32>
    %99 = arith.addf %96, %98 : vector<8x512xf32>
    %100 = arith.negf %99 : vector<8x512xf32>
    %101 = math.exp %100 : vector<8x512xf32>
    %cst_44 = arith.constant 1.000000e+00 : f32
    %102 = vector.broadcast %cst_44 : f32 to vector<8x512xf32>
    %103 = arith.addf %102, %101 : vector<8x512xf32>
    %104 = arith.divf %102, %103 : vector<8x512xf32>
    %105 = vector.extract_strided_slice %104 {offsets = [0, 0], sizes = [8, 128], strides = [1, 1]} : vector<8x512xf32> to vector<8x128xf32>
    %106 = vector.extract_strided_slice %104 {offsets = [0, 128], sizes = [8, 128], strides = [1, 1]} : vector<8x512xf32> to vector<8x128xf32>
    %107 = vector.extract_strided_slice %104 {offsets = [0, 256], sizes = [8, 128], strides = [1, 1]} : vector<8x512xf32> to vector<8x128xf32>
    %cst_45 = arith.constant 2.000000e+00 : f32
    %108 = vector.broadcast %cst_45 : f32 to vector<8x128xf32>
    %109 = arith.mulf %108, %107 : vector<8x128xf32>
    %cst_46 = arith.constant 1.000000e+00 : f32
    %110 = vector.broadcast %cst_46 : f32 to vector<8x128xf32>
    %111 = arith.subf %109, %110 : vector<8x128xf32>
    %112 = vector.extract_strided_slice %104 {offsets = [0, 384], sizes = [8, 128], strides = [1, 1]} : vector<8x512xf32> to vector<8x128xf32>
    %113 = arith.mulf %106, %88 : vector<8x128xf32>
    %114 = arith.mulf %105, %111 : vector<8x128xf32>
    %115 = arith.addf %113, %114 : vector<8x128xf32>
    %116 = math.tanh %115 : vector<8x128xf32>
    %117 = arith.mulf %112, %116 : vector<8x128xf32>
    %118 = arith.index_cast %94 : i32 to index
    %c0_47 = arith.constant 0 : index
    %119 = vector.load %arg5[%118, %c0_47] : memref<64x128xf32, #tpu.memory_space<vmem>>, vector<8x128xf32>
    tpu.vector_store %arg5[%118, %c0_47], %117 {strides = array<i32>} : memref<64x128xf32, #tpu.memory_space<vmem>>, vector<8x128xf32>,
    %c4_i32 = arith.constant 4 : i32
    %c8_i32_48 = arith.constant 8 : i32
    %120 = arith.muli %c4_i32, %c8_i32_48 : i32
    %121 = tpu.assume_multiple %120, 8 : i32
    %122 = arith.index_cast %121 : i32 to index
    %c0_49 = arith.constant 0 : index
    %123 = vector.load %arg8[%122, %c0_49] : memref<64x512xf32, #tpu.memory_space<vmem>>, vector<8x512xf32>
    %c0_50 = arith.constant 0 : index
    %c0_51 = arith.constant 0 : index
    %124 = vector.load %arg3[%c0_50, %c0_51] : memref<128x512xf32, #tpu.memory_space<vmem>>, vector<128x512xf32>
    %cst_52 = arith.constant dense<0.000000e+00> : vector<8x512xf32>
    %125 = tpu.matmul %117, %124, %cst_52 {dimension_numbers = #tpu.dot_dimension_numbers<[1], [0], [0], [1], [0, 0, 1, 1], [], []>} : vector<8x128xf32>, vector<128x512xf32>, vector<8x512xf32> -> vector<8x512xf32>
    %126 = arith.addf %123, %125 : vector<8x512xf32>
    %127 = arith.negf %126 : vector<8x512xf32>
    %128 = math.exp %127 : vector<8x512xf32>
    %cst_53 = arith.constant 1.000000e+00 : f32
    %129 = vector.broadcast %cst_53 : f32 to vector<8x512xf32>
    %130 = arith.addf %129, %128 : vector<8x512xf32>
    %131 = arith.divf %129, %130 : vector<8x512xf32>
    %132 = vector.extract_strided_slice %131 {offsets = [0, 0], sizes = [8, 128], strides = [1, 1]} : vector<8x512xf32> to vector<8x128xf32>
    %133 = vector.extract_strided_slice %131 {offsets = [0, 128], sizes = [8, 128], strides = [1, 1]} : vector<8x512xf32> to vector<8x128xf32>
    %134 = vector.extract_strided_slice %131 {offsets = [0, 256], sizes = [8, 128], strides = [1, 1]} : vector<8x512xf32> to vector<8x128xf32>
    %cst_54 = arith.constant 2.000000e+00 : f32
    %135 = vector.broadcast %cst_54 : f32 to vector<8x128xf32>
    %136 = arith.mulf %135, %134 : vector<8x128xf32>
    %cst_55 = arith.constant 1.000000e+00 : f32
    %137 = vector.broadcast %cst_55 : f32 to vector<8x128xf32>
    %138 = arith.subf %136, %137 : vector<8x128xf32>
    %139 = vector.extract_strided_slice %131 {offsets = [0, 384], sizes = [8, 128], strides = [1, 1]} : vector<8x512xf32> to vector<8x128xf32>
    %140 = arith.mulf %133, %115 : vector<8x128xf32>
    %141 = arith.mulf %132, %138 : vector<8x128xf32>
    %142 = arith.addf %140, %141 : vector<8x128xf32>
    %143 = math.tanh %142 : vector<8x128xf32>
    %144 = arith.mulf %139, %143 : vector<8x128xf32>
    %145 = arith.index_cast %121 : i32 to index
    %c0_56 = arith.constant 0 : index
    %146 = vector.load %arg5[%145, %c0_56] : memref<64x128xf32, #tpu.memory_space<vmem>>, vector<8x128xf32>
    tpu.vector_store %arg5[%145, %c0_56], %144 {strides = array<i32>} : memref<64x128xf32, #tpu.memory_space<vmem>>, vector<8x128xf32>,
    %c5_i32 = arith.constant 5 : i32
    %c8_i32_57 = arith.constant 8 : i32
    %147 = arith.muli %c5_i32, %c8_i32_57 : i32
    %148 = tpu.assume_multiple %147, 8 : i32
    %149 = arith.index_cast %148 : i32 to index
    %c0_58 = arith.constant 0 : index
    %150 = vector.load %arg8[%149, %c0_58] : memref<64x512xf32, #tpu.memory_space<vmem>>, vector<8x512xf32>
    %c0_59 = arith.constant 0 : index
    %c0_60 = arith.constant 0 : index
    %151 = vector.load %arg3[%c0_59, %c0_60] : memref<128x512xf32, #tpu.memory_space<vmem>>, vector<128x512xf32>
    %cst_61 = arith.constant dense<0.000000e+00> : vector<8x512xf32>
    %152 = tpu.matmul %144, %151, %cst_61 {dimension_numbers = #tpu.dot_dimension_numbers<[1], [0], [0], [1], [0, 0, 1, 1], [], []>} : vector<8x128xf32>, vector<128x512xf32>, vector<8x512xf32> -> vector<8x512xf32>
    %153 = arith.addf %150, %152 : vector<8x512xf32>
    %154 = arith.negf %153 : vector<8x512xf32>
    %155 = math.exp %154 : vector<8x512xf32>
    %cst_62 = arith.constant 1.000000e+00 : f32
    %156 = vector.broadcast %cst_62 : f32 to vector<8x512xf32>
    %157 = arith.addf %156, %155 : vector<8x512xf32>
    %158 = arith.divf %156, %157 : vector<8x512xf32>
    %159 = vector.extract_strided_slice %158 {offsets = [0, 0], sizes = [8, 128], strides = [1, 1]} : vector<8x512xf32> to vector<8x128xf32>
    %160 = vector.extract_strided_slice %158 {offsets = [0, 128], sizes = [8, 128], strides = [1, 1]} : vector<8x512xf32> to vector<8x128xf32>
    %161 = vector.extract_strided_slice %158 {offsets = [0, 256], sizes = [8, 128], strides = [1, 1]} : vector<8x512xf32> to vector<8x128xf32>
    %cst_63 = arith.constant 2.000000e+00 : f32
    %162 = vector.broadcast %cst_63 : f32 to vector<8x128xf32>
    %163 = arith.mulf %162, %161 : vector<8x128xf32>
    %cst_64 = arith.constant 1.000000e+00 : f32
    %164 = vector.broadcast %cst_64 : f32 to vector<8x128xf32>
    %165 = arith.subf %163, %164 : vector<8x128xf32>
    %166 = vector.extract_strided_slice %158 {offsets = [0, 384], sizes = [8, 128], strides = [1, 1]} : vector<8x512xf32> to vector<8x128xf32>
    %167 = arith.mulf %160, %142 : vector<8x128xf32>
    %168 = arith.mulf %159, %165 : vector<8x128xf32>
    %169 = arith.addf %167, %168 : vector<8x128xf32>
    %170 = math.tanh %169 : vector<8x128xf32>
    %171 = arith.mulf %166, %170 : vector<8x128xf32>
    %172 = arith.index_cast %148 : i32 to index
    %c0_65 = arith.constant 0 : index
    %173 = vector.load %arg5[%172, %c0_65] : memref<64x128xf32, #tpu.memory_space<vmem>>, vector<8x128xf32>
    tpu.vector_store %arg5[%172, %c0_65], %171 {strides = array<i32>} : memref<64x128xf32, #tpu.memory_space<vmem>>, vector<8x128xf32>,
    %c6_i32 = arith.constant 6 : i32
    %c8_i32_66 = arith.constant 8 : i32
    %174 = arith.muli %c6_i32, %c8_i32_66 : i32
    %175 = tpu.assume_multiple %174, 8 : i32
    %176 = arith.index_cast %175 : i32 to index
    %c0_67 = arith.constant 0 : index
    %177 = vector.load %arg8[%176, %c0_67] : memref<64x512xf32, #tpu.memory_space<vmem>>, vector<8x512xf32>
    %c0_68 = arith.constant 0 : index
    %c0_69 = arith.constant 0 : index
    %178 = vector.load %arg3[%c0_68, %c0_69] : memref<128x512xf32, #tpu.memory_space<vmem>>, vector<128x512xf32>
    %cst_70 = arith.constant dense<0.000000e+00> : vector<8x512xf32>
    %179 = tpu.matmul %171, %178, %cst_70 {dimension_numbers = #tpu.dot_dimension_numbers<[1], [0], [0], [1], [0, 0, 1, 1], [], []>} : vector<8x128xf32>, vector<128x512xf32>, vector<8x512xf32> -> vector<8x512xf32>
    %180 = arith.addf %177, %179 : vector<8x512xf32>
    %181 = arith.negf %180 : vector<8x512xf32>
    %182 = math.exp %181 : vector<8x512xf32>
    %cst_71 = arith.constant 1.000000e+00 : f32
    %183 = vector.broadcast %cst_71 : f32 to vector<8x512xf32>
    %184 = arith.addf %183, %182 : vector<8x512xf32>
    %185 = arith.divf %183, %184 : vector<8x512xf32>
    %186 = vector.extract_strided_slice %185 {offsets = [0, 0], sizes = [8, 128], strides = [1, 1]} : vector<8x512xf32> to vector<8x128xf32>
    %187 = vector.extract_strided_slice %185 {offsets = [0, 128], sizes = [8, 128], strides = [1, 1]} : vector<8x512xf32> to vector<8x128xf32>
    %188 = vector.extract_strided_slice %185 {offsets = [0, 256], sizes = [8, 128], strides = [1, 1]} : vector<8x512xf32> to vector<8x128xf32>
    %cst_72 = arith.constant 2.000000e+00 : f32
    %189 = vector.broadcast %cst_72 : f32 to vector<8x128xf32>
    %190 = arith.mulf %189, %188 : vector<8x128xf32>
    %cst_73 = arith.constant 1.000000e+00 : f32
    %191 = vector.broadcast %cst_73 : f32 to vector<8x128xf32>
    %192 = arith.subf %190, %191 : vector<8x128xf32>
    %193 = vector.extract_strided_slice %185 {offsets = [0, 384], sizes = [8, 128], strides = [1, 1]} : vector<8x512xf32> to vector<8x128xf32>
    %194 = arith.mulf %187, %169 : vector<8x128xf32>
    %195 = arith.mulf %186, %192 : vector<8x128xf32>
    %196 = arith.addf %194, %195 : vector<8x128xf32>
    %197 = math.tanh %196 : vector<8x128xf32>
    %198 = arith.mulf %193, %197 : vector<8x128xf32>
    %199 = arith.index_cast %175 : i32 to index
    %c0_74 = arith.constant 0 : index
    %200 = vector.load %arg5[%199, %c0_74] : memref<64x128xf32, #tpu.memory_space<vmem>>, vector<8x128xf32>
    tpu.vector_store %arg5[%199, %c0_74], %198 {strides = array<i32>} : memref<64x128xf32, #tpu.memory_space<vmem>>, vector<8x128xf32>,
    %c7_i32 = arith.constant 7 : i32
    %c8_i32_75 = arith.constant 8 : i32
    %201 = arith.muli %c7_i32, %c8_i32_75 : i32
    %202 = tpu.assume_multiple %201, 8 : i32
    %203 = arith.index_cast %202 : i32 to index
    %c0_76 = arith.constant 0 : index
    %204 = vector.load %arg8[%203, %c0_76] : memref<64x512xf32, #tpu.memory_space<vmem>>, vector<8x512xf32>
    %c0_77 = arith.constant 0 : index
    %c0_78 = arith.constant 0 : index
    %205 = vector.load %arg3[%c0_77, %c0_78] : memref<128x512xf32, #tpu.memory_space<vmem>>, vector<128x512xf32>
    %cst_79 = arith.constant dense<0.000000e+00> : vector<8x512xf32>
    %206 = tpu.matmul %198, %205, %cst_79 {dimension_numbers = #tpu.dot_dimension_numbers<[1], [0], [0], [1], [0, 0, 1, 1], [], []>} : vector<8x128xf32>, vector<128x512xf32>, vector<8x512xf32> -> vector<8x512xf32>
    %207 = arith.addf %204, %206 : vector<8x512xf32>
    %208 = arith.negf %207 : vector<8x512xf32>
    %209 = math.exp %208 : vector<8x512xf32>
    %cst_80 = arith.constant 1.000000e+00 : f32
    %210 = vector.broadcast %cst_80 : f32 to vector<8x512xf32>
    %211 = arith.addf %210, %209 : vector<8x512xf32>
    %212 = arith.divf %210, %211 : vector<8x512xf32>
    %213 = vector.extract_strided_slice %212 {offsets = [0, 0], sizes = [8, 128], strides = [1, 1]} : vector<8x512xf32> to vector<8x128xf32>
    %214 = vector.extract_strided_slice %212 {offsets = [0, 128], sizes = [8, 128], strides = [1, 1]} : vector<8x512xf32> to vector<8x128xf32>
    %215 = vector.extract_strided_slice %212 {offsets = [0, 256], sizes = [8, 128], strides = [1, 1]} : vector<8x512xf32> to vector<8x128xf32>
    %cst_81 = arith.constant 2.000000e+00 : f32
    %216 = vector.broadcast %cst_81 : f32 to vector<8x128xf32>
    %217 = arith.mulf %216, %215 : vector<8x128xf32>
    %cst_82 = arith.constant 1.000000e+00 : f32
    %218 = vector.broadcast %cst_82 : f32 to vector<8x128xf32>
    %219 = arith.subf %217, %218 : vector<8x128xf32>
    %220 = vector.extract_strided_slice %212 {offsets = [0, 384], sizes = [8, 128], strides = [1, 1]} : vector<8x512xf32> to vector<8x128xf32>
    %221 = arith.mulf %214, %196 : vector<8x128xf32>
    %222 = arith.mulf %213, %219 : vector<8x128xf32>
    %223 = arith.addf %221, %222 : vector<8x128xf32>
    %224 = math.tanh %223 : vector<8x128xf32>
    %225 = arith.mulf %220, %224 : vector<8x128xf32>
    %226 = arith.index_cast %202 : i32 to index
    %c0_83 = arith.constant 0 : index
    %227 = vector.load %arg5[%226, %c0_83] : memref<64x128xf32, #tpu.memory_space<vmem>>, vector<8x128xf32>
    tpu.vector_store %arg5[%226, %c0_83], %225 {strides = array<i32>} : memref<64x128xf32, #tpu.memory_space<vmem>>, vector<8x128xf32>,
    %c8_i32_84 = arith.constant 8 : i32
    %c0_85 = arith.constant 0 : index
    %c0_86 = arith.constant 0 : index
    %228 = vector.load %arg9[%c0_85, %c0_86] : memref<8x128xf32, #tpu.memory_space<vmem>>, vector<8x128xf32>
    tpu.vector_store %arg9[%c0_85, %c0_86], %225 {strides = array<i32>} : memref<8x128xf32, #tpu.memory_space<vmem>>, vector<8x128xf32>,
    %c0_87 = arith.constant 0 : index
    %c0_88 = arith.constant 0 : index
    %229 = vector.load %arg10[%c0_87, %c0_88] : memref<8x128xf32, #tpu.memory_space<vmem>>, vector<8x128xf32>
    tpu.vector_store %arg10[%c0_87, %c0_88], %223 {strides = array<i32>} : memref<8x128xf32, #tpu.memory_space<vmem>>, vector<8x128xf32>,
    %c0_i32_89 = arith.constant 0 : i32
    %230 = arith.cmpi eq, %arg0, %c0_i32_89 : i32
    %231 = arith.extui %230 : i1 to i32
    %c0_i32_90 = arith.constant 0 : i32
    %232 = arith.cmpi ne, %231, %c0_i32_90 : i32
    scf.if %232 {
      %c0_91 = arith.constant 0 : index
      %c0_92 = arith.constant 0 : index
      %233 = vector.load %arg6[%c0_91, %c0_92] : memref<8x128xf32, #tpu.memory_space<vmem>>, vector<8x128xf32>
      tpu.vector_store %arg6[%c0_91, %c0_92], %225 {strides = array<i32>} : memref<8x128xf32, #tpu.memory_space<vmem>>, vector<8x128xf32>,
      %c0_93 = arith.constant 0 : index
      %c0_94 = arith.constant 0 : index
      %234 = vector.load %arg7[%c0_93, %c0_94] : memref<8x128xf32, #tpu.memory_space<vmem>>, vector<8x128xf32>
      tpu.vector_store %arg7[%c0_93, %c0_94], %223 {strides = array<i32>} : memref<8x128xf32, #tpu.memory_space<vmem>>, vector<8x128xf32>,
    } else {
    }
    return
  }
  func.func @transform_0(%arg0: i32) -> (i32, i32) {
    %c0_i32 = arith.constant 0 : i32
    %c0_i32_0 = arith.constant 0 : i32
    return %arg0, %c0_i32 : i32, i32
  }
  func.func @transform_1(%arg0: i32) -> (i32, i32) {
    %c0_i32 = arith.constant 0 : i32
    %c0_i32_0 = arith.constant 0 : i32
    %c0_i32_1 = arith.constant 0 : i32
    return %c0_i32, %c0_i32_0 : i32, i32
  }
  func.func @transform_2(%arg0: i32) -> (i32, i32) {
    %c0_i32 = arith.constant 0 : i32
    %c0_i32_0 = arith.constant 0 : i32
    %c0_i32_1 = arith.constant 0 : i32
    return %c0_i32, %c0_i32_0 : i32, i32
  }
  func.func @transform_3(%arg0: i32) -> (i32, i32) {
    %c0_i32 = arith.constant 0 : i32
    %c0_i32_0 = arith.constant 0 : i32
    %c0_i32_1 = arith.constant 0 : i32
    return %c0_i32, %c0_i32_0 : i32, i32
  }
  func.func @transform_4(%arg0: i32) -> (i32, i32) {
    %c0_i32 = arith.constant 0 : i32
    %c0_i32_0 = arith.constant 0 : i32
    return %arg0, %c0_i32 : i32, i32
  }
  func.func @transform_5(%arg0: i32) -> (i32, i32) {
    %c0_i32 = arith.constant 0 : i32
    %c0_i32_0 = arith.constant 0 : i32
    %c0_i32_1 = arith.constant 0 : i32
    return %c0_i32, %c0_i32_0 : i32, i32
  }
  func.func @transform_6(%arg0: i32) -> (i32, i32) {
    %c0_i32 = arith.constant 0 : i32
    %c0_i32_0 = arith.constant 0 : i32
    %c0_i32_1 = arith.constant 0 : i32
    return %c0_i32, %c0_i32_0 : i32, i32
  }
}

</mosaic_0001>

<llo_original>
// kernel: tpu_custom_call.1
$region0: #{tpu_custom_call.1}
  #allocation0 [shape = 'u32[]', space=smem, size = 0x4, offset = 0x4, fixed_abs, tag = 'smem constant byte address 0x4 - core index']
  #allocation1 [shape = 'u32[144,128]{1,0:T(1,128)}', space=vmem, size = 0x12000, scoped, tag = 'internal scratch']
  #allocation2 [shape = 'f32[64,512]{1,0:T(8,128)}', space=vmem, size = 0x20000, scoped, tag = 'scratch operand']
  #allocation3 [shape = 'f32[8,128]{1,0:T(8,128)}', space=vmem, size = 0x1000, scoped, tag = 'scratch operand']
  #allocation4 [shape = 'f32[8,128]{1,0:T(8,128)}', space=vmem, size = 0x1000, scoped, tag = 'scratch operand']
  %s0 = inlined_call_operand.vmem [shape: f32[64,32], index: 0, kind: input, shape index: {}]
  %s1 = inlined_call_operand.hbm [shape: f32[32,512], index: 1, kind: input, shape index: {}]
  %s2 = inlined_call_operand.hbm [shape: f32[128,512], index: 2, kind: input, shape index: {}]
  %s3 = inlined_call_operand.vmem [shape: f32[1,512], index: 3, kind: input, shape index: {}]
  %s4 = inlined_call_operand.hbm [shape: f32[64,128], index: 4, kind: output, shape index: {0}]
  %s5 = inlined_call_operand.hbm [shape: f32[8,128], index: 5, kind: output, shape index: {1}]
  %s6 = inlined_call_operand.hbm [shape: f32[8,128], index: 6, kind: output, shape index: {2}]
  %7 = xla_tuple %s4, %s5, %s6
  %s8 = sld [smem:[#allocation0]]
  $region58: #{tpu_custom_call.1} parent=0
    _
  %s10 = ssub.s32 1, %s8
  %s11 = scalar_select 0, %s10, %s8
  $region1: #{tpu_custom_call.1} parent=0
    #allocation5 [shape = 'u8[65536]{0}', space=vmem, size = 0x10000, scoped, tag = 'input window, operand 1, single buffered']
    #allocation6 [shape = 's32[1]{0}', space=sflag, size = 0x4, scoped, tag = 'scoped memory for tpu_custom_call.1']
    #allocation7 [shape = 's32[1]{0}', space=sflag, size = 0x4, scoped, tag = 'scoped memory for tpu_custom_call.1']
    #allocation8 [shape = 'u8[262144]{0}', space=vmem, size = 0x40000, scoped, tag = 'input window, operand 2, single buffered']
    #allocation9 [shape = 's32[1]{0}', space=sflag, size = 0x4, scoped, tag = 'scoped memory for tpu_custom_call.1']
    #allocation10 [shape = 'u8[32768]{0}', space=vmem, size = 0x8000, scoped, tag = 'output window, operand 0, single buffered']
    #allocation11 [shape = 'u8[4096]{0}', space=vmem, size = 0x1000, scoped, tag = 'output window, operand 1, single buffered']
    #allocation12 [shape = 's32[1]{0}', space=sflag, size = 0x4, scoped, tag = 'scoped memory for tpu_custom_call.1']
    #allocation13 [shape = 'u8[4096]{0}', space=vmem, size = 0x1000, scoped, tag = 'output window, operand 2, single buffered']
    %12 = vsyncpa [#allocation6], 0
    %13 = vsyncpa [#allocation9], 0
    %14 = vsyncpa [#allocation7], 0
    %15 = vsyncpa [#allocation12], 0
    // Predicated region
    $region2: #{tpu_custom_call.1} parent=1 // pred_check
      _
    $region3: #{tpu_custom_call.1} parent=1 // pred_check_branch
      %17 = sbr.rel (0) target = $region5
    $region4: #{tpu_custom_call.1} parent=1 // pred_region
      _
    $region5: #{tpu_custom_call.1} parent=1 // pred_fallthru
      _
    // Predicated region
    $region6: #{tpu_custom_call.1} parent=1 // pred_check
      _
    $region7: #{tpu_custom_call.1} parent=1 // pred_check_branch
      %19 = sbr.rel (0) target = $region9
    $region8: #{tpu_custom_call.1} parent=1 // pred_region
      %s21 = ssub.s32 2048, 2048
      %22 = vsyncadd [#allocation6], %s21
      %s23 = sshll.u32 [#allocation5], 4
      %s24 = int_to_ptr.vmem [resolvable:$true] %s23
      %29 = dma.hbm_to_vmem [thread:$0]  %s1, 2048, %s24, [#allocation6], 512, 512, 32
    $region9: #{tpu_custom_call.1} parent=1 // pred_fallthru
      _
    // Predicated region
    $region10: #{tpu_custom_call.1} parent=1 // pred_check
      _
    $region11: #{tpu_custom_call.1} parent=1 // pred_check_branch
      %31 = sbr.rel (0) target = $region13
    $region12: #{tpu_custom_call.1} parent=1 // pred_region
      %s33 = ssub.s32 8192, 8192
      %34 = vsyncadd [#allocation9], %s33
      %s35 = sshll.u32 [#allocation8], 4
      %s36 = int_to_ptr.vmem [resolvable:$true] %s35
      %41 = dma.hbm_to_vmem [thread:$0]  %s2, 8192, %s36, [#allocation9], 512, 512, 32
    $region13: #{tpu_custom_call.1} parent=1 // pred_fallthru
      _
    // Predicated region
    $region14: #{tpu_custom_call.1} parent=1 // pred_check
      _
    $region15: #{tpu_custom_call.1} parent=1 // pred_check_branch
      %43 = sbr.rel (0) target = $region17
    $region16: #{tpu_custom_call.1} parent=1 // pred_region
      _
    $region17: #{tpu_custom_call.1} parent=1 // pred_fallthru
      _
    // Predicated region
    $region18: #{tpu_custom_call.1} parent=1 // pred_check
      _
    $region19: #{tpu_custom_call.1} parent=1 // pred_check_branch
      %45 = sbr.rel (0) target = $region21
    $region20: #{tpu_custom_call.1} parent=1 // pred_region
      %46 = dma.done [#allocation6], 2048
    $region21: #{tpu_custom_call.1} parent=1 // pred_fallthru
      _
    // Predicated region
    $region22: #{tpu_custom_call.1} parent=1 // pred_check
      _
    $region23: #{tpu_custom_call.1} parent=1 // pred_check_branch
      %48 = sbr.rel (0) target = $region25
    $region24: #{tpu_custom_call.1} parent=1 // pred_region
      %49 = dma.done [#allocation9], 8192
    $region25: #{tpu_custom_call.1} parent=1 // pred_fallthru
      _
    %p50 = scmp.eq.s32.totalorder 0, 0
    // Predicated region
    $region26: #{tpu_custom_call.1} parent=1 // pred_check
      %p51 = pneg %p50
    $region27: #{tpu_custom_call.1} parent=1 // pred_check_branch
      %53 = sbr.rel (%p51) target = $region29
    $region28: #{tpu_custom_call.1} parent=1 // pred_region
      %54 = vst [vmem:[#allocation3] sm:$0xff] 0.0
      %55 = vst [vmem:[#allocation4] sm:$0xff] 0.0
    $region29: #{tpu_custom_call.1} parent=1 // pred_fallthru
      _
    %v56 = vld [vmem:[%s0] sm:$0xff]
    %v57 = vld [vmem:[%s0 + $0x8] sm:$0xff]
    %v58 = vld [vmem:[%s0 + $0x10] sm:$0xff]
    %v59 = vld [vmem:[%s0 + $0x18] sm:$0xff]
    %v60 = vld [vmem:[%s0 + $0x20] sm:$0xff]
    %v61 = vld [vmem:[%s0 + $0x28] sm:$0xff]
    %v62 = vld [vmem:[%s0 + $0x30] sm:$0xff]
    %v63 = vld [vmem:[%s0 + $0x38] sm:$0xff]
    %v64 = vld [vmem:[#allocation5] sm:$0xff]
    %v65 = vld [vmem:[#allocation5 + $0x8] sm:$0xff]
    %v66 = vld [vmem:[#allocation5 + $0x10] sm:$0xff]
    %v67 = vld [vmem:[#allocation5 + $0x18] sm:$0xff]
    %v68 = vld [vmem:[#allocation5 + $0x20] sm:$0xff]
    %v69 = vld [vmem:[#allocation5 + $0x28] sm:$0xff]
    %v70 = vld [vmem:[#allocation5 + $0x30] sm:$0xff]
    %v71 = vld [vmem:[#allocation5 + $0x38] sm:$0xff]
    %v72 = vld [vmem:[#allocation5 + $0x40] sm:$0xff]
    %v73 = vld [vmem:[#allocation5 + $0x48] sm:$0xff]
    %v74 = vld [vmem:[#allocation5 + $0x50] sm:$0xff]
    %v75 = vld [vmem:[#allocation5 + $0x58] sm:$0xff]
    %v76 = vld [vmem:[#allocation5 + $0x60] sm:$0xff]
    %v77 = vld [vmem:[#allocation5 + $0x68] sm:$0xff]
    %v78 = vld [vmem:[#allocation5 + $0x70] sm:$0xff]
    %v79 = vld [vmem:[#allocation5 + $0x78] sm:$0xff]
    %v80 = vld [vmem:[%s3] sm:$0xf]
    %v82 = vlaneseq
    %v83 = vshrl.u32 %v82, 7
    %v84 = vsub.s32 0, %v83
    %v85 = vrot.slane %v80, %v84
    %v86 = vlaneseq
    %v87 = vshrl.u32 %v86, 7
    %v88 = vsub.s32 1, %v87
    %v89 = vrot.slane %v80, %v88
    %v90 = vlaneseq
    %v91 = vshrl.u32 %v90, 7
    %v92 = vsub.s32 2, %v91
    %v93 = vrot.slane %v80, %v92
    %v94 = vlaneseq
    %v95 = vshrl.u32 %v94, 7
    %v96 = vsub.s32 3, %v95
    %v97 = vrot.slane %v80, %v96
    %vm102 = vcmask 261120
    %v104 = vsel %vm102, %v56, 0
    %v107 = vsel %vm102, %v57, 0
    %v110 = vsel %vm102, %v58, 0
    %v113 = vsel %vm102, %v59, 0
    %v116 = vsel %vm102, %v60, 0
    %v119 = vsel %vm102, %v61, 0
    %v122 = vsel %vm102, %v62, 0
    %v125 = vsel %vm102, %v63, 0
    %127 = vmatprep.subr.mxu0 %v65
    %128 = vmatpush1.msra.mxu0 %v64
    %129 = vmatprep.subr.mxu0 %v69
    %130 = vmatpush1.msra.mxu0 %v68
    %131 = vmatprep.subr.mxu0 %v73
    %132 = vmatpush1.msra.mxu0 %v72
    %133 = vmatprep.subr.mxu0 %v77
    %134 = vmatpush1.msra.mxu0 %v76
    %135 = vmatprep.subr.mxu0 0.0
    %136 = vmatpush1.msra.mxu0 0.0
    %137 = vmatprep.subr.mxu0 0.0
    %138 = vmatpush1.msra.mxu0 0.0
    %139 = vmatprep.subr.mxu0 0.0
    %140 = vmatpush1.msra.mxu0 0.0
    %141 = vmatprep.subr.mxu0 0.0
    %142 = vmatpush1.msra.mxu0 0.0
    %143 = vmatprep.subr.mxu0 0.0
    %144 = vmatpush1.msra.mxu0 0.0
    %145 = vmatprep.subr.mxu0 0.0
    %146 = vmatpush1.msra.mxu0 0.0
    %147 = vmatprep.subr.mxu0 0.0
    %148 = vmatpush1.msra.mxu0 0.0
    %149 = vmatprep.subr.mxu0 0.0
    %150 = vmatpush1.msra.mxu0 0.0
    %151 = vmatprep.subr.mxu0 0.0
    %152 = vmatpush1.msra.mxu0 0.0
    %153 = vmatprep.subr.mxu0 0.0
    %154 = vmatpush1.msra.mxu0 0.0
    %155 = vmatprep.subr.mxu0 0.0
    %156 = vmatpush1.msra.mxu0 0.0
    %157 = vmatprep.subr.mxu0 0.0
    %158 = vmatpush1.msra.mxu0 0.0
    %159 = vmatprep.subr.mxu0 0.0
    %160 = vmatpush1.msra.mxu0 0.0
    %161 = vmatprep.subr.mxu0 0.0
    %162 = vmatpush1.msra.mxu0 0.0
    %163 = vmatprep.subr.mxu0 0.0
    %164 = vmatpush1.msra.mxu0 0.0
    %165 = vmatprep.subr.mxu0 0.0
    %166 = vmatpush1.msra.mxu0 0.0
    %167 = vmatprep.subr.mxu0 0.0
    %168 = vmatpush1.msra.mxu0 0.0
    %169 = vmatprep.subr.mxu0 0.0
    %170 = vmatpush1.msra.mxu0 0.0
    %171 = vmatprep.subr.mxu0 0.0
    %172 = vmatpush1.msra.mxu0 0.0
    %173 = vmatprep.subr.mxu0 0.0
    %174 = vmatpush1.msra.mxu0 0.0
    %175 = vmatprep.subr.mxu0 0.0
    %176 = vmatpush1.msra.mxu0 0.0
    %177 = vmatprep.subr.mxu0 0.0
    %178 = vmatpush1.msra.mxu0 0.0
    %179 = vmatprep.subr.mxu0 0.0
    %180 = vmatpush1.msra.mxu0 0.0
    %181 = vmatprep.subr.mxu0 0.0
    %182 = vmatpush1.msra.mxu0 0.0
    %183 = vmatprep.subr.mxu0 0.0
    %184 = vmatpush1.msra.mxu0 0.0
    %185 = vmatprep.subr.mxu0 0.0
    %186 = vmatpush1.msra.mxu0 0.0
    %187 = vmatprep.subr.mxu0 0.0
    %188 = vmatpush1.msra.mxu0 0.0
    %189 = vmatprep.subr.mxu0 0.0
    %190 = vmatpush1.msra.mxu0 0.0
    %191 = vmatprep.mubr.f32.mxu0 0.0
    %192 = vmatmul.mubr.f32.gmra.mrb[0].mxu0 %v104
    %v193 = vpop.f32.mrb[0].mxu0
    %v194 = vadd.f32 %v85, %v193
    %v195 = vpop.f32.mrb[0].mxu0
    %v196 = vadd.f32 %v89, %v195
    %197 = vmatprep.mubr.f32.mxu0 0.0
    %198 = vmatmul.mubr.f32.gmra.mrb[0].mxu0 %v107
    %v199 = vpop.f32.mrb[0].mxu0
    %v200 = vadd.f32 %v85, %v199
    %v201 = vpop.f32.mrb[0].mxu0
    %v202 = vadd.f32 %v89, %v201
    %203 = vmatprep.mubr.f32.mxu0 0.0
    %204 = vmatmul.mubr.f32.gmra.mrb[0].mxu0 %v110
    %v205 = vpop.f32.mrb[0].mxu0
    %v206 = vadd.f32 %v85, %v205
    %v207 = vpop.f32.mrb[0].mxu0
    %v208 = vadd.f32 %v89, %v207
    %209 = vmatprep.mubr.f32.mxu0 0.0
    %210 = vmatmul.mubr.f32.gmra.mrb[0].mxu0 %v113
    %v211 = vpop.f32.mrb[0].mxu0
    %v212 = vadd.f32 %v85, %v211
    %v213 = vpop.f32.mrb[0].mxu0
    %v214 = vadd.f32 %v89, %v213
    %215 = vmatprep.mubr.f32.mxu0 0.0
    %216 = vmatmul.mubr.f32.gmra.mrb[0].mxu0 %v116
    %v217 = vpop.f32.mrb[0].mxu0
    %v218 = vadd.f32 %v85, %v217
    %v219 = vpop.f32.mrb[0].mxu0
    %v220 = vadd.f32 %v89, %v219
    %221 = vmatprep.mubr.f32.mxu0 0.0
    %222 = vmatmul.mubr.f32.gmra.mrb[0].mxu0 %v119
    %v223 = vpop.f32.mrb[0].mxu0
    %v224 = vadd.f32 %v85, %v223
    %v225 = vpop.f32.mrb[0].mxu0
    %v226 = vadd.f32 %v89, %v225
    %227 = vmatprep.mubr.f32.mxu0 0.0
    %228 = vmatmul.mubr.f32.gmra.mrb[0].mxu0 %v122
    %v229 = vpop.f32.mrb[0].mxu0
    %v230 = vadd.f32 %v85, %v229
    %v231 = vpop.f32.mrb[0].mxu0
    %v232 = vadd.f32 %v89, %v231
    %233 = vmatprep.mubr.f32.mxu0 0.0
    %234 = vmatmul.mubr.f32.gmra.mrb[0].mxu0 %v125
    %v235 = vpop.f32.mrb[0].mxu0
    %v236 = vadd.f32 %v85, %v235
    %v237 = vpop.f32.mrb[0].mxu0
    %v238 = vadd.f32 %v89, %v237
    %239 = vdwg.mxu0
    %240 = vmatprep.subr.mxu0 %v67
    %241 = vmatpush1.msra.mxu0 %v66
    %242 = vmatprep.subr.mxu0 %v71
    %243 = vmatpush1.msra.mxu0 %v70
    %244 = vmatprep.subr.mxu0 %v75
    %245 = vmatpush1.msra.mxu0 %v74
    %246 = vmatprep.subr.mxu0 %v79
    %247 = vmatpush1.msra.mxu0 %v78
    %248 = vmatprep.subr.mxu0 0.0
    %249 = vmatpush1.msra.mxu0 0.0
    %250 = vmatprep.subr.mxu0 0.0
    %251 = vmatpush1.msra.mxu0 0.0
    %252 = vmatprep.subr.mxu0 0.0
    %253 = vmatpush1.msra.mxu0 0.0
    %254 = vmatprep.subr.mxu0 0.0
    %255 = vmatpush1.msra.mxu0 0.0
    %256 = vmatprep.subr.mxu0 0.0
    %257 = vmatpush1.msra.mxu0 0.0
    %258 = vmatprep.subr.mxu0 0.0
    %259 = vmatpush1.msra.mxu0 0.0
    %260 = vmatprep.subr.mxu0 0.0
    %261 = vmatpush1.msra.mxu0 0.0
    %262 = vmatprep.subr.mxu0 0.0
    %263 = vmatpush1.msra.mxu0 0.0
    %264 = vmatprep.subr.mxu0 0.0
    %265 = vmatpush1.msra.mxu0 0.0
    %266 = vmatprep.subr.mxu0 0.0
    %267 = vmatpush1.msra.mxu0 0.0
    %268 = vmatprep.subr.mxu0 0.0
    %269 = vmatpush1.msra.mxu0 0.0
    %270 = vmatprep.subr.mxu0 0.0
    %271 = vmatpush1.msra.mxu0 0.0
    %272 = vmatprep.subr.mxu0 0.0
    %273 = vmatpush1.msra.mxu0 0.0
    %274 = vmatprep.subr.mxu0 0.0
    %275 = vmatpush1.msra.mxu0 0.0
    %276 = vmatprep.subr.mxu0 0.0
    %277 = vmatpush1.msra.mxu0 0.0
    %278 = vmatprep.subr.mxu0 0.0
    %279 = vmatpush1.msra.mxu0 0.0
    %280 = vmatprep.subr.mxu0 0.0
    %281 = vmatpush1.msra.mxu0 0.0
    %282 = vmatprep.subr.mxu0 0.0
    %283 = vmatpush1.msra.mxu0 0.0
    %284 = vmatprep.subr.mxu0 0.0
    %285 = vmatpush1.msra.mxu0 0.0
    %286 = vmatprep.subr.mxu0 0.0
    %287 = vmatpush1.msra.mxu0 0.0
    %288 = vmatprep.subr.mxu0 0.0
    %289 = vmatpush1.msra.mxu0 0.0
    %290 = vmatprep.subr.mxu0 0.0
    %291 = vmatpush1.msra.mxu0 0.0
    %292 = vmatprep.subr.mxu0 0.0
    %293 = vmatpush1.msra.mxu0 0.0
    %294 = vmatprep.subr.mxu0 0.0
    %295 = vmatpush1.msra.mxu0 0.0
    %296 = vmatprep.subr.mxu0 0.0
    %297 = vmatpush1.msra.mxu0 0.0
    %298 = vmatprep.subr.mxu0 0.0
    %299 = vmatpush1.msra.mxu0 0.0
    %300 = vmatprep.subr.mxu0 0.0
    %301 = vmatpush1.msra.mxu0 0.0
    %302 = vmatprep.subr.mxu0 0.0
    %303 = vmatpush1.msra.mxu0 0.0
    %304 = vmatprep.mubr.f32.mxu0 0.0
    %305 = vmatmul.mubr.f32.gmra.mrb[0].mxu0 %v104
    %v306 = vpop.f32.mrb[0].mxu0
    %v307 = vadd.f32 %v93, %v306
    %v308 = vpop.f32.mrb[0].mxu0
    %v309 = vadd.f32 %v97, %v308
    %310 = vmatprep.mubr.f32.mxu0 0.0
    %311 = vmatmul.mubr.f32.gmra.mrb[0].mxu0 %v107
    %v312 = vpop.f32.mrb[0].mxu0
    %v313 = vadd.f32 %v93, %v312
    %v314 = vpop.f32.mrb[0].mxu0
    %v315 = vadd.f32 %v97, %v314
    %316 = vmatprep.mubr.f32.mxu0 0.0
    %317 = vmatmul.mubr.f32.gmra.mrb[0].mxu0 %v110
    %v318 = vpop.f32.mrb[0].mxu0
    %v319 = vadd.f32 %v93, %v318
    %v320 = vpop.f32.mrb[0].mxu0
    %v321 = vadd.f32 %v97, %v320
    %322 = vmatprep.mubr.f32.mxu0 0.0
    %323 = vmatmul.mubr.f32.gmra.mrb[0].mxu0 %v113
    %v324 = vpop.f32.mrb[0].mxu0
    %v325 = vadd.f32 %v93, %v324
    %v326 = vpop.f32.mrb[0].mxu0
    %v327 = vadd.f32 %v97, %v326
    %328 = vmatprep.mubr.f32.mxu0 0.0
    %329 = vmatmul.mubr.f32.gmra.mrb[0].mxu0 %v116
    %v330 = vpop.f32.mrb[0].mxu0
    %v331 = vadd.f32 %v93, %v330
    %v332 = vpop.f32.mrb[0].mxu0
    %v333 = vadd.f32 %v97, %v332
    %334 = vmatprep.mubr.f32.mxu0 0.0
    %335 = vmatmul.mubr.f32.gmra.mrb[0].mxu0 %v119
    %v336 = vpop.f32.mrb[0].mxu0
    %v337 = vadd.f32 %v93, %v336
    %v338 = vpop.f32.mrb[0].mxu0
    %v339 = vadd.f32 %v97, %v338
    %340 = vmatprep.mubr.f32.mxu0 0.0
    %341 = vmatmul.mubr.f32.gmra.mrb[0].mxu0 %v122
    %v342 = vpop.f32.mrb[0].mxu0
    %v343 = vadd.f32 %v93, %v342
    %v344 = vpop.f32.mrb[0].mxu0
    %v345 = vadd.f32 %v97, %v344
    %346 = vmatprep.mubr.f32.mxu0 0.0
    %347 = vmatmul.mubr.f32.gmra.mrb[0].mxu0 %v125
    %v348 = vpop.f32.mrb[0].mxu0
    %v349 = vadd.f32 %v93, %v348
    %v350 = vpop.f32.mrb[0].mxu0
    %v351 = vadd.f32 %v97, %v350
    %352 = vdwg.mxu0
    %353 = vst [vmem:[#allocation2] sm:$0xff] %v194
    %354 = vst [vmem:[#allocation2 + $0x8] sm:$0xff] %v196
    %355 = vst [vmem:[#allocation2 + $0x10] sm:$0xff] %v307
    %356 = vst [vmem:[#allocation2 + $0x18] sm:$0xff] %v309
    %357 = vst [vmem:[#allocation2 + $0x20] sm:$0xff] %v200
    %358 = vst [vmem:[#allocation2 + $0x28] sm:$0xff] %v202
    %359 = vst [vmem:[#allocation2 + $0x30] sm:$0xff] %v313
    %360 = vst [vmem:[#allocation2 + $0x38] sm:$0xff] %v315
    %361 = vst [vmem:[#allocation2 + $0x40] sm:$0xff] %v206
    %362 = vst [vmem:[#allocation2 + $0x48] sm:$0xff] %v208
    %363 = vst [vmem:[#allocation2 + $0x50] sm:$0xff] %v319
    %364 = vst [vmem:[#allocation2 + $0x58] sm:$0xff] %v321
    %365 = vst [vmem:[#allocation2 + $0x60] sm:$0xff] %v212
    %366 = vst [vmem:[#allocation2 + $0x68] sm:$0xff] %v214
    %367 = vst [vmem:[#allocation2 + $0x70] sm:$0xff] %v325
    %368 = vst [vmem:[#allocation2 + $0x78] sm:$0xff] %v327
    %369 = vst [vmem:[#allocation2 + $0x80] sm:$0xff] %v218
    %370 = vst [vmem:[#allocation2 + $0x88] sm:$0xff] %v220
    %371 = vst [vmem:[#allocation2 + $0x90] sm:$0xff] %v331
    %372 = vst [vmem:[#allocation2 + $0x98] sm:$0xff] %v333
    %373 = vst [vmem:[#allocation2 + $0xa0] sm:$0xff] %v224
    %374 = vst [vmem:[#allocation2 + $0xa8] sm:$0xff] %v226
    %375 = vst [vmem:[#allocation2 + $0xb0] sm:$0xff] %v337
    %376 = vst [vmem:[#allocation2 + $0xb8] sm:$0xff] %v339
    %377 = vst [vmem:[#allocation2 + $0xc0] sm:$0xff] %v230
    %378 = vst [vmem:[#allocation2 + $0xc8] sm:$0xff] %v232
    %379 = vst [vmem:[#allocation2 + $0xd0] sm:$0xff] %v343
    %380 = vst [vmem:[#allocation2 + $0xd8] sm:$0xff] %v345
    %381 = vst [vmem:[#allocation2 + $0xe0] sm:$0xff] %v236
    %382 = vst [vmem:[#allocation2 + $0xe8] sm:$0xff] %v238
    %383 = vst [vmem:[#allocation2 + $0xf0] sm:$0xff] %v349
    %384 = vst [vmem:[#allocation2 + $0xf8] sm:$0xff] %v351
    %v385 = vld [vmem:[#allocation3] sm:$0xff]
    %v386 = vld [vmem:[#allocation4] sm:$0xff]
    %s387 = smul.u32 0, 4
    %s388 = smul.addr %s387, 8
    %s389 = scalar_lea.vmem [#allocation2], %s388
    %v390 = vld [vmem:[%s389] sm:$0xff]
    %v391 = vld [vmem:[%s389 + $0x8] sm:$0xff]
    %v392 = vld [vmem:[%s389 + $0x10] sm:$0xff]
    %v393 = vld [vmem:[%s389 + $0x18] sm:$0xff]
    %v394 = vld [vmem:[#allocation8] sm:$0xff]
    %v395 = vld [vmem:[#allocation8 + $0x8] sm:$0xff]
    %v396 = vld [vmem:[#allocation8 + $0x10] sm:$0xff]
    %v397 = vld [vmem:[#allocation8 + $0x18] sm:$0xff]
    %v398 = vld [vmem:[#allocation8 + $0x20] sm:$0xff]
    %v399 = vld [vmem:[#allocation8 + $0x28] sm:$0xff]
    %v400 = vld [vmem:[#allocation8 + $0x30] sm:$0xff]
    %v401 = vld [vmem:[#allocation8 + $0x38] sm:$0xff]
    %v402 = vld [vmem:[#allocation8 + $0x40] sm:$0xff]
    %v403 = vld [vmem:[#allocation8 + $0x48] sm:$0xff]
    %v404 = vld [vmem:[#allocation8 + $0x50] sm:$0xff]
    %v405 = vld [vmem:[#allocation8 + $0x58] sm:$0xff]
    %v406 = vld [vmem:[#allocation8 + $0x60] sm:$0xff]
    %v407 = vld [vmem:[#allocation8 + $0x68] sm:$0xff]
    %v408 = vld [vmem:[#allocation8 + $0x70] sm:$0xff]
    %v409 = vld [vmem:[#allocation8 + $0x78] sm:$0xff]
    %v410 = vld [vmem:[#allocation8 + $0x80] sm:$0xff]
    %v411 = vld [vmem:[#allocation8 + $0x88] sm:$0xff]
    %v412 = vld [vmem:[#allocation8 + $0x90] sm:$0xff]
    %v413 = vld [vmem:[#allocation8 + $0x98] sm:$0xff]
    %v414 = vld [vmem:[#allocation8 + $0xa0] sm:$0xff]
    %v415 = vld [vmem:[#allocation8 + $0xa8] sm:$0xff]
    %v416 = vld [vmem:[#allocation8 + $0xb0] sm:$0xff]
    %v417 = vld [vmem:[#allocation8 + $0xb8] sm:$0xff]
    %v418 = vld [vmem:[#allocation8 + $0xc0] sm:$0xff]
    %v419 = vld [vmem:[#allocation8 + $0xc8] sm:$0xff]
    %v420 = vld [vmem:[#allocation8 + $0xd0] sm:$0xff]
    %v421 = vld [vmem:[#allocation8 + $0xd8] sm:$0xff]
    %v422 = vld [vmem:[#allocation8 + $0xe0] sm:$0xff]
    %v423 = vld [vmem:[#allocation8 + $0xe8] sm:$0xff]
    %v424 = vld [vmem:[#allocation8 + $0xf0] sm:$0xff]
    %v425 = vld [vmem:[#allocation8 + $0xf8] sm:$0xff]
    %v426 = vld [vmem:[#allocation8 + $0x100] sm:$0xff]
    %v427 = vld [vmem:[#allocation8 + $0x108] sm:$0xff]
    %v428 = vld [vmem:[#allocation8 + $0x110] sm:$0xff]
    %v429 = vld [vmem:[#allocation8 + $0x118] sm:$0xff]
    %v430 = vld [vmem:[#allocation8 + $0x120] sm:$0xff]
    %v431 = vld [vmem:[#allocation8 + $0x128] sm:$0xff]
    %v432 = vld [vmem:[#allocation8 + $0x130] sm:$0xff]
    %v433 = vld [vmem:[#allocation8 + $0x138] sm:$0xff]
    %v434 = vld [vmem:[#allocation8 + $0x140] sm:$0xff]
    %v435 = vld [vmem:[#allocation8 + $0x148] sm:$0xff]
    %v436 = vld [vmem:[#allocation8 + $0x150] sm:$0xff]
    %v437 = vld [vmem:[#allocation8 + $0x158] sm:$0xff]
    %v438 = vld [vmem:[#allocation8 + $0x160] sm:$0xff]
    %v439 = vld [vmem:[#allocation8 + $0x168] sm:$0xff]
    %v440 = vld [vmem:[#allocation8 + $0x170] sm:$0xff]
    %v441 = vld [vmem:[#allocation8 + $0x178] sm:$0xff]
    %v442 = vld [vmem:[#allocation8 + $0x180] sm:$0xff]
    %v443 = vld [vmem:[#allocation8 + $0x188] sm:$0xff]
    %v444 = vld [vmem:[#allocation8 + $0x190] sm:$0xff]
    %v445 = vld [vmem:[#allocation8 + $0x198] sm:$0xff]
    %v446 = vld [vmem:[#allocation8 + $0x1a0] sm:$0xff]
    %v447 = vld [vmem:[#allocation8 + $0x1a8] sm:$0xff]
    %v448 = vld [vmem:[#allocation8 + $0x1b0] sm:$0xff]
    %v449 = vld [vmem:[#allocation8 + $0x1b8] sm:$0xff]
    %v450 = vld [vmem:[#allocation8 + $0x1c0] sm:$0xff]
    %v451 = vld [vmem:[#allocation8 + $0x1c8] sm:$0xff]
    %v452 = vld [vmem:[#allocation8 + $0x1d0] sm:$0xff]
    %v453 = vld [vmem:[#allocation8 + $0x1d8] sm:$0xff]
    %v454 = vld [vmem:[#allocation8 + $0x1e0] sm:$0xff]
    %v455 = vld [vmem:[#allocation8 + $0x1e8] sm:$0xff]
    %v456 = vld [vmem:[#allocation8 + $0x1f0] sm:$0xff]
    %v457 = vld [vmem:[#allocation8 + $0x1f8] sm:$0xff]
    %458 = vmatprep.subr.mxu0 %v395
    %459 = vmatpush1.msra.mxu0 %v394
    %460 = vmatprep.subr.mxu0 %v399
    %461 = vmatpush1.msra.mxu0 %v398
    %462 = vmatprep.subr.mxu0 %v403
    %463 = vmatpush1.msra.mxu0 %v402
    %464 = vmatprep.subr.mxu0 %v407
    %465 = vmatpush1.msra.mxu0 %v406
    %466 = vmatprep.subr.mxu0 %v411
    %467 = vmatpush1.msra.mxu0 %v410
    %468 = vmatprep.subr.mxu0 %v415
    %469 = vmatpush1.msra.mxu0 %v414
    %470 = vmatprep.subr.mxu0 %v419
    %471 = vmatpush1.msra.mxu0 %v418
    %472 = vmatprep.subr.mxu0 %v423
    %473 = vmatpush1.msra.mxu0 %v422
    %474 = vmatprep.subr.mxu0 %v427
    %475 = vmatpush1.msra.mxu0 %v426
    %476 = vmatprep.subr.mxu0 %v431
    %477 = vmatpush1.msra.mxu0 %v430
    %478 = vmatprep.subr.mxu0 %v435
    %479 = vmatpush1.msra.mxu0 %v434
    %480 = vmatprep.subr.mxu0 %v439
    %481 = vmatpush1.msra.mxu0 %v438
    %482 = vmatprep.subr.mxu0 %v443
    %483 = vmatpush1.msra.mxu0 %v442
    %484 = vmatprep.subr.mxu0 %v447
    %485 = vmatpush1.msra.mxu0 %v446
    %486 = vmatprep.subr.mxu0 %v451
    %487 = vmatpush1.msra.mxu0 %v450
    %488 = vmatprep.subr.mxu0 %v455
    %489 = vmatpush1.msra.mxu0 %v454
    %490 = vmatprep.subr.mxu0 0.0
    %491 = vmatpush1.msra.mxu0 0.0
    %492 = vmatprep.subr.mxu0 0.0
    %493 = vmatpush1.msra.mxu0 0.0
    %494 = vmatprep.subr.mxu0 0.0
    %495 = vmatpush1.msra.mxu0 0.0
    %496 = vmatprep.subr.mxu0 0.0
    %497 = vmatpush1.msra.mxu0 0.0
    %498 = vmatprep.subr.mxu0 0.0
    %499 = vmatpush1.msra.mxu0 0.0
    %500 = vmatprep.subr.mxu0 0.0
    %501 = vmatpush1.msra.mxu0 0.0
    %502 = vmatprep.subr.mxu0 0.0
    %503 = vmatpush1.msra.mxu0 0.0
    %504 = vmatprep.subr.mxu0 0.0
    %505 = vmatpush1.msra.mxu0 0.0
    %506 = vmatprep.subr.mxu0 0.0
    %507 = vmatpush1.msra.mxu0 0.0
    %508 = vmatprep.subr.mxu0 0.0
    %509 = vmatpush1.msra.mxu0 0.0
    %510 = vmatprep.subr.mxu0 0.0
    %511 = vmatpush1.msra.mxu0 0.0
    %512 = vmatprep.subr.mxu0 0.0
    %513 = vmatpush1.msra.mxu0 0.0
    %514 = vmatprep.subr.mxu0 0.0
    %515 = vmatpush1.msra.mxu0 0.0
    %516 = vmatprep.subr.mxu0 0.0
    %517 = vmatpush1.msra.mxu0 0.0
    %518 = vmatprep.subr.mxu0 0.0
    %519 = vmatpush1.msra.mxu0 0.0
    %520 = vmatprep.subr.mxu0 0.0
    %521 = vmatpush1.msra.mxu0 0.0
    %522 = vmatprep.mubr.f32.mxu0 0.0
    %523 = vmatmul.mubr.f32.gmra.mrb[0].mxu0 %v385
    %v524 = vpop.f32.mrb[0].mxu0
    %v525 = vadd.f32 0.0, %v524
    %v526 = vpop.f32.mrb[0].mxu0
    %v527 = vadd.f32 0.0, %v526
    %528 = vdwg.mxu0
    %529 = vmatprep.subr.mxu0 %v397
    %530 = vmatpush1.msra.mxu0 %v396
    %531 = vmatprep.subr.mxu0 %v401
    %532 = vmatpush1.msra.mxu0 %v400
    %533 = vmatprep.subr.mxu0 %v405
    %534 = vmatpush1.msra.mxu0 %v404
    %535 = vmatprep.subr.mxu0 %v409
    %536 = vmatpush1.msra.mxu0 %v408
    %537 = vmatprep.subr.mxu0 %v413
    %538 = vmatpush1.msra.mxu0 %v412
    %539 = vmatprep.subr.mxu0 %v417
    %540 = vmatpush1.msra.mxu0 %v416
    %541 = vmatprep.subr.mxu0 %v421
    %542 = vmatpush1.msra.mxu0 %v420
    %543 = vmatprep.subr.mxu0 %v425
    %544 = vmatpush1.msra.mxu0 %v424
    %545 = vmatprep.subr.mxu0 %v429
    %546 = vmatpush1.msra.mxu0 %v428
    %547 = vmatprep.subr.mxu0 %v433
    %548 = vmatpush1.msra.mxu0 %v432
    %549 = vmatprep.subr.mxu0 %v437
    %550 = vmatpush1.msra.mxu0 %v436
    %551 = vmatprep.subr.mxu0 %v441
    %552 = vmatpush1.msra.mxu0 %v440
    %553 = vmatprep.subr.mxu0 %v445
    %554 = vmatpush1.msra.mxu0 %v444
    %555 = vmatprep.subr.mxu0 %v449
    %556 = vmatpush1.msra.mxu0 %v448
    %557 = vmatprep.subr.mxu0 %v453
    %558 = vmatpush1.msra.mxu0 %v452
    %559 = vmatprep.subr.mxu0 %v457
    %560 = vmatpush1.msra.mxu0 %v456
    %561 = vmatprep.subr.mxu0 0.0
    %562 = vmatpush1.msra.mxu0 0.0
    %563 = vmatprep.subr.mxu0 0.0
    %564 = vmatpush1.msra.mxu0 0.0
    %565 = vmatprep.subr.mxu0 0.0
    %566 = vmatpush1.msra.mxu0 0.0
    %567 = vmatprep.subr.mxu0 0.0
    %568 = vmatpush1.msra.mxu0 0.0
    %569 = vmatprep.subr.mxu0 0.0
    %570 = vmatpush1.msra.mxu0 0.0
    %571 = vmatprep.subr.mxu0 0.0
    %572 = vmatpush1.msra.mxu0 0.0
    %573 = vmatprep.subr.mxu0 0.0
    %574 = vmatpush1.msra.mxu0 0.0
    %575 = vmatprep.subr.mxu0 0.0
    %576 = vmatpush1.msra.mxu0 0.0
    %577 = vmatprep.subr.mxu0 0.0
    %578 = vmatpush1.msra.mxu0 0.0
    %579 = vmatprep.subr.mxu0 0.0
    %580 = vmatpush1.msra.mxu0 0.0
    %581 = vmatprep.subr.mxu0 0.0
    %582 = vmatpush1.msra.mxu0 0.0
    %583 = vmatprep.subr.mxu0 0.0
    %584 = vmatpush1.msra.mxu0 0.0
    %585 = vmatprep.subr.mxu0 0.0
    %586 = vmatpush1.msra.mxu0 0.0
    %587 = vmatprep.subr.mxu0 0.0
    %588 = vmatpush1.msra.mxu0 0.0
    %589 = vmatprep.subr.mxu0 0.0
    %590 = vmatpush1.msra.mxu0 0.0
    %591 = vmatprep.subr.mxu0 0.0
    %592 = vmatpush1.msra.mxu0 0.0
    %593 = vmatprep.mubr.f32.mxu0 0.0
    %594 = vmatmul.mubr.f32.gmra.mrb[0].mxu0 %v385
    %v595 = vpop.f32.mrb[0].mxu0
    %v596 = vadd.f32 0.0, %v595
    %v597 = vpop.f32.mrb[0].mxu0
    %v598 = vadd.f32 0.0, %v597
    %599 = vdwg.mxu0
    %v600 = vadd.f32 %v390, %v525
    %v601 = vadd.f32 %v391, %v527
    %v602 = vadd.f32 %v392, %v596
    %v603 = vadd.f32 %v393, %v598
    %v604 = vxor.u32 %v600, 2147483648
    %v605 = vxor.u32 %v601, 2147483648
    %v606 = vxor.u32 %v602, 2147483648
    %v607 = vxor.u32 %v603, 2147483648
    %v608 = vmul.f32 %v604, 1.442695
    %v609 = vpow.pop %v608
    %v610 = vmul.f32 %v605, 1.442695
    %v611 = vpow.pop %v610
    %v612 = vmul.f32 %v606, 1.442695
    %v613 = vpow.pop %v612
    %v614 = vmul.f32 %v607, 1.442695
    %v615 = vpow.pop %v614
    %v616 = vadd.f32 %v609, 1.0
    %v617 = vadd.f32 %v611, 1.0
    %v618 = vadd.f32 %v613, 1.0
    %v619 = vadd.f32 %v615, 1.0
    %v620 = vrcp.pop %v616
    %v621 = vmul.f32 1.0, %v620
    %v622 = vrcp.pop %v617
    %v623 = vmul.f32 1.0, %v622
    %v624 = vrcp.pop %v618
    %v625 = vmul.f32 1.0, %v624
    %v626 = vrcp.pop %v619
    %v627 = vmul.f32 1.0, %v626
    %v628 = vmul.f32 %v625, 2.0
    %v629 = vsub.f32 %v628, 1.0
    %v630 = vmul.f32 %v623, %v386
    %v631 = vmul.f32 %v621, %v629
    %v632 = vadd.f32 %v630, %v631
    %v633 = vtanh.pop %v632
    %v634 = vmul.f32 %v627, %v633
    %635 = vst [vmem:[#allocation10] sm:$0xff] %v634
    %s636 = smul.u32 1, 4
    %s637 = smul.addr %s636, 8
    %s638 = scalar_lea.vmem [#allocation2], %s637
    %v639 = vld [vmem:[%s638] sm:$0xff]
    %v640 = vld [vmem:[%s638 + $0x8] sm:$0xff]
    %v641 = vld [vmem:[%s638 + $0x10] sm:$0xff]
    %v642 = vld [vmem:[%s638 + $0x18] sm:$0xff]
    %v643 = vld [vmem:[#allocation8] sm:$0xff]
    %v644 = vld [vmem:[#allocation8 + $0x8] sm:$0xff]
    %v645 = vld [vmem:[#allocation8 + $0x10] sm:$0xff]
    %v646 = vld [vmem:[#allocation8 + $0x18] sm:$0xff]
    %v647 = vld [vmem:[#allocation8 + $0x20] sm:$0xff]
    %v648 = vld [vmem:[#allocation8 + $0x28] sm:$0xff]
    %v649 = vld [vmem:[#allocation8 + $0x30] sm:$0xff]
    %v650 = vld [vmem:[#allocation8 + $0x38] sm:$0xff]
    %v651 = vld [vmem:[#allocation8 + $0x40] sm:$0xff]
    %v652 = vld [vmem:[#allocation8 + $0x48] sm:$0xff]
    %v653 = vld [vmem:[#allocation8 + $0x50] sm:$0xff]
    %v654 = vld [vmem:[#allocation8 + $0x58] sm:$0xff]
    %v655 = vld [vmem:[#allocation8 + $0x60] sm:$0xff]
    %v656 = vld [vmem:[#allocation8 + $0x68] sm:$0xff]
    %v657 = vld [vmem:[#allocation8 + $0x70] sm:$0xff]
    %v658 = vld [vmem:[#allocation8 + $0x78] sm:$0xff]
    %v659 = vld [vmem:[#allocation8 + $0x80] sm:$0xff]
    %v660 = vld [vmem:[#allocation8 + $0x88] sm:$0xff]
    %v661 = vld [vmem:[#allocation8 + $0x90] sm:$0xff]
    %v662 = vld [vmem:[#allocation8 + $0x98] sm:$0xff]
    %v663 = vld [vmem:[#allocation8 + $0xa0] sm:$0xff]
    %v664 = vld [vmem:[#allocation8 + $0xa8] sm:$0xff]
    %v665 = vld [vmem:[#allocation8 + $0xb0] sm:$0xff]
    %v666 = vld [vmem:[#allocation8 + $0xb8] sm:$0xff]
    %v667 = vld [vmem:[#allocation8 + $0xc0] sm:$0xff]
    %v668 = vld [vmem:[#allocation8 + $0xc8] sm:$0xff]
    %v669 = vld [vmem:[#allocation8 + $0xd0] sm:$0xff]
    %v670 = vld [vmem:[#allocation8 + $0xd8] sm:$0xff]
    %v671 = vld [vmem:[#allocation8 + $0xe0] sm:$0xff]
    %v672 = vld [vmem:[#allocation8 + $0xe8] sm:$0xff]
    %v673 = vld [vmem:[#allocation8 + $0xf0] sm:$0xff]
    %v674 = vld [vmem:[#allocation8 + $0xf8] sm:$0xff]
    %v675 = vld [vmem:[#allocation8 + $0x100] sm:$0xff]
    %v676 = vld [vmem:[#allocation8 + $0x108] sm:$0xff]
    %v677 = vld [vmem:[#allocation8 + $0x110] sm:$0xff]
    %v678 = vld [vmem:[#allocation8 + $0x118] sm:$0xff]
    %v679 = vld [vmem:[#allocation8 + $0x120] sm:$0xff]
    %v680 = vld [vmem:[#allocation8 + $0x128] sm:$0xff]
    %v681 = vld [vmem:[#allocation8 + $0x130] sm:$0xff]
    %v682 = vld [vmem:[#allocation8 + $0x138] sm:$0xff]
    %v683 = vld [vmem:[#allocation8 + $0x140] sm:$0xff]
    %v684 = vld [vmem:[#allocation8 + $0x148] sm:$0xff]
    %v685 = vld [vmem:[#allocation8 + $0x150] sm:$0xff]
    %v686 = vld [vmem:[#allocation8 + $0x158] sm:$0xff]
    %v687 = vld [vmem:[#allocation8 + $0x160] sm:$0xff]
    %v688 = vld [vmem:[#allocation8 + $0x168] sm:$0xff]
    %v689 = vld [vmem:[#allocation8 + $0x170] sm:$0xff]
    %v690 = vld [vmem:[#allocation8 + $0x178] sm:$0xff]
    %v691 = vld [vmem:[#allocation8 + $0x180] sm:$0xff]
    %v692 = vld [vmem:[#allocation8 + $0x188] sm:$0xff]
    %v693 = vld [vmem:[#allocation8 + $0x190] sm:$0xff]
    %v694 = vld [vmem:[#allocation8 + $0x198] sm:$0xff]
    %v695 = vld [vmem:[#allocation8 + $0x1a0] sm:$0xff]
    %v696 = vld [vmem:[#allocation8 + $0x1a8] sm:$0xff]
    %v697 = vld [vmem:[#allocation8 + $0x1b0] sm:$0xff]
    %v698 = vld [vmem:[#allocation8 + $0x1b8] sm:$0xff]
    %v699 = vld [vmem:[#allocation8 + $0x1c0] sm:$0xff]
    %v700 = vld [vmem:[#allocation8 + $0x1c8] sm:$0xff]
    %v701 = vld [vmem:[#allocation8 + $0x1d0] sm:$0xff]
    %v702 = vld [vmem:[#allocation8 + $0x1d8] sm:$0xff]
    %v703 = vld [vmem:[#allocation8 + $0x1e0] sm:$0xff]
    %v704 = vld [vmem:[#allocation8 + $0x1e8] sm:$0xff]
    %v705 = vld [vmem:[#allocation8 + $0x1f0] sm:$0xff]
    %v706 = vld [vmem:[#allocation8 + $0x1f8] sm:$0xff]
    %707 = vmatprep.subr.mxu0 %v644
    %708 = vmatpush1.msra.mxu0 %v643
    %709 = vmatprep.subr.mxu0 %v648
    %710 = vmatpush1.msra.mxu0 %v647
    %711 = vmatprep.subr.mxu0 %v652
    %712 = vmatpush1.msra.mxu0 %v651
    %713 = vmatprep.subr.mxu0 %v656
    %714 = vmatpush1.msra.mxu0 %v655
    %715 = vmatprep.subr.mxu0 %v660
    %716 = vmatpush1.msra.mxu0 %v659
    %717 = vmatprep.subr.mxu0 %v664
    %718 = vmatpush1.msra.mxu0 %v663
    %719 = vmatprep.subr.mxu0 %v668
    %720 = vmatpush1.msra.mxu0 %v667
    %721 = vmatprep.subr.mxu0 %v672
    %722 = vmatpush1.msra.mxu0 %v671
    %723 = vmatprep.subr.mxu0 %v676
    %724 = vmatpush1.msra.mxu0 %v675
    %725 = vmatprep.subr.mxu0 %v680
    %726 = vmatpush1.msra.mxu0 %v679
    %727 = vmatprep.subr.mxu0 %v684
    %728 = vmatpush1.msra.mxu0 %v683
    %729 = vmatprep.subr.mxu0 %v688
    %730 = vmatpush1.msra.mxu0 %v687
    %731 = vmatprep.subr.mxu0 %v692
    %732 = vmatpush1.msra.mxu0 %v691
    %733 = vmatprep.subr.mxu0 %v696
    %734 = vmatpush1.msra.mxu0 %v695
    %735 = vmatprep.subr.mxu0 %v700
    %736 = vmatpush1.msra.mxu0 %v699
    %737 = vmatprep.subr.mxu0 %v704
    %738 = vmatpush1.msra.mxu0 %v703
    %739 = vmatprep.subr.mxu0 0.0
    %740 = vmatpush1.msra.mxu0 0.0
    %741 = vmatprep.subr.mxu0 0.0
    %742 = vmatpush1.msra.mxu0 0.0
    %743 = vmatprep.subr.mxu0 0.0
    %744 = vmatpush1.msra.mxu0 0.0
    %745 = vmatprep.subr.mxu0 0.0
    %746 = vmatpush1.msra.mxu0 0.0
    %747 = vmatprep.subr.mxu0 0.0
    %748 = vmatpush1.msra.mxu0 0.0
    %749 = vmatprep.subr.mxu0 0.0
    %750 = vmatpush1.msra.mxu0 0.0
    %751 = vmatprep.subr.mxu0 0.0
    %752 = vmatpush1.msra.mxu0 0.0
    %753 = vmatprep.subr.mxu0 0.0
    %754 = vmatpush1.msra.mxu0 0.0
    %755 = vmatprep.subr.mxu0 0.0
    %756 = vmatpush1.msra.mxu0 0.0
    %757 = vmatprep.subr.mxu0 0.0
    %758 = vmatpush1.msra.mxu0 0.0
    %759 = vmatprep.subr.mxu0 0.0
    %760 = vmatpush1.msra.mxu0 0.0
    %761 = vmatprep.subr.mxu0 0.0
    %762 = vmatpush1.msra.mxu0 0.0
    %763 = vmatprep.subr.mxu0 0.0
    %764 = vmatpush1.msra.mxu0 0.0
    %765 = vmatprep.subr.mxu0 0.0
    %766 = vmatpush1.msra.mxu0 0.0
    %767 = vmatprep.subr.mxu0 0.0
    %768 = vmatpush1.msra.mxu0 0.0
    %769 = vmatprep.subr.mxu0 0.0
    %770 = vmatpush1.msra.mxu0 0.0
    %771 = vmatprep.mubr.f32.mxu0 0.0
    %772 = vmatmul.mubr.f32.gmra.mrb[0].mxu0 %v634
    %v773 = vpop.f32.mrb[0].mxu0
    %v774 = vadd.f32 0.0, %v773
    %v775 = vpop.f32.mrb[0].mxu0
    %v776 = vadd.f32 0.0, %v775
    %777 = vdwg.mxu0
    %778 = vmatprep.subr.mxu0 %v646
    %779 = vmatpush1.msra.mxu0 %v645
    %780 = vmatprep.subr.mxu0 %v650
    %781 = vmatpush1.msra.mxu0 %v649
    %782 = vmatprep.subr.mxu0 %v654
    %783 = vmatpush1.msra.mxu0 %v653
    %784 = vmatprep.subr.mxu0 %v658
    %785 = vmatpush1.msra.mxu0 %v657
    %786 = vmatprep.subr.mxu0 %v662
    %787 = vmatpush1.msra.mxu0 %v661
    %788 = vmatprep.subr.mxu0 %v666
    %789 = vmatpush1.msra.mxu0 %v665
    %790 = vmatprep.subr.mxu0 %v670
    %791 = vmatpush1.msra.mxu0 %v669
    %792 = vmatprep.subr.mxu0 %v674
    %793 = vmatpush1.msra.mxu0 %v673
    %794 = vmatprep.subr.mxu0 %v678
    %795 = vmatpush1.msra.mxu0 %v677
    %796 = vmatprep.subr.mxu0 %v682
    %797 = vmatpush1.msra.mxu0 %v681
    %798 = vmatprep.subr.mxu0 %v686
    %799 = vmatpush1.msra.mxu0 %v685
    %800 = vmatprep.subr.mxu0 %v690
    %801 = vmatpush1.msra.mxu0 %v689
    %802 = vmatprep.subr.mxu0 %v694
    %803 = vmatpush1.msra.mxu0 %v693
    %804 = vmatprep.subr.mxu0 %v698
    %805 = vmatpush1.msra.mxu0 %v697
    %806 = vmatprep.subr.mxu0 %v702
    %807 = vmatpush1.msra.mxu0 %v701
    %808 = vmatprep.subr.mxu0 %v706
    %809 = vmatpush1.msra.mxu0 %v705
    %810 = vmatprep.subr.mxu0 0.0
    %811 = vmatpush1.msra.mxu0 0.0
    %812 = vmatprep.subr.mxu0 0.0
    %813 = vmatpush1.msra.mxu0 0.0
    %814 = vmatprep.subr.mxu0 0.0
    %815 = vmatpush1.msra.mxu0 0.0
    %816 = vmatprep.subr.mxu0 0.0
    %817 = vmatpush1.msra.mxu0 0.0
    %818 = vmatprep.subr.mxu0 0.0
    %819 = vmatpush1.msra.mxu0 0.0
    %820 = vmatprep.subr.mxu0 0.0
    %821 = vmatpush1.msra.mxu0 0.0
    %822 = vmatprep.subr.mxu0 0.0
    %823 = vmatpush1.msra.mxu0 0.0
    %824 = vmatprep.subr.mxu0 0.0
    %825 = vmatpush1.msra.mxu0 0.0
    %826 = vmatprep.subr.mxu0 0.0
    %827 = vmatpush1.msra.mxu0 0.0
    %828 = vmatprep.subr.mxu0 0.0
    %829 = vmatpush1.msra.mxu0 0.0
    %830 = vmatprep.subr.mxu0 0.0
    %831 = vmatpush1.msra.mxu0 0.0
    %832 = vmatprep.subr.mxu0 0.0
    %833 = vmatpush1.msra.mxu0 0.0
    %834 = vmatprep.subr.mxu0 0.0
    %835 = vmatpush1.msra.mxu0 0.0
    %836 = vmatprep.subr.mxu0 0.0
    %837 = vmatpush1.msra.mxu0 0.0
    %838 = vmatprep.subr.mxu0 0.0
    %839 = vmatpush1.msra.mxu0 0.0
    %840 = vmatprep.subr.mxu0 0.0
    %841 = vmatpush1.msra.mxu0 0.0
    %842 = vmatprep.mubr.f32.mxu0 0.0
    %843 = vmatmul.mubr.f32.gmra.mrb[0].mxu0 %v634
    %v844 = vpop.f32.mrb[0].mxu0
    %v845 = vadd.f32 0.0, %v844
    %v846 = vpop.f32.mrb[0].mxu0
    %v847 = vadd.f32 0.0, %v846
    %848 = vdwg.mxu0
    %v849 = vadd.f32 %v639, %v774
    %v850 = vadd.f32 %v640, %v776
    %v851 = vadd.f32 %v641, %v845
    %v852 = vadd.f32 %v642, %v847
    %v853 = vxor.u32 %v849, 2147483648
    %v854 = vxor.u32 %v850, 2147483648
    %v855 = vxor.u32 %v851, 2147483648
    %v856 = vxor.u32 %v852, 2147483648
    %v857 = vmul.f32 %v853, 1.442695
    %v858 = vpow.pop %v857
    %v859 = vmul.f32 %v854, 1.442695
    %v860 = vpow.pop %v859
    %v861 = vmul.f32 %v855, 1.442695
    %v862 = vpow.pop %v861
    %v863 = vmul.f32 %v856, 1.442695
    %v864 = vpow.pop %v863
    %v865 = vadd.f32 %v858, 1.0
    %v866 = vadd.f32 %v860, 1.0
    %v867 = vadd.f32 %v862, 1.0
    %v868 = vadd.f32 %v864, 1.0
    %v869 = vrcp.pop %v865
    %v870 = vmul.f32 1.0, %v869
    %v871 = vrcp.pop %v866
    %v872 = vmul.f32 1.0, %v871
    %v873 = vrcp.pop %v867
    %v874 = vmul.f32 1.0, %v873
    %v875 = vrcp.pop %v868
    %v876 = vmul.f32 1.0, %v875
    %v877 = vmul.f32 %v874, 2.0
    %v878 = vsub.f32 %v877, 1.0
    %v879 = vmul.f32 %v872, %v632
    %v880 = vmul.f32 %v870, %v878
    %v881 = vadd.f32 %v879, %v880
    %v882 = vtanh.pop %v881
    %v883 = vmul.f32 %v876, %v882
    %s884 = scalar_lea.vmem [#allocation10], 8
    %885 = vst [vmem:[%s884] sm:$0xff] %v883
    %s886 = smul.u32 2, 4
    %s887 = smul.addr %s886, 8
    %s888 = scalar_lea.vmem [#allocation2], %s887
    %v889 = vld [vmem:[%s888] sm:$0xff]
    %v890 = vld [vmem:[%s888 + $0x8] sm:$0xff]
    %v891 = vld [vmem:[%s888 + $0x10] sm:$0xff]
    %v892 = vld [vmem:[%s888 + $0x18] sm:$0xff]
    %v893 = vld [vmem:[#allocation8] sm:$0xff]
    %v894 = vld [vmem:[#allocation8 + $0x8] sm:$0xff]
    %v895 = vld [vmem:[#allocation8 + $0x10] sm:$0xff]
    %v896 = vld [vmem:[#allocation8 + $0x18] sm:$0xff]
    %v897 = vld [vmem:[#allocation8 + $0x20] sm:$0xff]
    %v898 = vld [vmem:[#allocation8 + $0x28] sm:$0xff]
    %v899 = vld [vmem:[#allocation8 + $0x30] sm:$0xff]
    %v900 = vld [vmem:[#allocation8 + $0x38] sm:$0xff]
    %v901 = vld [vmem:[#allocation8 + $0x40] sm:$0xff]
    %v902 = vld [vmem:[#allocation8 + $0x48] sm:$0xff]
    %v903 = vld [vmem:[#allocation8 + $0x50] sm:$0xff]
    %v904 = vld [vmem:[#allocation8 + $0x58] sm:$0xff]
    %v905 = vld [vmem:[#allocation8 + $0x60] sm:$0xff]
    %v906 = vld [vmem:[#allocation8 + $0x68] sm:$0xff]
    %v907 = vld [vmem:[#allocation8 + $0x70] sm:$0xff]
    %v908 = vld [vmem:[#allocation8 + $0x78] sm:$0xff]
    %v909 = vld [vmem:[#allocation8 + $0x80] sm:$0xff]
    %v910 = vld [vmem:[#allocation8 + $0x88] sm:$0xff]
    %v911 = vld [vmem:[#allocation8 + $0x90] sm:$0xff]
    %v912 = vld [vmem:[#allocation8 + $0x98] sm:$0xff]
    %v913 = vld [vmem:[#allocation8 + $0xa0] sm:$0xff]
    %v914 = vld [vmem:[#allocation8 + $0xa8] sm:$0xff]
    %v915 = vld [vmem:[#allocation8 + $0xb0] sm:$0xff]
    %v916 = vld [vmem:[#allocation8 + $0xb8] sm:$0xff]
    %v917 = vld [vmem:[#allocation8 + $0xc0] sm:$0xff]
    %v918 = vld [vmem:[#allocation8 + $0xc8] sm:$0xff]
    %v919 = vld [vmem:[#allocation8 + $0xd0] sm:$0xff]
    %v920 = vld [vmem:[#allocation8 + $0xd8] sm:$0xff]
    %v921 = vld [vmem:[#allocation8 + $0xe0] sm:$0xff]
    %v922 = vld [vmem:[#allocation8 + $0xe8] sm:$0xff]
    %v923 = vld [vmem:[#allocation8 + $0xf0] sm:$0xff]
    %v924 = vld [vmem:[#allocation8 + $0xf8] sm:$0xff]
    %v925 = vld [vmem:[#allocation8 + $0x100] sm:$0xff]
    %v926 = vld [vmem:[#allocation8 + $0x108] sm:$0xff]
    %v927 = vld [vmem:[#allocation8 + $0x110] sm:$0xff]
    %v928 = vld [vmem:[#allocation8 + $0x118] sm:$0xff]
    %v929 = vld [vmem:[#allocation8 + $0x120] sm:$0xff]
    %v930 = vld [vmem:[#allocation8 + $0x128] sm:$0xff]
    %v931 = vld [vmem:[#allocation8 + $0x130] sm:$0xff]
    %v932 = vld [vmem:[#allocation8 + $0x138] sm:$0xff]
    %v933 = vld [vmem:[#allocation8 + $0x140] sm:$0xff]
    %v934 = vld [vmem:[#allocation8 + $0x148] sm:$0xff]
    %v935 = vld [vmem:[#allocation8 + $0x150] sm:$0xff]
    %v936 = vld [vmem:[#allocation8 + $0x158] sm:$0xff]
    %v937 = vld [vmem:[#allocation8 + $0x160] sm:$0xff]
    %v938 = vld [vmem:[#allocation8 + $0x168] sm:$0xff]
    %v939 = vld [vmem:[#allocation8 + $0x170] sm:$0xff]
    %v940 = vld [vmem:[#allocation8 + $0x178] sm:$0xff]
    %v941 = vld [vmem:[#allocation8 + $0x180] sm:$0xff]
    %v942 = vld [vmem:[#allocation8 + $0x188] sm:$0xff]
    %v943 = vld [vmem:[#allocation8 + $0x190] sm:$0xff]
    %v944 = vld [vmem:[#allocation8 + $0x198] sm:$0xff]
    %v945 = vld [vmem:[#allocation8 + $0x1a0] sm:$0xff]
    %v946 = vld [vmem:[#allocation8 + $0x1a8] sm:$0xff]
    %v947 = vld [vmem:[#allocation8 + $0x1b0] sm:$0xff]
    %v948 = vld [vmem:[#allocation8 + $0x1b8] sm:$0xff]
    %v949 = vld [vmem:[#allocation8 + $0x1c0] sm:$0xff]
    %v950 = vld [vmem:[#allocation8 + $0x1c8] sm:$0xff]
    %v951 = vld [vmem:[#allocation8 + $0x1d0] sm:$0xff]
    %v952 = vld [vmem:[#allocation8 + $0x1d8] sm:$0xff]
    %v953 = vld [vmem:[#allocation8 + $0x1e0] sm:$0xff]
    %v954 = vld [vmem:[#allocation8 + $0x1e8] sm:$0xff]
    %v955 = vld [vmem:[#allocation8 + $0x1f0] sm:$0xff]
    %v956 = vld [vmem:[#allocation8 + $0x1f8] sm:$0xff]
    %957 = vmatprep.subr.mxu0 %v894
    %958 = vmatpush1.msra.mxu0 %v893
    %959 = vmatprep.subr.mxu0 %v898
    %960 = vmatpush1.msra.mxu0 %v897
    %961 = vmatprep.subr.mxu0 %v902
    %962 = vmatpush1.msra.mxu0 %v901
    %963 = vmatprep.subr.mxu0 %v906
    %964 = vmatpush1.msra.mxu0 %v905
    %965 = vmatprep.subr.mxu0 %v910
    %966 = vmatpush1.msra.mxu0 %v909
    %967 = vmatprep.subr.mxu0 %v914
    %968 = vmatpush1.msra.mxu0 %v913
    %969 = vmatprep.subr.mxu0 %v918
    %970 = vmatpush1.msra.mxu0 %v917
    %971 = vmatprep.subr.mxu0 %v922
    %972 = vmatpush1.msra.mxu0 %v921
    %973 = vmatprep.subr.mxu0 %v926
    %974 = vmatpush1.msra.mxu0 %v925
    %975 = vmatprep.subr.mxu0 %v930
    %976 = vmatpush1.msra.mxu0 %v929
    %977 = vmatprep.subr.mxu0 %v934
    %978 = vmatpush1.msra.mxu0 %v933
    %979 = vmatprep.subr.mxu0 %v938
    %980 = vmatpush1.msra.mxu0 %v937
    %981 = vmatprep.subr.mxu0 %v942
    %982 = vmatpush1.msra.mxu0 %v941
    %983 = vmatprep.subr.mxu0 %v946
    %984 = vmatpush1.msra.mxu0 %v945
    %985 = vmatprep.subr.mxu0 %v950
    %986 = vmatpush1.msra.mxu0 %v949
    %987 = vmatprep.subr.mxu0 %v954
    %988 = vmatpush1.msra.mxu0 %v953
    %989 = vmatprep.subr.mxu0 0.0
    %990 = vmatpush1.msra.mxu0 0.0
    %991 = vmatprep.subr.mxu0 0.0
    %992 = vmatpush1.msra.mxu0 0.0
    %993 = vmatprep.subr.mxu0 0.0
    %994 = vmatpush1.msra.mxu0 0.0
    %995 = vmatprep.subr.mxu0 0.0
    %996 = vmatpush1.msra.mxu0 0.0
    %997 = vmatprep.subr.mxu0 0.0
    %998 = vmatpush1.msra.mxu0 0.0
    %999 = vmatprep.subr.mxu0 0.0
    %1000 = vmatpush1.msra.mxu0 0.0
    %1001 = vmatprep.subr.mxu0 0.0
    %1002 = vmatpush1.msra.mxu0 0.0
    %1003 = vmatprep.subr.mxu0 0.0
    %1004 = vmatpush1.msra.mxu0 0.0
    %1005 = vmatprep.subr.mxu0 0.0
    %1006 = vmatpush1.msra.mxu0 0.0
    %1007 = vmatprep.subr.mxu0 0.0
    %1008 = vmatpush1.msra.mxu0 0.0
    %1009 = vmatprep.subr.mxu0 0.0
    %1010 = vmatpush1.msra.mxu0 0.0
    %1011 = vmatprep.subr.mxu0 0.0
    %1012 = vmatpush1.msra.mxu0 0.0
    %1013 = vmatprep.subr.mxu0 0.0
    %1014 = vmatpush1.msra.mxu0 0.0
    %1015 = vmatprep.subr.mxu0 0.0
    %1016 = vmatpush1.msra.mxu0 0.0
    %1017 = vmatprep.subr.mxu0 0.0
    %1018 = vmatpush1.msra.mxu0 0.0
    %1019 = vmatprep.subr.mxu0 0.0
    %1020 = vmatpush1.msra.mxu0 0.0
    %1021 = vmatprep.mubr.f32.mxu0 0.0
    %1022 = vmatmul.mubr.f32.gmra.mrb[0].mxu0 %v883
    %v1023 = vpop.f32.mrb[0].mxu0
    %v1024 = vadd.f32 0.0, %v1023
    %v1025 = vpop.f32.mrb[0].mxu0
    %v1026 = vadd.f32 0.0, %v1025
    %1027 = vdwg.mxu0
    %1028 = vmatprep.subr.mxu0 %v896
    %1029 = vmatpush1.msra.mxu0 %v895
    %1030 = vmatprep.subr.mxu0 %v900
    %1031 = vmatpush1.msra.mxu0 %v899
    %1032 = vmatprep.subr.mxu0 %v904
    %1033 = vmatpush1.msra.mxu0 %v903
    %1034 = vmatprep.subr.mxu0 %v908
    %1035 = vmatpush1.msra.mxu0 %v907
    %1036 = vmatprep.subr.mxu0 %v912
    %1037 = vmatpush1.msra.mxu0 %v911
    %1038 = vmatprep.subr.mxu0 %v916
    %1039 = vmatpush1.msra.mxu0 %v915
    %1040 = vmatprep.subr.mxu0 %v920
    %1041 = vmatpush1.msra.mxu0 %v919
    %1042 = vmatprep.subr.mxu0 %v924
    %1043 = vmatpush1.msra.mxu0 %v923
    %1044 = vmatprep.subr.mxu0 %v928
    %1045 = vmatpush1.msra.mxu0 %v927
    %1046 = vmatprep.subr.mxu0 %v932
    %1047 = vmatpush1.msra.mxu0 %v931
    %1048 = vmatprep.subr.mxu0 %v936
    %1049 = vmatpush1.msra.mxu0 %v935
    %1050 = vmatprep.subr.mxu0 %v940
    %1051 = vmatpush1.msra.mxu0 %v939
    %1052 = vmatprep.subr.mxu0 %v944
    %1053 = vmatpush1.msra.mxu0 %v943
    %1054 = vmatprep.subr.mxu0 %v948
    %1055 = vmatpush1.msra.mxu0 %v947
    %1056 = vmatprep.subr.mxu0 %v952
    %1057 = vmatpush1.msra.mxu0 %v951
    %1058 = vmatprep.subr.mxu0 %v956
    %1059 = vmatpush1.msra.mxu0 %v955
    %1060 = vmatprep.subr.mxu0 0.0
    %1061 = vmatpush1.msra.mxu0 0.0
    %1062 = vmatprep.subr.mxu0 0.0
    %1063 = vmatpush1.msra.mxu0 0.0
    %1064 = vmatprep.subr.mxu0 0.0
    %1065 = vmatpush1.msra.mxu0 0.0
    %1066 = vmatprep.subr.mxu0 0.0
    %1067 = vmatpush1.msra.mxu0 0.0
    %1068 = vmatprep.subr.mxu0 0.0
    %1069 = vmatpush1.msra.mxu0 0.0
    %1070 = vmatprep.subr.mxu0 0.0
    %1071 = vmatpush1.msra.mxu0 0.0
    %1072 = vmatprep.subr.mxu0 0.0
    %1073 = vmatpush1.msra.mxu0 0.0
    %1074 = vmatprep.subr.mxu0 0.0
    %1075 = vmatpush1.msra.mxu0 0.0
    %1076 = vmatprep.subr.mxu0 0.0
    %1077 = vmatpush1.msra.mxu0 0.0
    %1078 = vmatprep.subr.mxu0 0.0
    %1079 = vmatpush1.msra.mxu0 0.0
    %1080 = vmatprep.subr.mxu0 0.0
    %1081 = vmatpush1.msra.mxu0 0.0
    %1082 = vmatprep.subr.mxu0 0.0
    %1083 = vmatpush1.msra.mxu0 0.0
    %1084 = vmatprep.subr.mxu0 0.0
    %1085 = vmatpush1.msra.mxu0 0.0
    %1086 = vmatprep.subr.mxu0 0.0
    %1087 = vmatpush1.msra.mxu0 0.0
    %1088 = vmatprep.subr.mxu0 0.0
    %1089 = vmatpush1.msra.mxu0 0.0
    %1090 = vmatprep.subr.mxu0 0.0
    %1091 = vmatpush1.msra.mxu0 0.0
    %1092 = vmatprep.mubr.f32.mxu0 0.0
    %1093 = vmatmul.mubr.f32.gmra.mrb[0].mxu0 %v883
    %v1094 = vpop.f32.mrb[0].mxu0
    %v1095 = vadd.f32 0.0, %v1094
    %v1096 = vpop.f32.mrb[0].mxu0
    %v1097 = vadd.f32 0.0, %v1096
    %1098 = vdwg.mxu0
    %v1099 = vadd.f32 %v889, %v1024
    %v1100 = vadd.f32 %v890, %v1026
    %v1101 = vadd.f32 %v891, %v1095
    %v1102 = vadd.f32 %v892, %v1097
    %v1103 = vxor.u32 %v1099, 2147483648
    %v1104 = vxor.u32 %v1100, 2147483648
    %v1105 = vxor.u32 %v1101, 2147483648
    %v1106 = vxor.u32 %v1102, 2147483648
    %v1107 = vmul.f32 %v1103, 1.442695
    %v1108 = vpow.pop %v1107
    %v1109 = vmul.f32 %v1104, 1.442695
    %v1110 = vpow.pop %v1109
    %v1111 = vmul.f32 %v1105, 1.442695
    %v1112 = vpow.pop %v1111
    %v1113 = vmul.f32 %v1106, 1.442695
    %v1114 = vpow.pop %v1113
    %v1115 = vadd.f32 %v1108, 1.0
    %v1116 = vadd.f32 %v1110, 1.0
    %v1117 = vadd.f32 %v1112, 1.0
    %v1118 = vadd.f32 %v1114, 1.0
    %v1119 = vrcp.pop %v1115
    %v1120 = vmul.f32 1.0, %v1119
    %v1121 = vrcp.pop %v1116
    %v1122 = vmul.f32 1.0, %v1121
    %v1123 = vrcp.pop %v1117
    %v1124 = vmul.f32 1.0, %v1123
    %v1125 = vrcp.pop %v1118
    %v1126 = vmul.f32 1.0, %v1125
    %v1127 = vmul.f32 %v1124, 2.0
    %v1128 = vsub.f32 %v1127, 1.0
    %v1129 = vmul.f32 %v1122, %v881
    %v1130 = vmul.f32 %v1120, %v1128
    %v1131 = vadd.f32 %v1129, %v1130
    %v1132 = vtanh.pop %v1131
    %v1133 = vmul.f32 %v1126, %v1132
    %s1134 = scalar_lea.vmem [#allocation10], 16
    %1135 = vst [vmem:[%s1134] sm:$0xff] %v1133
    %s1136 = smul.u32 3, 4
    %s1137 = smul.addr %s1136, 8
    %s1138 = scalar_lea.vmem [#allocation2], %s1137
    %v1139 = vld [vmem:[%s1138] sm:$0xff]
    %v1140 = vld [vmem:[%s1138 + $0x8] sm:$0xff]
    %v1141 = vld [vmem:[%s1138 + $0x10] sm:$0xff]
    %v1142 = vld [vmem:[%s1138 + $0x18] sm:$0xff]
    %v1143 = vld [vmem:[#allocation8] sm:$0xff]
    %v1144 = vld [vmem:[#allocation8 + $0x8] sm:$0xff]
    %v1145 = vld [vmem:[#allocation8 + $0x10] sm:$0xff]
    %v1146 = vld [vmem:[#allocation8 + $0x18] sm:$0xff]
    %v1147 = vld [vmem:[#allocation8 + $0x20] sm:$0xff]
    %v1148 = vld [vmem:[#allocation8 + $0x28] sm:$0xff]
    %v1149 = vld [vmem:[#allocation8 + $0x30] sm:$0xff]
    %v1150 = vld [vmem:[#allocation8 + $0x38] sm:$0xff]
    %v1151 = vld [vmem:[#allocation8 + $0x40] sm:$0xff]
    %v1152 = vld [vmem:[#allocation8 + $0x48] sm:$0xff]
    %v1153 = vld [vmem:[#allocation8 + $0x50] sm:$0xff]
    %v1154 = vld [vmem:[#allocation8 + $0x58] sm:$0xff]
    %v1155 = vld [vmem:[#allocation8 + $0x60] sm:$0xff]
    %v1156 = vld [vmem:[#allocation8 + $0x68] sm:$0xff]
    %v1157 = vld [vmem:[#allocation8 + $0x70] sm:$0xff]
    %v1158 = vld [vmem:[#allocation8 + $0x78] sm:$0xff]
    %v1159 = vld [vmem:[#allocation8 + $0x80] sm:$0xff]
    %v1160 = vld [vmem:[#allocation8 + $0x88] sm:$0xff]
    %v1161 = vld [vmem:[#allocation8 + $0x90] sm:$0xff]
    %v1162 = vld [vmem:[#allocation8 + $0x98] sm:$0xff]
    %v1163 = vld [vmem:[#allocation8 + $0xa0] sm:$0xff]
    %v1164 = vld [vmem:[#allocation8 + $0xa8] sm:$0xff]
    %v1165 = vld [vmem:[#allocation8 + $0xb0] sm:$0xff]
    %v1166 = vld [vmem:[#allocation8 + $0xb8] sm:$0xff]
    %v1167 = vld [vmem:[#allocation8 + $0xc0] sm:$0xff]
    %v1168 = vld [vmem:[#allocation8 + $0xc8] sm:$0xff]
    %v1169 = vld [vmem:[#allocation8 + $0xd0] sm:$0xff]
    %v1170 = vld [vmem:[#allocation8 + $0xd8] sm:$0xff]
    %v1171 = vld [vmem:[#allocation8 + $0xe0] sm:$0xff]
    %v1172 = vld [vmem:[#allocation8 + $0xe8] sm:$0xff]
    %v1173 = vld [vmem:[#allocation8 + $0xf0] sm:$0xff]
    %v1174 = vld [vmem:[#allocation8 + $0xf8] sm:$0xff]
    %v1175 = vld [vmem:[#allocation8 + $0x100] sm:$0xff]
    %v1176 = vld [vmem:[#allocation8 + $0x108] sm:$0xff]
    %v1177 = vld [vmem:[#allocation8 + $0x110] sm:$0xff]
    %v1178 = vld [vmem:[#allocation8 + $0x118] sm:$0xff]
    %v1179 = vld [vmem:[#allocation8 + $0x120] sm:$0xff]
    %v1180 = vld [vmem:[#allocation8 + $0x128] sm:$0xff]
    %v1181 = vld [vmem:[#allocation8 + $0x130] sm:$0xff]
    %v1182 = vld [vmem:[#allocation8 + $0x138] sm:$0xff]
    %v1183 = vld [vmem:[#allocation8 + $0x140] sm:$0xff]
    %v1184 = vld [vmem:[#allocation8 + $0x148] sm:$0xff]
    %v1185 = vld [vmem:[#allocation8 + $0x150] sm:$0xff]
    %v1186 = vld [vmem:[#allocation8 + $0x158] sm:$0xff]
    %v1187 = vld [vmem:[#allocation8 + $0x160] sm:$0xff]
    %v1188 = vld [vmem:[#allocation8 + $0x168] sm:$0xff]
    %v1189 = vld [vmem:[#allocation8 + $0x170] sm:$0xff]
    %v1190 = vld [vmem:[#allocation8 + $0x178] sm:$0xff]
    %v1191 = vld [vmem:[#allocation8 + $0x180] sm:$0xff]
    %v1192 = vld [vmem:[#allocation8 + $0x188] sm:$0xff]
    %v1193 = vld [vmem:[#allocation8 + $0x190] sm:$0xff]
    %v1194 = vld [vmem:[#allocation8 + $0x198] sm:$0xff]
    %v1195 = vld [vmem:[#allocation8 + $0x1a0] sm:$0xff]
    %v1196 = vld [vmem:[#allocation8 + $0x1a8] sm:$0xff]
    %v1197 = vld [vmem:[#allocation8 + $0x1b0] sm:$0xff]
    %v1198 = vld [vmem:[#allocation8 + $0x1b8] sm:$0xff]
    %v1199 = vld [vmem:[#allocation8 + $0x1c0] sm:$0xff]
    %v1200 = vld [vmem:[#allocation8 + $0x1c8] sm:$0xff]
    %v1201 = vld [vmem:[#allocation8 + $0x1d0] sm:$0xff]
    %v1202 = vld [vmem:[#allocation8 + $0x1d8] sm:$0xff]
    %v1203 = vld [vmem:[#allocation8 + $0x1e0] sm:$0xff]
    %v1204 = vld [vmem:[#allocation8 + $0x1e8] sm:$0xff]
    %v1205 = vld [vmem:[#allocation8 + $0x1f0] sm:$0xff]
    %v1206 = vld [vmem:[#allocation8 + $0x1f8] sm:$0xff]
    %1207 = vmatprep.subr.mxu0 %v1144
    %1208 = vmatpush1.msra.mxu0 %v1143
    %1209 = vmatprep.subr.mxu0 %v1148
    %1210 = vmatpush1.msra.mxu0 %v1147
    %1211 = vmatprep.subr.mxu0 %v1152
    %1212 = vmatpush1.msra.mxu0 %v1151
    %1213 = vmatprep.subr.mxu0 %v1156
    %1214 = vmatpush1.msra.mxu0 %v1155
    %1215 = vmatprep.subr.mxu0 %v1160
    %1216 = vmatpush1.msra.mxu0 %v1159
    %1217 = vmatprep.subr.mxu0 %v1164
    %1218 = vmatpush1.msra.mxu0 %v1163
    %1219 = vmatprep.subr.mxu0 %v1168
    %1220 = vmatpush1.msra.mxu0 %v1167
    %1221 = vmatprep.subr.mxu0 %v1172
    %1222 = vmatpush1.msra.mxu0 %v1171
    %1223 = vmatprep.subr.mxu0 %v1176
    %1224 = vmatpush1.msra.mxu0 %v1175
    %1225 = vmatprep.subr.mxu0 %v1180
    %1226 = vmatpush1.msra.mxu0 %v1179
    %1227 = vmatprep.subr.mxu0 %v1184
    %1228 = vmatpush1.msra.mxu0 %v1183
    %1229 = vmatprep.subr.mxu0 %v1188
    %1230 = vmatpush1.msra.mxu0 %v1187
    %1231 = vmatprep.subr.mxu0 %v1192
    %1232 = vmatpush1.msra.mxu0 %v1191
    %1233 = vmatprep.subr.mxu0 %v1196
    %1234 = vmatpush1.msra.mxu0 %v1195
    %1235 = vmatprep.subr.mxu0 %v1200
    %1236 = vmatpush1.msra.mxu0 %v1199
    %1237 = vmatprep.subr.mxu0 %v1204
    %1238 = vmatpush1.msra.mxu0 %v1203
    %1239 = vmatprep.subr.mxu0 0.0
    %1240 = vmatpush1.msra.mxu0 0.0
    %1241 = vmatprep.subr.mxu0 0.0
    %1242 = vmatpush1.msra.mxu0 0.0
    %1243 = vmatprep.subr.mxu0 0.0
    %1244 = vmatpush1.msra.mxu0 0.0
    %1245 = vmatprep.subr.mxu0 0.0
    %1246 = vmatpush1.msra.mxu0 0.0
    %1247 = vmatprep.subr.mxu0 0.0
    %1248 = vmatpush1.msra.mxu0 0.0
    %1249 = vmatprep.subr.mxu0 0.0
    %1250 = vmatpush1.msra.mxu0 0.0
    %1251 = vmatprep.subr.mxu0 0.0
    %1252 = vmatpush1.msra.mxu0 0.0
    %1253 = vmatprep.subr.mxu0 0.0
    %1254 = vmatpush1.msra.mxu0 0.0
    %1255 = vmatprep.subr.mxu0 0.0
    %1256 = vmatpush1.msra.mxu0 0.0
    %1257 = vmatprep.subr.mxu0 0.0
    %1258 = vmatpush1.msra.mxu0 0.0
    %1259 = vmatprep.subr.mxu0 0.0
    %1260 = vmatpush1.msra.mxu0 0.0
    %1261 = vmatprep.subr.mxu0 0.0
    %1262 = vmatpush1.msra.mxu0 0.0
    %1263 = vmatprep.subr.mxu0 0.0
    %1264 = vmatpush1.msra.mxu0 0.0
    %1265 = vmatprep.subr.mxu0 0.0
    %1266 = vmatpush1.msra.mxu0 0.0
    %1267 = vmatprep.subr.mxu0 0.0
    %1268 = vmatpush1.msra.mxu0 0.0
    %1269 = vmatprep.subr.mxu0 0.0
    %1270 = vmatpush1.msra.mxu0 0.0
    %1271 = vmatprep.mubr.f32.mxu0 0.0
    %1272 = vmatmul.mubr.f32.gmra.mrb[0].mxu0 %v1133
    %v1273 = vpop.f32.mrb[0].mxu0
    %v1274 = vadd.f32 0.0, %v1273
    %v1275 = vpop.f32.mrb[0].mxu0
    %v1276 = vadd.f32 0.0, %v1275
    %1277 = vdwg.mxu0
    %1278 = vmatprep.subr.mxu0 %v1146
    %1279 = vmatpush1.msra.mxu0 %v1145
    %1280 = vmatprep.subr.mxu0 %v1150
    %1281 = vmatpush1.msra.mxu0 %v1149
    %1282 = vmatprep.subr.mxu0 %v1154
    %1283 = vmatpush1.msra.mxu0 %v1153
    %1284 = vmatprep.subr.mxu0 %v1158
    %1285 = vmatpush1.msra.mxu0 %v1157
    %1286 = vmatprep.subr.mxu0 %v1162
    %1287 = vmatpush1.msra.mxu0 %v1161
    %1288 = vmatprep.subr.mxu0 %v1166
    %1289 = vmatpush1.msra.mxu0 %v1165
    %1290 = vmatprep.subr.mxu0 %v1170
    %1291 = vmatpush1.msra.mxu0 %v1169
    %1292 = vmatprep.subr.mxu0 %v1174
    %1293 = vmatpush1.msra.mxu0 %v1173
    %1294 = vmatprep.subr.mxu0 %v1178
    %1295 = vmatpush1.msra.mxu0 %v1177
    %1296 = vmatprep.subr.mxu0 %v1182
    %1297 = vmatpush1.msra.mxu0 %v1181
    %1298 = vmatprep.subr.mxu0 %v1186
    %1299 = vmatpush1.msra.mxu0 %v1185
    %1300 = vmatprep.subr.mxu0 %v1190
    %1301 = vmatpush1.msra.mxu0 %v1189
    %1302 = vmatprep.subr.mxu0 %v1194
    %1303 = vmatpush1.msra.mxu0 %v1193
    %1304 = vmatprep.subr.mxu0 %v1198
    %1305 = vmatpush1.msra.mxu0 %v1197
    %1306 = vmatprep.subr.mxu0 %v1202
    %1307 = vmatpush1.msra.mxu0 %v1201
    %1308 = vmatprep.subr.mxu0 %v1206
    %1309 = vmatpush1.msra.mxu0 %v1205
    %1310 = vmatprep.subr.mxu0 0.0
    %1311 = vmatpush1.msra.mxu0 0.0
    %1312 = vmatprep.subr.mxu0 0.0
    %1313 = vmatpush1.msra.mxu0 0.0
    %1314 = vmatprep.subr.mxu0 0.0
    %1315 = vmatpush1.msra.mxu0 0.0
    %1316 = vmatprep.subr.mxu0 0.0
    %1317 = vmatpush1.msra.mxu0 0.0
    %1318 = vmatprep.subr.mxu0 0.0
    %1319 = vmatpush1.msra.mxu0 0.0
    %1320 = vmatprep.subr.mxu0 0.0
    %1321 = vmatpush1.msra.mxu0 0.0
    %1322 = vmatprep.subr.mxu0 0.0
    %1323 = vmatpush1.msra.mxu0 0.0
    %1324 = vmatprep.subr.mxu0 0.0
    %1325 = vmatpush1.msra.mxu0 0.0
    %1326 = vmatprep.subr.mxu0 0.0
    %1327 = vmatpush1.msra.mxu0 0.0
    %1328 = vmatprep.subr.mxu0 0.0
    %1329 = vmatpush1.msra.mxu0 0.0
    %1330 = vmatprep.subr.mxu0 0.0
    %1331 = vmatpush1.msra.mxu0 0.0
    %1332 = vmatprep.subr.mxu0 0.0
    %1333 = vmatpush1.msra.mxu0 0.0
    %1334 = vmatprep.subr.mxu0 0.0
    %1335 = vmatpush1.msra.mxu0 0.0
    %1336 = vmatprep.subr.mxu0 0.0
    %1337 = vmatpush1.msra.mxu0 0.0
    %1338 = vmatprep.subr.mxu0 0.0
    %1339 = vmatpush1.msra.mxu0 0.0
    %1340 = vmatprep.subr.mxu0 0.0
    %1341 = vmatpush1.msra.mxu0 0.0
    %1342 = vmatprep.mubr.f32.mxu0 0.0
    %1343 = vmatmul.mubr.f32.gmra.mrb[0].mxu0 %v1133
    %v1344 = vpop.f32.mrb[0].mxu0
    %v1345 = vadd.f32 0.0, %v1344
    %v1346 = vpop.f32.mrb[0].mxu0
    %v1347 = vadd.f32 0.0, %v1346
    %1348 = vdwg.mxu0
    %v1349 = vadd.f32 %v1139, %v1274
    %v1350 = vadd.f32 %v1140, %v1276
    %v1351 = vadd.f32 %v1141, %v1345
    %v1352 = vadd.f32 %v1142, %v1347
    %v1353 = vxor.u32 %v1349, 2147483648
    %v1354 = vxor.u32 %v1350, 2147483648
    %v1355 = vxor.u32 %v1351, 2147483648
    %v1356 = vxor.u32 %v1352, 2147483648
    %v1357 = vmul.f32 %v1353, 1.442695
    %v1358 = vpow.pop %v1357
    %v1359 = vmul.f32 %v1354, 1.442695
    %v1360 = vpow.pop %v1359
    %v1361 = vmul.f32 %v1355, 1.442695
    %v1362 = vpow.pop %v1361
    %v1363 = vmul.f32 %v1356, 1.442695
    %v1364 = vpow.pop %v1363
    %v1365 = vadd.f32 %v1358, 1.0
    %v1366 = vadd.f32 %v1360, 1.0
    %v1367 = vadd.f32 %v1362, 1.0
    %v1368 = vadd.f32 %v1364, 1.0
    %v1369 = vrcp.pop %v1365
    %v1370 = vmul.f32 1.0, %v1369
    %v1371 = vrcp.pop %v1366
    %v1372 = vmul.f32 1.0, %v1371
    %v1373 = vrcp.pop %v1367
    %v1374 = vmul.f32 1.0, %v1373
    %v1375 = vrcp.pop %v1368
    %v1376 = vmul.f32 1.0, %v1375
    %v1377 = vmul.f32 %v1374, 2.0
    %v1378 = vsub.f32 %v1377, 1.0
    %v1379 = vmul.f32 %v1372, %v1131
    %v1380 = vmul.f32 %v1370, %v1378
    %v1381 = vadd.f32 %v1379, %v1380
    %v1382 = vtanh.pop %v1381
    %v1383 = vmul.f32 %v1376, %v1382
    %s1384 = scalar_lea.vmem [#allocation10], 24
    %1385 = vst [vmem:[%s1384] sm:$0xff] %v1383
    %s1386 = smul.u32 4, 4
    %s1387 = smul.addr %s1386, 8
    %s1388 = scalar_lea.vmem [#allocation2], %s1387
    %v1389 = vld [vmem:[%s1388] sm:$0xff]
    %v1390 = vld [vmem:[%s1388 + $0x8] sm:$0xff]
    %v1391 = vld [vmem:[%s1388 + $0x10] sm:$0xff]
    %v1392 = vld [vmem:[%s1388 + $0x18] sm:$0xff]
    %v1393 = vld [vmem:[#allocation8] sm:$0xff]
    %v1394 = vld [vmem:[#allocation8 + $0x8] sm:$0xff]
    %v1395 = vld [vmem:[#allocation8 + $0x10] sm:$0xff]
    %v1396 = vld [vmem:[#allocation8 + $0x18] sm:$0xff]
    %v1397 = vld [vmem:[#allocation8 + $0x20] sm:$0xff]
    %v1398 = vld [vmem:[#allocation8 + $0x28] sm:$0xff]
    %v1399 = vld [vmem:[#allocation8 + $0x30] sm:$0xff]
    %v1400 = vld [vmem:[#allocation8 + $0x38] sm:$0xff]
    %v1401 = vld [vmem:[#allocation8 + $0x40] sm:$0xff]
    %v1402 = vld [vmem:[#allocation8 + $0x48] sm:$0xff]
    %v1403 = vld [vmem:[#allocation8 + $0x50] sm:$0xff]
    %v1404 = vld [vmem:[#allocation8 + $0x58] sm:$0xff]
    %v1405 = vld [vmem:[#allocation8 + $0x60] sm:$0xff]
    %v1406 = vld [vmem:[#allocation8 + $0x68] sm:$0xff]
    %v1407 = vld [vmem:[#allocation8 + $0x70] sm:$0xff]
    %v1408 = vld [vmem:[#allocation8 + $0x78] sm:$0xff]
    %v1409 = vld [vmem:[#allocation8 + $0x80] sm:$0xff]
    %v1410 = vld [vmem:[#allocation8 + $0x88] sm:$0xff]
    %v1411 = vld [vmem:[#allocation8 + $0x90] sm:$0xff]
    %v1412 = vld [vmem:[#allocation8 + $0x98] sm:$0xff]
    %v1413 = vld [vmem:[#allocation8 + $0xa0] sm:$0xff]
    %v1414 = vld [vmem:[#allocation8 + $0xa8] sm:$0xff]
    %v1415 = vld [vmem:[#allocation8 + $0xb0] sm:$0xff]
    %v1416 = vld [vmem:[#allocation8 + $0xb8] sm:$0xff]
    %v1417 = vld [vmem:[#allocation8 + $0xc0] sm:$0xff]
    %v1418 = vld [vmem:[#allocation8 + $0xc8] sm:$0xff]
    %v1419 = vld [vmem:[#allocation8 + $0xd0] sm:$0xff]
    %v1420 = vld [vmem:[#allocation8 + $0xd8] sm:$0xff]
    %v1421 = vld [vmem:[#allocation8 + $0xe0] sm:$0xff]
    %v1422 = vld [vmem:[#allocation8 + $0xe8] sm:$0xff]
    %v1423 = vld [vmem:[#allocation8 + $0xf0] sm:$0xff]
    %v1424 = vld [vmem:[#allocation8 + $0xf8] sm:$0xff]
    %v1425 = vld [vmem:[#allocation8 + $0x100] sm:$0xff]
    %v1426 = vld [vmem:[#allocation8 + $0x108] sm:$0xff]
    %v1427 = vld [vmem:[#allocation8 + $0x110] sm:$0xff]
    %v1428 = vld [vmem:[#allocation8 + $0x118] sm:$0xff]
    %v1429 = vld [vmem:[#allocation8 + $0x120] sm:$0xff]
    %v1430 = vld [vmem:[#allocation8 + $0x128] sm:$0xff]
    %v1431 = vld [vmem:[#allocation8 + $0x130] sm:$0xff]
    %v1432 = vld [vmem:[#allocation8 + $0x138] sm:$0xff]
    %v1433 = vld [vmem:[#allocation8 + $0x140] sm:$0xff]
    %v1434 = vld [vmem:[#allocation8 + $0x148] sm:$0xff]
    %v1435 = vld [vmem:[#allocation8 + $0x150] sm:$0xff]
    %v1436 = vld [vmem:[#allocation8 + $0x158] sm:$0xff]
    %v1437 = vld [vmem:[#allocation8 + $0x160] sm:$0xff]
    %v1438 = vld [vmem:[#allocation8 + $0x168] sm:$0xff]
    %v1439 = vld [vmem:[#allocation8 + $0x170] sm:$0xff]
    %v1440 = vld [vmem:[#allocation8 + $0x178] sm:$0xff]
    %v1441 = vld [vmem:[#allocation8 + $0x180] sm:$0xff]
    %v1442 = vld [vmem:[#allocation8 + $0x188] sm:$0xff]
    %v1443 = vld [vmem:[#allocation8 + $0x190] sm:$0xff]
    %v1444 = vld [vmem:[#allocation8 + $0x198] sm:$0xff]
    %v1445 = vld [vmem:[#allocation8 + $0x1a0] sm:$0xff]
    %v1446 = vld [vmem:[#allocation8 + $0x1a8] sm:$0xff]
    %v1447 = vld [vmem:[#allocation8 + $0x1b0] sm:$0xff]
    %v1448 = vld [vmem:[#allocation8 + $0x1b8] sm:$0xff]
    %v1449 = vld [vmem:[#allocation8 + $0x1c0] sm:$0xff]
    %v1450 = vld [vmem:[#allocation8 + $0x1c8] sm:$0xff]
    %v1451 = vld [vmem:[#allocation8 + $0x1d0] sm:$0xff]
    %v1452 = vld [vmem:[#allocation8 + $0x1d8] sm:$0xff]
    %v1453 = vld [vmem:[#allocation8 + $0x1e0] sm:$0xff]
    %v1454 = vld [vmem:[#allocation8 + $0x1e8] sm:$0xff]
    %v1455 = vld [vmem:[#allocation8 + $0x1f0] sm:$0xff]
    %v1456 = vld [vmem:[#allocation8 + $0x1f8] sm:$0xff]
    %1457 = vmatprep.subr.mxu0 %v1394
    %1458 = vmatpush1.msra.mxu0 %v1393
    %1459 = vmatprep.subr.mxu0 %v1398
    %1460 = vmatpush1.msra.mxu0 %v1397
    %1461 = vmatprep.subr.mxu0 %v1402
    %1462 = vmatpush1.msra.mxu0 %v1401
    %1463 = vmatprep.subr.mxu0 %v1406
    %1464 = vmatpush1.msra.mxu0 %v1405
    %1465 = vmatprep.subr.mxu0 %v1410
    %1466 = vmatpush1.msra.mxu0 %v1409
    %1467 = vmatprep.subr.mxu0 %v1414
    %1468 = vmatpush1.msra.mxu0 %v1413
    %1469 = vmatprep.subr.mxu0 %v1418
    %1470 = vmatpush1.msra.mxu0 %v1417
    %1471 = vmatprep.subr.mxu0 %v1422
    %1472 = vmatpush1.msra.mxu0 %v1421
    %1473 = vmatprep.subr.mxu0 %v1426
    %1474 = vmatpush1.msra.mxu0 %v1425
    %1475 = vmatprep.subr.mxu0 %v1430
    %1476 = vmatpush1.msra.mxu0 %v1429
    %1477 = vmatprep.subr.mxu0 %v1434
    %1478 = vmatpush1.msra.mxu0 %v1433
    %1479 = vmatprep.subr.mxu0 %v1438
    %1480 = vmatpush1.msra.mxu0 %v1437
    %1481 = vmatprep.subr.mxu0 %v1442
    %1482 = vmatpush1.msra.mxu0 %v1441
    %1483 = vmatprep.subr.mxu0 %v1446
    %1484 = vmatpush1.msra.mxu0 %v1445
    %1485 = vmatprep.subr.mxu0 %v1450
    %1486 = vmatpush1.msra.mxu0 %v1449
    %1487 = vmatprep.subr.mxu0 %v1454
    %1488 = vmatpush1.msra.mxu0 %v1453
    %1489 = vmatprep.subr.mxu0 0.0
    %1490 = vmatpush1.msra.mxu0 0.0
    %1491 = vmatprep.subr.mxu0 0.0
    %1492 = vmatpush1.msra.mxu0 0.0
    %1493 = vmatprep.subr.mxu0 0.0
    %1494 = vmatpush1.msra.mxu0 0.0
    %1495 = vmatprep.subr.mxu0 0.0
    %1496 = vmatpush1.msra.mxu0 0.0
    %1497 = vmatprep.subr.mxu0 0.0
    %1498 = vmatpush1.msra.mxu0 0.0
    %1499 = vmatprep.subr.mxu0 0.0
    %1500 = vmatpush1.msra.mxu0 0.0
    %1501 = vmatprep.subr.mxu0 0.0
    %1502 = vmatpush1.msra.mxu0 0.0
    %1503 = vmatprep.subr.mxu0 0.0
    %1504 = vmatpush1.msra.mxu0 0.0
    %1505 = vmatprep.subr.mxu0 0.0
    %1506 = vmatpush1.msra.mxu0 0.0
    %1507 = vmatprep.subr.mxu0 0.0
    %1508 = vmatpush1.msra.mxu0 0.0
    %1509 = vmatprep.subr.mxu0 0.0
    %1510 = vmatpush1.msra.mxu0 0.0
    %1511 = vmatprep.subr.mxu0 0.0
    %1512 = vmatpush1.msra.mxu0 0.0
    %1513 = vmatprep.subr.mxu0 0.0
    %1514 = vmatpush1.msra.mxu0 0.0
    %1515 = vmatprep.subr.mxu0 0.0
    %1516 = vmatpush1.msra.mxu0 0.0
    %1517 = vmatprep.subr.mxu0 0.0
    %1518 = vmatpush1.msra.mxu0 0.0
    %1519 = vmatprep.subr.mxu0 0.0
    %1520 = vmatpush1.msra.mxu0 0.0
    %1521 = vmatprep.mubr.f32.mxu0 0.0
    %1522 = vmatmul.mubr.f32.gmra.mrb[0].mxu0 %v1383
    %v1523 = vpop.f32.mrb[0].mxu0
    %v1524 = vadd.f32 0.0, %v1523
    %v1525 = vpop.f32.mrb[0].mxu0
    %v1526 = vadd.f32 0.0, %v1525
    %1527 = vdwg.mxu0
    %1528 = vmatprep.subr.mxu0 %v1396
    %1529 = vmatpush1.msra.mxu0 %v1395
    %1530 = vmatprep.subr.mxu0 %v1400
    %1531 = vmatpush1.msra.mxu0 %v1399
    %1532 = vmatprep.subr.mxu0 %v1404
    %1533 = vmatpush1.msra.mxu0 %v1403
    %1534 = vmatprep.subr.mxu0 %v1408
    %1535 = vmatpush1.msra.mxu0 %v1407
    %1536 = vmatprep.subr.mxu0 %v1412
    %1537 = vmatpush1.msra.mxu0 %v1411
    %1538 = vmatprep.subr.mxu0 %v1416
    %1539 = vmatpush1.msra.mxu0 %v1415
    %1540 = vmatprep.subr.mxu0 %v1420
    %1541 = vmatpush1.msra.mxu0 %v1419
    %1542 = vmatprep.subr.mxu0 %v1424
    %1543 = vmatpush1.msra.mxu0 %v1423
    %1544 = vmatprep.subr.mxu0 %v1428
    %1545 = vmatpush1.msra.mxu0 %v1427
    %1546 = vmatprep.subr.mxu0 %v1432
    %1547 = vmatpush1.msra.mxu0 %v1431
    %1548 = vmatprep.subr.mxu0 %v1436
    %1549 = vmatpush1.msra.mxu0 %v1435
    %1550 = vmatprep.subr.mxu0 %v1440
    %1551 = vmatpush1.msra.mxu0 %v1439
    %1552 = vmatprep.subr.mxu0 %v1444
    %1553 = vmatpush1.msra.mxu0 %v1443
    %1554 = vmatprep.subr.mxu0 %v1448
    %1555 = vmatpush1.msra.mxu0 %v1447
    %1556 = vmatprep.subr.mxu0 %v1452
    %1557 = vmatpush1.msra.mxu0 %v1451
    %1558 = vmatprep.subr.mxu0 %v1456
    %1559 = vmatpush1.msra.mxu0 %v1455
    %1560 = vmatprep.subr.mxu0 0.0
    %1561 = vmatpush1.msra.mxu0 0.0
    %1562 = vmatprep.subr.mxu0 0.0
    %1563 = vmatpush1.msra.mxu0 0.0
    %1564 = vmatprep.subr.mxu0 0.0
    %1565 = vmatpush1.msra.mxu0 0.0
    %1566 = vmatprep.subr.mxu0 0.0
    %1567 = vmatpush1.msra.mxu0 0.0
    %1568 = vmatprep.subr.mxu0 0.0
    %1569 = vmatpush1.msra.mxu0 0.0
    %1570 = vmatprep.subr.mxu0 0.0
    %1571 = vmatpush1.msra.mxu0 0.0
    %1572 = vmatprep.subr.mxu0 0.0
    %1573 = vmatpush1.msra.mxu0 0.0
    %1574 = vmatprep.subr.mxu0 0.0
    %1575 = vmatpush1.msra.mxu0 0.0
    %1576 = vmatprep.subr.mxu0 0.0
    %1577 = vmatpush1.msra.mxu0 0.0
    %1578 = vmatprep.subr.mxu0 0.0
    %1579 = vmatpush1.msra.mxu0 0.0
    %1580 = vmatprep.subr.mxu0 0.0
    %1581 = vmatpush1.msra.mxu0 0.0
    %1582 = vmatprep.subr.mxu0 0.0
    %1583 = vmatpush1.msra.mxu0 0.0
    %1584 = vmatprep.subr.mxu0 0.0
    %1585 = vmatpush1.msra.mxu0 0.0
    %1586 = vmatprep.subr.mxu0 0.0
    %1587 = vmatpush1.msra.mxu0 0.0
    %1588 = vmatprep.subr.mxu0 0.0
    %1589 = vmatpush1.msra.mxu0 0.0
    %1590 = vmatprep.subr.mxu0 0.0
    %1591 = vmatpush1.msra.mxu0 0.0
    %1592 = vmatprep.mubr.f32.mxu0 0.0
    %1593 = vmatmul.mubr.f32.gmra.mrb[0].mxu0 %v1383
    %v1594 = vpop.f32.mrb[0].mxu0
    %v1595 = vadd.f32 0.0, %v1594
    %v1596 = vpop.f32.mrb[0].mxu0
    %v1597 = vadd.f32 0.0, %v1596
    %1598 = vdwg.mxu0
    %v1599 = vadd.f32 %v1389, %v1524
    %v1600 = vadd.f32 %v1390, %v1526
    %v1601 = vadd.f32 %v1391, %v1595
    %v1602 = vadd.f32 %v1392, %v1597
    %v1603 = vxor.u32 %v1599, 2147483648
    %v1604 = vxor.u32 %v1600, 2147483648
    %v1605 = vxor.u32 %v1601, 2147483648
    %v1606 = vxor.u32 %v1602, 2147483648
    %v1607 = vmul.f32 %v1603, 1.442695
    %v1608 = vpow.pop %v1607
    %v1609 = vmul.f32 %v1604, 1.442695
    %v1610 = vpow.pop %v1609
    %v1611 = vmul.f32 %v1605, 1.442695
    %v1612 = vpow.pop %v1611
    %v1613 = vmul.f32 %v1606, 1.442695
    %v1614 = vpow.pop %v1613
    %v1615 = vadd.f32 %v1608, 1.0
    %v1616 = vadd.f32 %v1610, 1.0
    %v1617 = vadd.f32 %v1612, 1.0
    %v1618 = vadd.f32 %v1614, 1.0
    %v1619 = vrcp.pop %v1615
    %v1620 = vmul.f32 1.0, %v1619
    %v1621 = vrcp.pop %v1616
    %v1622 = vmul.f32 1.0, %v1621
    %v1623 = vrcp.pop %v1617
    %v1624 = vmul.f32 1.0, %v1623
    %v1625 = vrcp.pop %v1618
    %v1626 = vmul.f32 1.0, %v1625
    %v1627 = vmul.f32 %v1624, 2.0
    %v1628 = vsub.f32 %v1627, 1.0
    %v1629 = vmul.f32 %v1622, %v1381
    %v1630 = vmul.f32 %v1620, %v1628
    %v1631 = vadd.f32 %v1629, %v1630
    %v1632 = vtanh.pop %v1631
    %v1633 = vmul.f32 %v1626, %v1632
    %s1634 = scalar_lea.vmem [#allocation10], 32
    %1635 = vst [vmem:[%s1634] sm:$0xff] %v1633
    %s1636 = smul.u32 5, 4
    %s1637 = smul.addr %s1636, 8
    %s1638 = scalar_lea.vmem [#allocation2], %s1637
    %v1639 = vld [vmem:[%s1638] sm:$0xff]
    %v1640 = vld [vmem:[%s1638 + $0x8] sm:$0xff]
    %v1641 = vld [vmem:[%s1638 + $0x10] sm:$0xff]
    %v1642 = vld [vmem:[%s1638 + $0x18] sm:$0xff]
    %v1643 = vld [vmem:[#allocation8] sm:$0xff]
    %v1644 = vld [vmem:[#allocation8 + $0x8] sm:$0xff]
    %v1645 = vld [vmem:[#allocation8 + $0x10] sm:$0xff]
    %v1646 = vld [vmem:[#allocation8 + $0x18] sm:$0xff]
    %v1647 = vld [vmem:[#allocation8 + $0x20] sm:$0xff]
    %v1648 = vld [vmem:[#allocation8 + $0x28] sm:$0xff]
    %v1649 = vld [vmem:[#allocation8 + $0x30] sm:$0xff]
    %v1650 = vld [vmem:[#allocation8 + $0x38] sm:$0xff]
    %v1651 = vld [vmem:[#allocation8 + $0x40] sm:$0xff]
    %v1652 = vld [vmem:[#allocation8 + $0x48] sm:$0xff]
    %v1653 = vld [vmem:[#allocation8 + $0x50] sm:$0xff]
    %v1654 = vld [vmem:[#allocation8 + $0x58] sm:$0xff]
    %v1655 = vld [vmem:[#allocation8 + $0x60] sm:$0xff]
    %v1656 = vld [vmem:[#allocation8 + $0x68] sm:$0xff]
    %v1657 = vld [vmem:[#allocation8 + $0x70] sm:$0xff]
    %v1658 = vld [vmem:[#allocation8 + $0x78] sm:$0xff]
    %v1659 = vld [vmem:[#allocation8 + $0x80] sm:$0xff]
    %v1660 = vld [vmem:[#allocation8 + $0x88] sm:$0xff]
    %v1661 = vld [vmem:[#allocation8 + $0x90] sm:$0xff]
    %v1662 = vld [vmem:[#allocation8 + $0x98] sm:$0xff]
    %v1663 = vld [vmem:[#allocation8 + $0xa0] sm:$0xff]
    %v1664 = vld [vmem:[#allocation8 + $0xa8] sm:$0xff]
    %v1665 = vld [vmem:[#allocation8 + $0xb0] sm:$0xff]
    %v1666 = vld [vmem:[#allocation8 + $0xb8] sm:$0xff]
    %v1667 = vld [vmem:[#allocation8 + $0xc0] sm:$0xff]
    %v1668 = vld [vmem:[#allocation8 + $0xc8] sm:$0xff]
    %v1669 = vld [vmem:[#allocation8 + $0xd0] sm:$0xff]
    %v1670 = vld [vmem:[#allocation8 + $0xd8] sm:$0xff]
    %v1671 = vld [vmem:[#allocation8 + $0xe0] sm:$0xff]
    %v1672 = vld [vmem:[#allocation8 + $0xe8] sm:$0xff]
    %v1673 = vld [vmem:[#allocation8 + $0xf0] sm:$0xff]
    %v1674 = vld [vmem:[#allocation8 + $0xf8] sm:$0xff]
    %v1675 = vld [vmem:[#allocation8 + $0x100] sm:$0xff]
    %v1676 = vld [vmem:[#allocation8 + $0x108] sm:$0xff]
    %v1677 = vld [vmem:[#allocation8 + $0x110] sm:$0xff]
    %v1678 = vld [vmem:[#allocation8 + $0x118] sm:$0xff]
    %v1679 = vld [vmem:[#allocation8 + $0x120] sm:$0xff]
    %v1680 = vld [vmem:[#allocation8 + $0x128] sm:$0xff]
    %v1681 = vld [vmem:[#allocation8 + $0x130] sm:$0xff]
    %v1682 = vld [vmem:[#allocation8 + $0x138] sm:$0xff]
    %v1683 = vld [vmem:[#allocation8 + $0x140] sm:$0xff]
    %v1684 = vld [vmem:[#allocation8 + $0x148] sm:$0xff]
    %v1685 = vld [vmem:[#allocation8 + $0x150] sm:$0xff]
    %v1686 = vld [vmem:[#allocation8 + $0x158] sm:$0xff]
    %v1687 = vld [vmem:[#allocation8 + $0x160] sm:$0xff]
    %v1688 = vld [vmem:[#allocation8 + $0x168] sm:$0xff]
    %v1689 = vld [vmem:[#allocation8 + $0x170] sm:$0xff]
    %v1690 = vld [vmem:[#allocation8 + $0x178] sm:$0xff]
    %v1691 = vld [vmem:[#allocation8 + $0x180] sm:$0xff]
    %v1692 = vld [vmem:[#allocation8 + $0x188] sm:$0xff]
    %v1693 = vld [vmem:[#allocation8 + $0x190] sm:$0xff]
    %v1694 = vld [vmem:[#allocation8 + $0x198] sm:$0xff]
    %v1695 = vld [vmem:[#allocation8 + $0x1a0] sm:$0xff]
    %v1696 = vld [vmem:[#allocation8 + $0x1a8] sm:$0xff]
    %v1697 = vld [vmem:[#allocation8 + $0x1b0] sm:$0xff]
    %v1698 = vld [vmem:[#allocation8 + $0x1b8] sm:$0xff]
    %v1699 = vld [vmem:[#allocation8 + $0x1c0] sm:$0xff]
    %v1700 = vld [vmem:[#allocation8 + $0x1c8] sm:$0xff]
    %v1701 = vld [vmem:[#allocation8 + $0x1d0] sm:$0xff]
    %v1702 = vld [vmem:[#allocation8 + $0x1d8] sm:$0xff]
    %v1703 = vld [vmem:[#allocation8 + $0x1e0] sm:$0xff]
    %v1704 = vld [vmem:[#allocation8 + $0x1e8] sm:$0xff]
    %v1705 = vld [vmem:[#allocation8 + $0x1f0] sm:$0xff]
    %v1706 = vld [vmem:[#allocation8 + $0x1f8] sm:$0xff]
    %1707 = vmatprep.subr.mxu0 %v1644
    %1708 = vmatpush1.msra.mxu0 %v1643
    %1709 = vmatprep.subr.mxu0 %v1648
    %1710 = vmatpush1.msra.mxu0 %v1647
    %1711 = vmatprep.subr.mxu0 %v1652
    %1712 = vmatpush1.msra.mxu0 %v1651
    %1713 = vmatprep.subr.mxu0 %v1656
    %1714 = vmatpush1.msra.mxu0 %v1655
    %1715 = vmatprep.subr.mxu0 %v1660
    %1716 = vmatpush1.msra.mxu0 %v1659
    %1717 = vmatprep.subr.mxu0 %v1664
    %1718 = vmatpush1.msra.mxu0 %v1663
    %1719 = vmatprep.subr.mxu0 %v1668
    %1720 = vmatpush1.msra.mxu0 %v1667
    %1721 = vmatprep.subr.mxu0 %v1672
    %1722 = vmatpush1.msra.mxu0 %v1671
    %1723 = vmatprep.subr.mxu0 %v1676
    %1724 = vmatpush1.msra.mxu0 %v1675
    %1725 = vmatprep.subr.mxu0 %v1680
    %1726 = vmatpush1.msra.mxu0 %v1679
    %1727 = vmatprep.subr.mxu0 %v1684
    %1728 = vmatpush1.msra.mxu0 %v1683
    %1729 = vmatprep.subr.mxu0 %v1688
    %1730 = vmatpush1.msra.mxu0 %v1687
    %1731 = vmatprep.subr.mxu0 %v1692
    %1732 = vmatpush1.msra.mxu0 %v1691
    %1733 = vmatprep.subr.mxu0 %v1696
    %1734 = vmatpush1.msra.mxu0 %v1695
    %1735 = vmatprep.subr.mxu0 %v1700
    %1736 = vmatpush1.msra.mxu0 %v1699
    %1737 = vmatprep.subr.mxu0 %v1704
    %1738 = vmatpush1.msra.mxu0 %v1703
    %1739 = vmatprep.subr.mxu0 0.0
    %1740 = vmatpush1.msra.mxu0 0.0
    %1741 = vmatprep.subr.mxu0 0.0
    %1742 = vmatpush1.msra.mxu0 0.0
    %1743 = vmatprep.subr.mxu0 0.0
    %1744 = vmatpush1.msra.mxu0 0.0
    %1745 = vmatprep.subr.mxu0 0.0
    %1746 = vmatpush1.msra.mxu0 0.0
    %1747 = vmatprep.subr.mxu0 0.0
    %1748 = vmatpush1.msra.mxu0 0.0
    %1749 = vmatprep.subr.mxu0 0.0
    %1750 = vmatpush1.msra.mxu0 0.0
    %1751 = vmatprep.subr.mxu0 0.0
    %1752 = vmatpush1.msra.mxu0 0.0
    %1753 = vmatprep.subr.mxu0 0.0
    %1754 = vmatpush1.msra.mxu0 0.0
    %1755 = vmatprep.subr.mxu0 0.0
    %1756 = vmatpush1.msra.mxu0 0.0
    %1757 = vmatprep.subr.mxu0 0.0
    %1758 = vmatpush1.msra.mxu0 0.0
    %1759 = vmatprep.subr.mxu0 0.0
    %1760 = vmatpush1.msra.mxu0 0.0
    %1761 = vmatprep.subr.mxu0 0.0
    %1762 = vmatpush1.msra.mxu0 0.0
    %1763 = vmatprep.subr.mxu0 0.0
    %1764 = vmatpush1.msra.mxu0 0.0
    %1765 = vmatprep.subr.mxu0 0.0
    %1766 = vmatpush1.msra.mxu0 0.0
    %1767 = vmatprep.subr.mxu0 0.0
    %1768 = vmatpush1.msra.mxu0 0.0
    %1769 = vmatprep.subr.mxu0 0.0
    %1770 = vmatpush1.msra.mxu0 0.0
    %1771 = vmatprep.mubr.f32.mxu0 0.0
    %1772 = vmatmul.mubr.f32.gmra.mrb[0].mxu0 %v1633
    %v1773 = vpop.f32.mrb[0].mxu0
    %v1774 = vadd.f32 0.0, %v1773
    %v1775 = vpop.f32.mrb[0].mxu0
    %v1776 = vadd.f32 0.0, %v1775
    %1777 = vdwg.mxu0
    %1778 = vmatprep.subr.mxu0 %v1646
    %1779 = vmatpush1.msra.mxu0 %v1645
    %1780 = vmatprep.subr.mxu0 %v1650
    %1781 = vmatpush1.msra.mxu0 %v1649
    %1782 = vmatprep.subr.mxu0 %v1654
    %1783 = vmatpush1.msra.mxu0 %v1653
    %1784 = vmatprep.subr.mxu0 %v1658
    %1785 = vmatpush1.msra.mxu0 %v1657
    %1786 = vmatprep.subr.mxu0 %v1662
    %1787 = vmatpush1.msra.mxu0 %v1661
    %1788 = vmatprep.subr.mxu0 %v1666
    %1789 = vmatpush1.msra.mxu0 %v1665
    %1790 = vmatprep.subr.mxu0 %v1670
    %1791 = vmatpush1.msra.mxu0 %v1669
    %1792 = vmatprep.subr.mxu0 %v1674
    %1793 = vmatpush1.msra.mxu0 %v1673
    %1794 = vmatprep.subr.mxu0 %v1678
    %1795 = vmatpush1.msra.mxu0 %v1677
    %1796 = vmatprep.subr.mxu0 %v1682
    %1797 = vmatpush1.msra.mxu0 %v1681
    %1798 = vmatprep.subr.mxu0 %v1686
    %1799 = vmatpush1.msra.mxu0 %v1685
    %1800 = vmatprep.subr.mxu0 %v1690
    %1801 = vmatpush1.msra.mxu0 %v1689
    %1802 = vmatprep.subr.mxu0 %v1694
    %1803 = vmatpush1.msra.mxu0 %v1693
    %1804 = vmatprep.subr.mxu0 %v1698
    %1805 = vmatpush1.msra.mxu0 %v1697
    %1806 = vmatprep.subr.mxu0 %v1702
    %1807 = vmatpush1.msra.mxu0 %v1701
    %1808 = vmatprep.subr.mxu0 %v1706
    %1809 = vmatpush1.msra.mxu0 %v1705
    %1810 = vmatprep.subr.mxu0 0.0
    %1811 = vmatpush1.msra.mxu0 0.0
    %1812 = vmatprep.subr.mxu0 0.0
    %1813 = vmatpush1.msra.mxu0 0.0
    %1814 = vmatprep.subr.mxu0 0.0
    %1815 = vmatpush1.msra.mxu0 0.0
    %1816 = vmatprep.subr.mxu0 0.0
    %1817 = vmatpush1.msra.mxu0 0.0
    %1818 = vmatprep.subr.mxu0 0.0
    %1819 = vmatpush1.msra.mxu0 0.0
    %1820 = vmatprep.subr.mxu0 0.0
    %1821 = vmatpush1.msra.mxu0 0.0
    %1822 = vmatprep.subr.mxu0 0.0
    %1823 = vmatpush1.msra.mxu0 0.0
    %1824 = vmatprep.subr.mxu0 0.0
    %1825 = vmatpush1.msra.mxu0 0.0
    %1826 = vmatprep.subr.mxu0 0.0
    %1827 = vmatpush1.msra.mxu0 0.0
    %1828 = vmatprep.subr.mxu0 0.0
    %1829 = vmatpush1.msra.mxu0 0.0
    %1830 = vmatprep.subr.mxu0 0.0
    %1831 = vmatpush1.msra.mxu0 0.0
    %1832 = vmatprep.subr.mxu0 0.0
    %1833 = vmatpush1.msra.mxu0 0.0
    %1834 = vmatprep.subr.mxu0 0.0
    %1835 = vmatpush1.msra.mxu0 0.0
    %1836 = vmatprep.subr.mxu0 0.0
    %1837 = vmatpush1.msra.mxu0 0.0
    %1838 = vmatprep.subr.mxu0 0.0
    %1839 = vmatpush1.msra.mxu0 0.0
    %1840 = vmatprep.subr.mxu0 0.0
    %1841 = vmatpush1.msra.mxu0 0.0
    %1842 = vmatprep.mubr.f32.mxu0 0.0
    %1843 = vmatmul.mubr.f32.gmra.mrb[0].mxu0 %v1633
    %v1844 = vpop.f32.mrb[0].mxu0
    %v1845 = vadd.f32 0.0, %v1844
    %v1846 = vpop.f32.mrb[0].mxu0
    %v1847 = vadd.f32 0.0, %v1846
    %1848 = vdwg.mxu0
    %v1849 = vadd.f32 %v1639, %v1774
    %v1850 = vadd.f32 %v1640, %v1776
    %v1851 = vadd.f32 %v1641, %v1845
    %v1852 = vadd.f32 %v1642, %v1847
    %v1853 = vxor.u32 %v1849, 2147483648
    %v1854 = vxor.u32 %v1850, 2147483648
    %v1855 = vxor.u32 %v1851, 2147483648
    %v1856 = vxor.u32 %v1852, 2147483648
    %v1857 = vmul.f32 %v1853, 1.442695
    %v1858 = vpow.pop %v1857
    %v1859 = vmul.f32 %v1854, 1.442695
    %v1860 = vpow.pop %v1859
    %v1861 = vmul.f32 %v1855, 1.442695
    %v1862 = vpow.pop %v1861
    %v1863 = vmul.f32 %v1856, 1.442695
    %v1864 = vpow.pop %v1863
    %v1865 = vadd.f32 %v1858, 1.0
    %v1866 = vadd.f32 %v1860, 1.0
    %v1867 = vadd.f32 %v1862, 1.0
    %v1868 = vadd.f32 %v1864, 1.0
    %v1869 = vrcp.pop %v1865
    %v1870 = vmul.f32 1.0, %v1869
    %v1871 = vrcp.pop %v1866
    %v1872 = vmul.f32 1.0, %v1871
    %v1873 = vrcp.pop %v1867
    %v1874 = vmul.f32 1.0, %v1873
    %v1875 = vrcp.pop %v1868
    %v1876 = vmul.f32 1.0, %v1875
    %v1877 = vmul.f32 %v1874, 2.0
    %v1878 = vsub.f32 %v1877, 1.0
    %v1879 = vmul.f32 %v1872, %v1631
    %v1880 = vmul.f32 %v1870, %v1878
    %v1881 = vadd.f32 %v1879, %v1880
    %v1882 = vtanh.pop %v1881
    %v1883 = vmul.f32 %v1876, %v1882
    %s1884 = scalar_lea.vmem [#allocation10], 40
    %1885 = vst [vmem:[%s1884] sm:$0xff] %v1883
    %s1886 = smul.u32 6, 4
    %s1887 = smul.addr %s1886, 8
    %s1888 = scalar_lea.vmem [#allocation2], %s1887
    %v1889 = vld [vmem:[%s1888] sm:$0xff]
    %v1890 = vld [vmem:[%s1888 + $0x8] sm:$0xff]
    %v1891 = vld [vmem:[%s1888 + $0x10] sm:$0xff]
    %v1892 = vld [vmem:[%s1888 + $0x18] sm:$0xff]
    %v1893 = vld [vmem:[#allocation8] sm:$0xff]
    %v1894 = vld [vmem:[#allocation8 + $0x8] sm:$0xff]
    %v1895 = vld [vmem:[#allocation8 + $0x10] sm:$0xff]
    %v1896 = vld [vmem:[#allocation8 + $0x18] sm:$0xff]
    %v1897 = vld [vmem:[#allocation8 + $0x20] sm:$0xff]
    %v1898 = vld [vmem:[#allocation8 + $0x28] sm:$0xff]
    %v1899 = vld [vmem:[#allocation8 + $0x30] sm:$0xff]
    %v1900 = vld [vmem:[#allocation8 + $0x38] sm:$0xff]
    %v1901 = vld [vmem:[#allocation8 + $0x40] sm:$0xff]
    %v1902 = vld [vmem:[#allocation8 + $0x48] sm:$0xff]
    %v1903 = vld [vmem:[#allocation8 + $0x50] sm:$0xff]
    %v1904 = vld [vmem:[#allocation8 + $0x58] sm:$0xff]
    %v1905 = vld [vmem:[#allocation8 + $0x60] sm:$0xff]
    %v1906 = vld [vmem:[#allocation8 + $0x68] sm:$0xff]
    %v1907 = vld [vmem:[#allocation8 + $0x70] sm:$0xff]
    %v1908 = vld [vmem:[#allocation8 + $0x78] sm:$0xff]
    %v1909 = vld [vmem:[#allocation8 + $0x80] sm:$0xff]
    %v1910 = vld [vmem:[#allocation8 + $0x88] sm:$0xff]
    %v1911 = vld [vmem:[#allocation8 + $0x90] sm:$0xff]
    %v1912 = vld [vmem:[#allocation8 + $0x98] sm:$0xff]
    %v1913 = vld [vmem:[#allocation8 + $0xa0] sm:$0xff]
    %v1914 = vld [vmem:[#allocation8 + $0xa8] sm:$0xff]
    %v1915 = vld [vmem:[#allocation8 + $0xb0] sm:$0xff]
    %v1916 = vld [vmem:[#allocation8 + $0xb8] sm:$0xff]
    %v1917 = vld [vmem:[#allocation8 + $0xc0] sm:$0xff]
    %v1918 = vld [vmem:[#allocation8 + $0xc8] sm:$0xff]
    %v1919 = vld [vmem:[#allocation8 + $0xd0] sm:$0xff]
    %v1920 = vld [vmem:[#allocation8 + $0xd8] sm:$0xff]
    %v1921 = vld [vmem:[#allocation8 + $0xe0] sm:$0xff]
    %v1922 = vld [vmem:[#allocation8 + $0xe8] sm:$0xff]
    %v1923 = vld [vmem:[#allocation8 + $0xf0] sm:$0xff]
    %v1924 = vld [vmem:[#allocation8 + $0xf8] sm:$0xff]
    %v1925 = vld [vmem:[#allocation8 + $0x100] sm:$0xff]
    %v1926 = vld [vmem:[#allocation8 + $0x108] sm:$0xff]
    %v1927 = vld [vmem:[#allocation8 + $0x110] sm:$0xff]
    %v1928 = vld [vmem:[#allocation8 + $0x118] sm:$0xff]
    %v1929 = vld [vmem:[#allocation8 + $0x120] sm:$0xff]
    %v1930 = vld [vmem:[#allocation8 + $0x128] sm:$0xff]
    %v1931 = vld [vmem:[#allocation8 + $0x130] sm:$0xff]
    %v1932 = vld [vmem:[#allocation8 + $0x138] sm:$0xff]
    %v1933 = vld [vmem:[#allocation8 + $0x140] sm:$0xff]
    %v1934 = vld [vmem:[#allocation8 + $0x148] sm:$0xff]
    %v1935 = vld [vmem:[#allocation8 + $0x150] sm:$0xff]
    %v1936 = vld [vmem:[#allocation8 + $0x158] sm:$0xff]
    %v1937 = vld [vmem:[#allocation8 + $0x160] sm:$0xff]
    %v1938 = vld [vmem:[#allocation8 + $0x168] sm:$0xff]
    %v1939 = vld [vmem:[#allocation8 + $0x170] sm:$0xff]
    %v1940 = vld [vmem:[#allocation8 + $0x178] sm:$0xff]
    %v1941 = vld [vmem:[#allocation8 + $0x180] sm:$0xff]
    %v1942 = vld [vmem:[#allocation8 + $0x188] sm:$0xff]
    %v1943 = vld [vmem:[#allocation8 + $0x190] sm:$0xff]
    %v1944 = vld [vmem:[#allocation8 + $0x198] sm:$0xff]
    %v1945 = vld [vmem:[#allocation8 + $0x1a0] sm:$0xff]
    %v1946 = vld [vmem:[#allocation8 + $0x1a8] sm:$0xff]
    %v1947 = vld [vmem:[#allocation8 + $0x1b0] sm:$0xff]
    %v1948 = vld [vmem:[#allocation8 + $0x1b8] sm:$0xff]
    %v1949 = vld [vmem:[#allocation8 + $0x1c0] sm:$0xff]
    %v1950 = vld [vmem:[#allocation8 + $0x1c8] sm:$0xff]
    %v1951 = vld [vmem:[#allocation8 + $0x1d0] sm:$0xff]
    %v1952 = vld [vmem:[#allocation8 + $0x1d8] sm:$0xff]
    %v1953 = vld [vmem:[#allocation8 + $0x1e0] sm:$0xff]
    %v1954 = vld [vmem:[#allocation8 + $0x1e8] sm:$0xff]
    %v1955 = vld [vmem:[#allocation8 + $0x1f0] sm:$0xff]
    %v1956 = vld [vmem:[#allocation8 + $0x1f8] sm:$0xff]
    %1957 = vmatprep.subr.mxu0 %v1894
    %1958 = vmatpush1.msra.mxu0 %v1893
    %1959 = vmatprep.subr.mxu0 %v1898
    %1960 = vmatpush1.msra.mxu0 %v1897
    %1961 = vmatprep.subr.mxu0 %v1902
    %1962 = vmatpush1.msra.mxu0 %v1901
    %1963 = vmatprep.subr.mxu0 %v1906
    %1964 = vmatpush1.msra.mxu0 %v1905
    %1965 = vmatprep.subr.mxu0 %v1910
    %1966 = vmatpush1.msra.mxu0 %v1909
    %1967 = vmatprep.subr.mxu0 %v1914
    %1968 = vmatpush1.msra.mxu0 %v1913
    %1969 = vmatprep.subr.mxu0 %v1918
    %1970 = vmatpush1.msra.mxu0 %v1917
    %1971 = vmatprep.subr.mxu0 %v1922
    %1972 = vmatpush1.msra.mxu0 %v1921
    %1973 = vmatprep.subr.mxu0 %v1926
    %1974 = vmatpush1.msra.mxu0 %v1925
    %1975 = vmatprep.subr.mxu0 %v1930
    %1976 = vmatpush1.msra.mxu0 %v1929
    %1977 = vmatprep.subr.mxu0 %v1934
    %1978 = vmatpush1.msra.mxu0 %v1933
    %1979 = vmatprep.subr.mxu0 %v1938
    %1980 = vmatpush1.msra.mxu0 %v1937
    %1981 = vmatprep.subr.mxu0 %v1942
    %1982 = vmatpush1.msra.mxu0 %v1941
    %1983 = vmatprep.subr.mxu0 %v1946
    %1984 = vmatpush1.msra.mxu0 %v1945
    %1985 = vmatprep.subr.mxu0 %v1950
    %1986 = vmatpush1.msra.mxu0 %v1949
    %1987 = vmatprep.subr.mxu0 %v1954
    %1988 = vmatpush1.msra.mxu0 %v1953
    %1989 = vmatprep.subr.mxu0 0.0
    %1990 = vmatpush1.msra.mxu0 0.0
    %1991 = vmatprep.subr.mxu0 0.0
    %1992 = vmatpush1.msra.mxu0 0.0
    %1993 = vmatprep.subr.mxu0 0.0
    %1994 = vmatpush1.msra.mxu0 0.0
    %1995 = vmatprep.subr.mxu0 0.0
    %1996 = vmatpush1.msra.mxu0 0.0
    %1997 = vmatprep.subr.mxu0 0.0
    %1998 = vmatpush1.msra.mxu0 0.0
    %1999 = vmatprep.subr.mxu0 0.0
    %2000 = vmatpush1.msra.mxu0 0.0
    %2001 = vmatprep.subr.mxu0 0.0
    %2002 = vmatpush1.msra.mxu0 0.0
    %2003 = vmatprep.subr.mxu0 0.0
    %2004 = vmatpush1.msra.mxu0 0.0
    %2005 = vmatprep.subr.mxu0 0.0
    %2006 = vmatpush1.msra.mxu0 0.0
    %2007 = vmatprep.subr.mxu0 0.0
    %2008 = vmatpush1.msra.mxu0 0.0
    %2009 = vmatprep.subr.mxu0 0.0
    %2010 = vmatpush1.msra.mxu0 0.0
    %2011 = vmatprep.subr.mxu0 0.0
    %2012 = vmatpush1.msra.mxu0 0.0
    %2013 = vmatprep.subr.mxu0 0.0
    %2014 = vmatpush1.msra.mxu0 0.0
    %2015 = vmatprep.subr.mxu0 0.0
    %2016 = vmatpush1.msra.mxu0 0.0
    %2017 = vmatprep.subr.mxu0 0.0
    %2018 = vmatpush1.msra.mxu0 0.0
    %2019 = vmatprep.subr.mxu0 0.0
    %2020 = vmatpush1.msra.mxu0 0.0
    %2021 = vmatprep.mubr.f32.mxu0 0.0
    %2022 = vmatmul.mubr.f32.gmra.mrb[0].mxu0 %v1883
    %v2023 = vpop.f32.mrb[0].mxu0
    %v2024 = vadd.f32 0.0, %v2023
    %v2025 = vpop.f32.mrb[0].mxu0
    %v2026 = vadd.f32 0.0, %v2025
    %2027 = vdwg.mxu0
    %2028 = vmatprep.subr.mxu0 %v1896
    %2029 = vmatpush1.msra.mxu0 %v1895
    %2030 = vmatprep.subr.mxu0 %v1900
    %2031 = vmatpush1.msra.mxu0 %v1899
    %2032 = vmatprep.subr.mxu0 %v1904
    %2033 = vmatpush1.msra.mxu0 %v1903
    %2034 = vmatprep.subr.mxu0 %v1908
    %2035 = vmatpush1.msra.mxu0 %v1907
    %2036 = vmatprep.subr.mxu0 %v1912
    %2037 = vmatpush1.msra.mxu0 %v1911
    %2038 = vmatprep.subr.mxu0 %v1916
    %2039 = vmatpush1.msra.mxu0 %v1915
    %2040 = vmatprep.subr.mxu0 %v1920
    %2041 = vmatpush1.msra.mxu0 %v1919
    %2042 = vmatprep.subr.mxu0 %v1924
    %2043 = vmatpush1.msra.mxu0 %v1923
    %2044 = vmatprep.subr.mxu0 %v1928
    %2045 = vmatpush1.msra.mxu0 %v1927
    %2046 = vmatprep.subr.mxu0 %v1932
    %2047 = vmatpush1.msra.mxu0 %v1931
    %2048 = vmatprep.subr.mxu0 %v1936
    %2049 = vmatpush1.msra.mxu0 %v1935
    %2050 = vmatprep.subr.mxu0 %v1940
    %2051 = vmatpush1.msra.mxu0 %v1939
    %2052 = vmatprep.subr.mxu0 %v1944
    %2053 = vmatpush1.msra.mxu0 %v1943
    %2054 = vmatprep.subr.mxu0 %v1948
    %2055 = vmatpush1.msra.mxu0 %v1947
    %2056 = vmatprep.subr.mxu0 %v1952
    %2057 = vmatpush1.msra.mxu0 %v1951
    %2058 = vmatprep.subr.mxu0 %v1956
    %2059 = vmatpush1.msra.mxu0 %v1955
    %2060 = vmatprep.subr.mxu0 0.0
    %2061 = vmatpush1.msra.mxu0 0.0
    %2062 = vmatprep.subr.mxu0 0.0
    %2063 = vmatpush1.msra.mxu0 0.0
    %2064 = vmatprep.subr.mxu0 0.0
    %2065 = vmatpush1.msra.mxu0 0.0
    %2066 = vmatprep.subr.mxu0 0.0
    %2067 = vmatpush1.msra.mxu0 0.0
    %2068 = vmatprep.subr.mxu0 0.0
    %2069 = vmatpush1.msra.mxu0 0.0
    %2070 = vmatprep.subr.mxu0 0.0
    %2071 = vmatpush1.msra.mxu0 0.0
    %2072 = vmatprep.subr.mxu0 0.0
    %2073 = vmatpush1.msra.mxu0 0.0
    %2074 = vmatprep.subr.mxu0 0.0
    %2075 = vmatpush1.msra.mxu0 0.0
    %2076 = vmatprep.subr.mxu0 0.0
    %2077 = vmatpush1.msra.mxu0 0.0
    %2078 = vmatprep.subr.mxu0 0.0
    %2079 = vmatpush1.msra.mxu0 0.0
    %2080 = vmatprep.subr.mxu0 0.0
    %2081 = vmatpush1.msra.mxu0 0.0
    %2082 = vmatprep.subr.mxu0 0.0
    %2083 = vmatpush1.msra.mxu0 0.0
    %2084 = vmatprep.subr.mxu0 0.0
    %2085 = vmatpush1.msra.mxu0 0.0
    %2086 = vmatprep.subr.mxu0 0.0
    %2087 = vmatpush1.msra.mxu0 0.0
    %2088 = vmatprep.subr.mxu0 0.0
    %2089 = vmatpush1.msra.mxu0 0.0
    %2090 = vmatprep.subr.mxu0 0.0
    %2091 = vmatpush1.msra.mxu0 0.0
    %2092 = vmatprep.mubr.f32.mxu0 0.0
    %2093 = vmatmul.mubr.f32.gmra.mrb[0].mxu0 %v1883
    %v2094 = vpop.f32.mrb[0].mxu0
    %v2095 = vadd.f32 0.0, %v2094
    %v2096 = vpop.f32.mrb[0].mxu0
    %v2097 = vadd.f32 0.0, %v2096
    %2098 = vdwg.mxu0
    %v2099 = vadd.f32 %v1889, %v2024
    %v2100 = vadd.f32 %v1890, %v2026
    %v2101 = vadd.f32 %v1891, %v2095
    %v2102 = vadd.f32 %v1892, %v2097
    %v2103 = vxor.u32 %v2099, 2147483648
    %v2104 = vxor.u32 %v2100, 2147483648
    %v2105 = vxor.u32 %v2101, 2147483648
    %v2106 = vxor.u32 %v2102, 2147483648
    %v2107 = vmul.f32 %v2103, 1.442695
    %v2108 = vpow.pop %v2107
    %v2109 = vmul.f32 %v2104, 1.442695
    %v2110 = vpow.pop %v2109
    %v2111 = vmul.f32 %v2105, 1.442695
    %v2112 = vpow.pop %v2111
    %v2113 = vmul.f32 %v2106, 1.442695
    %v2114 = vpow.pop %v2113
    %v2115 = vadd.f32 %v2108, 1.0
    %v2116 = vadd.f32 %v2110, 1.0
    %v2117 = vadd.f32 %v2112, 1.0
    %v2118 = vadd.f32 %v2114, 1.0
    %v2119 = vrcp.pop %v2115
    %v2120 = vmul.f32 1.0, %v2119
    %v2121 = vrcp.pop %v2116
    %v2122 = vmul.f32 1.0, %v2121
    %v2123 = vrcp.pop %v2117
    %v2124 = vmul.f32 1.0, %v2123
    %v2125 = vrcp.pop %v2118
    %v2126 = vmul.f32 1.0, %v2125
    %v2127 = vmul.f32 %v2124, 2.0
    %v2128 = vsub.f32 %v2127, 1.0
    %v2129 = vmul.f32 %v2122, %v1881
    %v2130 = vmul.f32 %v2120, %v2128
    %v2131 = vadd.f32 %v2129, %v2130
    %v2132 = vtanh.pop %v2131
    %v2133 = vmul.f32 %v2126, %v2132
    %s2134 = scalar_lea.vmem [#allocation10], 48
    %2135 = vst [vmem:[%s2134] sm:$0xff] %v2133
    %s2136 = smul.u32 7, 4
    %s2137 = smul.addr %s2136, 8
    %s2138 = scalar_lea.vmem [#allocation2], %s2137
    %v2139 = vld [vmem:[%s2138] sm:$0xff]
    %v2140 = vld [vmem:[%s2138 + $0x8] sm:$0xff]
    %v2141 = vld [vmem:[%s2138 + $0x10] sm:$0xff]
    %v2142 = vld [vmem:[%s2138 + $0x18] sm:$0xff]
    %v2143 = vld [vmem:[#allocation8] sm:$0xff]
    %v2144 = vld [vmem:[#allocation8 + $0x8] sm:$0xff]
    %v2145 = vld [vmem:[#allocation8 + $0x10] sm:$0xff]
    %v2146 = vld [vmem:[#allocation8 + $0x18] sm:$0xff]
    %v2147 = vld [vmem:[#allocation8 + $0x20] sm:$0xff]
    %v2148 = vld [vmem:[#allocation8 + $0x28] sm:$0xff]
    %v2149 = vld [vmem:[#allocation8 + $0x30] sm:$0xff]
    %v2150 = vld [vmem:[#allocation8 + $0x38] sm:$0xff]
    %v2151 = vld [vmem:[#allocation8 + $0x40] sm:$0xff]
    %v2152 = vld [vmem:[#allocation8 + $0x48] sm:$0xff]
    %v2153 = vld [vmem:[#allocation8 + $0x50] sm:$0xff]
    %v2154 = vld [vmem:[#allocation8 + $0x58] sm:$0xff]
    %v2155 = vld [vmem:[#allocation8 + $0x60] sm:$0xff]
    %v2156 = vld [vmem:[#allocation8 + $0x68] sm:$0xff]
    %v2157 = vld [vmem:[#allocation8 + $0x70] sm:$0xff]
    %v2158 = vld [vmem:[#allocation8 + $0x78] sm:$0xff]
    %v2159 = vld [vmem:[#allocation8 + $0x80] sm:$0xff]
    %v2160 = vld [vmem:[#allocation8 + $0x88] sm:$0xff]
    %v2161 = vld [vmem:[#allocation8 + $0x90] sm:$0xff]
    %v2162 = vld [vmem:[#allocation8 + $0x98] sm:$0xff]
    %v2163 = vld [vmem:[#allocation8 + $0xa0] sm:$0xff]
    %v2164 = vld [vmem:[#allocation8 + $0xa8] sm:$0xff]
    %v2165 = vld [vmem:[#allocation8 + $0xb0] sm:$0xff]
    %v2166 = vld [vmem:[#allocation8 + $0xb8] sm:$0xff]
    %v2167 = vld [vmem:[#allocation8 + $0xc0] sm:$0xff]
    %v2168 = vld [vmem:[#allocation8 + $0xc8] sm:$0xff]
    %v2169 = vld [vmem:[#allocation8 + $0xd0] sm:$0xff]
    %v2170 = vld [vmem:[#allocation8 + $0xd8] sm:$0xff]
    %v2171 = vld [vmem:[#allocation8 + $0xe0] sm:$0xff]
    %v2172 = vld [vmem:[#allocation8 + $0xe8] sm:$0xff]
    %v2173 = vld [vmem:[#allocation8 + $0xf0] sm:$0xff]
    %v2174 = vld [vmem:[#allocation8 + $0xf8] sm:$0xff]
    %v2175 = vld [vmem:[#allocation8 + $0x100] sm:$0xff]
    %v2176 = vld [vmem:[#allocation8 + $0x108] sm:$0xff]
    %v2177 = vld [vmem:[#allocation8 + $0x110] sm:$0xff]
    %v2178 = vld [vmem:[#allocation8 + $0x118] sm:$0xff]
    %v2179 = vld [vmem:[#allocation8 + $0x120] sm:$0xff]
    %v2180 = vld [vmem:[#allocation8 + $0x128] sm:$0xff]
    %v2181 = vld [vmem:[#allocation8 + $0x130] sm:$0xff]
    %v2182 = vld [vmem:[#allocation8 + $0x138] sm:$0xff]
    %v2183 = vld [vmem:[#allocation8 + $0x140] sm:$0xff]
    %v2184 = vld [vmem:[#allocation8 + $0x148] sm:$0xff]
    %v2185 = vld [vmem:[#allocation8 + $0x150] sm:$0xff]
    %v2186 = vld [vmem:[#allocation8 + $0x158] sm:$0xff]
    %v2187 = vld [vmem:[#allocation8 + $0x160] sm:$0xff]
    %v2188 = vld [vmem:[#allocation8 + $0x168] sm:$0xff]
    %v2189 = vld [vmem:[#allocation8 + $0x170] sm:$0xff]
    %v2190 = vld [vmem:[#allocation8 + $0x178] sm:$0xff]
    %v2191 = vld [vmem:[#allocation8 + $0x180] sm:$0xff]
    %v2192 = vld [vmem:[#allocation8 + $0x188] sm:$0xff]
    %v2193 = vld [vmem:[#allocation8 + $0x190] sm:$0xff]
    %v2194 = vld [vmem:[#allocation8 + $0x198] sm:$0xff]
    %v2195 = vld [vmem:[#allocation8 + $0x1a0] sm:$0xff]
    %v2196 = vld [vmem:[#allocation8 + $0x1a8] sm:$0xff]
    %v2197 = vld [vmem:[#allocation8 + $0x1b0] sm:$0xff]
    %v2198 = vld [vmem:[#allocation8 + $0x1b8] sm:$0xff]
    %v2199 = vld [vmem:[#allocation8 + $0x1c0] sm:$0xff]
    %v2200 = vld [vmem:[#allocation8 + $0x1c8] sm:$0xff]
    %v2201 = vld [vmem:[#allocation8 + $0x1d0] sm:$0xff]
    %v2202 = vld [vmem:[#allocation8 + $0x1d8] sm:$0xff]
    %v2203 = vld [vmem:[#allocation8 + $0x1e0] sm:$0xff]
    %v2204 = vld [vmem:[#allocation8 + $0x1e8] sm:$0xff]
    %v2205 = vld [vmem:[#allocation8 + $0x1f0] sm:$0xff]
    %v2206 = vld [vmem:[#allocation8 + $0x1f8] sm:$0xff]
    %2207 = vmatprep.subr.mxu0 %v2144
    %2208 = vmatpush1.msra.mxu0 %v2143
    %2209 = vmatprep.subr.mxu0 %v2148
    %2210 = vmatpush1.msra.mxu0 %v2147
    %2211 = vmatprep.subr.mxu0 %v2152
    %2212 = vmatpush1.msra.mxu0 %v2151
    %2213 = vmatprep.subr.mxu0 %v2156
    %2214 = vmatpush1.msra.mxu0 %v2155
    %2215 = vmatprep.subr.mxu0 %v2160
    %2216 = vmatpush1.msra.mxu0 %v2159
    %2217 = vmatprep.subr.mxu0 %v2164
    %2218 = vmatpush1.msra.mxu0 %v2163
    %2219 = vmatprep.subr.mxu0 %v2168
    %2220 = vmatpush1.msra.mxu0 %v2167
    %2221 = vmatprep.subr.mxu0 %v2172
    %2222 = vmatpush1.msra.mxu0 %v2171
    %2223 = vmatprep.subr.mxu0 %v2176
    %2224 = vmatpush1.msra.mxu0 %v2175
    %2225 = vmatprep.subr.mxu0 %v2180
    %2226 = vmatpush1.msra.mxu0 %v2179
    %2227 = vmatprep.subr.mxu0 %v2184
    %2228 = vmatpush1.msra.mxu0 %v2183
    %2229 = vmatprep.subr.mxu0 %v2188
    %2230 = vmatpush1.msra.mxu0 %v2187
    %2231 = vmatprep.subr.mxu0 %v2192
    %2232 = vmatpush1.msra.mxu0 %v2191
    %2233 = vmatprep.subr.mxu0 %v2196
    %2234 = vmatpush1.msra.mxu0 %v2195
    %2235 = vmatprep.subr.mxu0 %v2200
    %2236 = vmatpush1.msra.mxu0 %v2199
    %2237 = vmatprep.subr.mxu0 %v2204
    %2238 = vmatpush1.msra.mxu0 %v2203
    %2239 = vmatprep.subr.mxu0 0.0
    %2240 = vmatpush1.msra.mxu0 0.0
    %2241 = vmatprep.subr.mxu0 0.0
    %2242 = vmatpush1.msra.mxu0 0.0
    %2243 = vmatprep.subr.mxu0 0.0
    %2244 = vmatpush1.msra.mxu0 0.0
    %2245 = vmatprep.subr.mxu0 0.0
    %2246 = vmatpush1.msra.mxu0 0.0
    %2247 = vmatprep.subr.mxu0 0.0
    %2248 = vmatpush1.msra.mxu0 0.0
    %2249 = vmatprep.subr.mxu0 0.0
    %2250 = vmatpush1.msra.mxu0 0.0
    %2251 = vmatprep.subr.mxu0 0.0
    %2252 = vmatpush1.msra.mxu0 0.0
    %2253 = vmatprep.subr.mxu0 0.0
    %2254 = vmatpush1.msra.mxu0 0.0
    %2255 = vmatprep.subr.mxu0 0.0
    %2256 = vmatpush1.msra.mxu0 0.0
    %2257 = vmatprep.subr.mxu0 0.0
    %2258 = vmatpush1.msra.mxu0 0.0
    %2259 = vmatprep.subr.mxu0 0.0
    %2260 = vmatpush1.msra.mxu0 0.0
    %2261 = vmatprep.subr.mxu0 0.0
    %2262 = vmatpush1.msra.mxu0 0.0
    %2263 = vmatprep.subr.mxu0 0.0
    %2264 = vmatpush1.msra.mxu0 0.0
    %2265 = vmatprep.subr.mxu0 0.0
    %2266 = vmatpush1.msra.mxu0 0.0
    %2267 = vmatprep.subr.mxu0 0.0
    %2268 = vmatpush1.msra.mxu0 0.0
    %2269 = vmatprep.subr.mxu0 0.0
    %2270 = vmatpush1.msra.mxu0 0.0
    %2271 = vmatprep.mubr.f32.mxu0 0.0
    %2272 = vmatmul.mubr.f32.gmra.mrb[0].mxu0 %v2133
    %v2273 = vpop.f32.mrb[0].mxu0
    %v2274 = vadd.f32 0.0, %v2273
    %v2275 = vpop.f32.mrb[0].mxu0
    %v2276 = vadd.f32 0.0, %v2275
    %2277 = vdwg.mxu0
    %2278 = vmatprep.subr.mxu0 %v2146
    %2279 = vmatpush1.msra.mxu0 %v2145
    %2280 = vmatprep.subr.mxu0 %v2150
    %2281 = vmatpush1.msra.mxu0 %v2149
    %2282 = vmatprep.subr.mxu0 %v2154
    %2283 = vmatpush1.msra.mxu0 %v2153
    %2284 = vmatprep.subr.mxu0 %v2158
    %2285 = vmatpush1.msra.mxu0 %v2157
    %2286 = vmatprep.subr.mxu0 %v2162
    %2287 = vmatpush1.msra.mxu0 %v2161
    %2288 = vmatprep.subr.mxu0 %v2166
    %2289 = vmatpush1.msra.mxu0 %v2165
    %2290 = vmatprep.subr.mxu0 %v2170
    %2291 = vmatpush1.msra.mxu0 %v2169
    %2292 = vmatprep.subr.mxu0 %v2174
    %2293 = vmatpush1.msra.mxu0 %v2173
    %2294 = vmatprep.subr.mxu0 %v2178
    %2295 = vmatpush1.msra.mxu0 %v2177
    %2296 = vmatprep.subr.mxu0 %v2182
    %2297 = vmatpush1.msra.mxu0 %v2181
    %2298 = vmatprep.subr.mxu0 %v2186
    %2299 = vmatpush1.msra.mxu0 %v2185
    %2300 = vmatprep.subr.mxu0 %v2190
    %2301 = vmatpush1.msra.mxu0 %v2189
    %2302 = vmatprep.subr.mxu0 %v2194
    %2303 = vmatpush1.msra.mxu0 %v2193
    %2304 = vmatprep.subr.mxu0 %v2198
    %2305 = vmatpush1.msra.mxu0 %v2197
    %2306 = vmatprep.subr.mxu0 %v2202
    %2307 = vmatpush1.msra.mxu0 %v2201
    %2308 = vmatprep.subr.mxu0 %v2206
    %2309 = vmatpush1.msra.mxu0 %v2205
    %2310 = vmatprep.subr.mxu0 0.0
    %2311 = vmatpush1.msra.mxu0 0.0
    %2312 = vmatprep.subr.mxu0 0.0
    %2313 = vmatpush1.msra.mxu0 0.0
    %2314 = vmatprep.subr.mxu0 0.0
    %2315 = vmatpush1.msra.mxu0 0.0
    %2316 = vmatprep.subr.mxu0 0.0
    %2317 = vmatpush1.msra.mxu0 0.0
    %2318 = vmatprep.subr.mxu0 0.0
    %2319 = vmatpush1.msra.mxu0 0.0
    %2320 = vmatprep.subr.mxu0 0.0
    %2321 = vmatpush1.msra.mxu0 0.0
    %2322 = vmatprep.subr.mxu0 0.0
    %2323 = vmatpush1.msra.mxu0 0.0
    %2324 = vmatprep.subr.mxu0 0.0
    %2325 = vmatpush1.msra.mxu0 0.0
    %2326 = vmatprep.subr.mxu0 0.0
    %2327 = vmatpush1.msra.mxu0 0.0
    %2328 = vmatprep.subr.mxu0 0.0
    %2329 = vmatpush1.msra.mxu0 0.0
    %2330 = vmatprep.subr.mxu0 0.0
    %2331 = vmatpush1.msra.mxu0 0.0
    %2332 = vmatprep.subr.mxu0 0.0
    %2333 = vmatpush1.msra.mxu0 0.0
    %2334 = vmatprep.subr.mxu0 0.0
    %2335 = vmatpush1.msra.mxu0 0.0
    %2336 = vmatprep.subr.mxu0 0.0
    %2337 = vmatpush1.msra.mxu0 0.0
    %2338 = vmatprep.subr.mxu0 0.0
    %2339 = vmatpush1.msra.mxu0 0.0
    %2340 = vmatprep.subr.mxu0 0.0
    %2341 = vmatpush1.msra.mxu0 0.0
    %2342 = vmatprep.mubr.f32.mxu0 0.0
    %2343 = vmatmul.mubr.f32.gmra.mrb[0].mxu0 %v2133
    %v2344 = vpop.f32.mrb[0].mxu0
    %v2345 = vadd.f32 0.0, %v2344
    %v2346 = vpop.f32.mrb[0].mxu0
    %v2347 = vadd.f32 0.0, %v2346
    %2348 = vdwg.mxu0
    %v2349 = vadd.f32 %v2139, %v2274
    %v2350 = vadd.f32 %v2140, %v2276
    %v2351 = vadd.f32 %v2141, %v2345
    %v2352 = vadd.f32 %v2142, %v2347
    %v2353 = vxor.u32 %v2349, 2147483648
    %v2354 = vxor.u32 %v2350, 2147483648
    %v2355 = vxor.u32 %v2351, 2147483648
    %v2356 = vxor.u32 %v2352, 2147483648
    %v2357 = vmul.f32 %v2353, 1.442695
    %v2358 = vpow.pop %v2357
    %v2359 = vmul.f32 %v2354, 1.442695
    %v2360 = vpow.pop %v2359
    %v2361 = vmul.f32 %v2355, 1.442695
    %v2362 = vpow.pop %v2361
    %v2363 = vmul.f32 %v2356, 1.442695
    %v2364 = vpow.pop %v2363
    %v2365 = vadd.f32 %v2358, 1.0
    %v2366 = vadd.f32 %v2360, 1.0
    %v2367 = vadd.f32 %v2362, 1.0
    %v2368 = vadd.f32 %v2364, 1.0
    %v2369 = vrcp.pop %v2365
    %v2370 = vmul.f32 1.0, %v2369
    %v2371 = vrcp.pop %v2366
    %v2372 = vmul.f32 1.0, %v2371
    %v2373 = vrcp.pop %v2367
    %v2374 = vmul.f32 1.0, %v2373
    %v2375 = vrcp.pop %v2368
    %v2376 = vmul.f32 1.0, %v2375
    %v2377 = vmul.f32 %v2374, 2.0
    %v2378 = vsub.f32 %v2377, 1.0
    %v2379 = vmul.f32 %v2372, %v2131
    %v2380 = vmul.f32 %v2370, %v2378
    %v2381 = vadd.f32 %v2379, %v2380
    %v2382 = vtanh.pop %v2381
    %v2383 = vmul.f32 %v2376, %v2382
    %s2384 = scalar_lea.vmem [#allocation10], 56
    %2385 = vst [vmem:[%s2384] sm:$0xff] %v2383
    %2386 = vst [vmem:[#allocation3] sm:$0xff] %v2383
    %2387 = vst [vmem:[#allocation4] sm:$0xff] %v2381
    // Predicated region
    $region30: #{tpu_custom_call.1} parent=1 // pred_check
      %p2388 = pneg %p50
    $region31: #{tpu_custom_call.1} parent=1 // pred_check_branch
      %2390 = sbr.rel (%p2388) target = $region33
    $region32: #{tpu_custom_call.1} parent=1 // pred_region
      %2391 = vst [vmem:[#allocation11] sm:$0xff] %v2383
      %2392 = vst [vmem:[#allocation13] sm:$0xff] %v2381
    $region33: #{tpu_custom_call.1} parent=1 // pred_fallthru
      _
    // Predicated region
    $region34: #{tpu_custom_call.1} parent=1 // pred_check
      _
    $region35: #{tpu_custom_call.1} parent=1 // pred_check_branch
      %2394 = sbr.rel (0) target = $region37
    $region36: #{tpu_custom_call.1} parent=1 // pred_region
      %s2396 = ssub.s32 1024, 1024
      %2397 = vsyncadd [#allocation7], %s2396
      %s2398 = sshll.u32 [#allocation10], 4
      %s2399 = int_to_ptr.vmem [resolvable:$true] %s2398
      %2404 = dma.vmem_to_hbm [thread:$0]  %s2399, 1024, %s4, [#allocation7], 128, 128, 8
    $region37: #{tpu_custom_call.1} parent=1 // pred_fallthru
      _
    // Predicated region
    $region38: #{tpu_custom_call.1} parent=1 // pred_check
      _
    $region39: #{tpu_custom_call.1} parent=1 // pred_check_branch
      %2406 = sbr.rel (0) target = $region41
    $region40: #{tpu_custom_call.1} parent=1 // pred_region
      %s2408 = ssub.s32 128, 128
      %2409 = vsyncadd [#allocation12], %s2408
      %s2411 = sshll.u32 [#allocation11], 4
      %s2412 = int_to_ptr.vmem [resolvable:$true] %s2411
      %2414 = dma.vmem_to_hbm [thread:$0]  %s2412, 128, %s5, [#allocation12]
    $region41: #{tpu_custom_call.1} parent=1 // pred_fallthru
      _
    // Predicated region
    $region42: #{tpu_custom_call.1} parent=1 // pred_check
      _
    $region43: #{tpu_custom_call.1} parent=1 // pred_check_branch
      %2416 = sbr.rel (0) target = $region45
    $region44: #{tpu_custom_call.1} parent=1 // pred_region
      %s2418 = ssub.s32 128, 128
      %2419 = vsyncadd [#allocation12], %s2418
      %s2421 = sshll.u32 [#allocation13], 4
      %s2422 = int_to_ptr.vmem [resolvable:$true] %s2421
      %2424 = dma.vmem_to_hbm [thread:$0]  %s2422, 128, %s6, [#allocation12]
    $region45: #{tpu_custom_call.1} parent=1 // pred_fallthru
      _
    // Predicated region
    $region46: #{tpu_custom_call.1} parent=1 // pred_check
      _
    $region47: #{tpu_custom_call.1} parent=1 // pred_check_branch
      %2426 = sbr.rel (0) target = $region49
    $region48: #{tpu_custom_call.1} parent=1 // pred_region
      %2427 = dma.done [#allocation7], 1024
    $region49: #{tpu_custom_call.1} parent=1 // pred_fallthru
      _
    // Predicated region
    $region50: #{tpu_custom_call.1} parent=1 // pred_check
      _
    $region51: #{tpu_custom_call.1} parent=1 // pred_check_branch
      %2429 = sbr.rel (0) target = $region53
    $region52: #{tpu_custom_call.1} parent=1 // pred_region
      %2430 = dma.done [#allocation12], 128
    $region53: #{tpu_custom_call.1} parent=1 // pred_fallthru
      _
    // Predicated region
    $region54: #{tpu_custom_call.1} parent=1 // pred_check
      _
    $region55: #{tpu_custom_call.1} parent=1 // pred_check_branch
      %2432 = sbr.rel (0) target = $region57
    $region56: #{tpu_custom_call.1} parent=1 // pred_region
      %2433 = dma.done [#allocation12], 128
    $region57: #{tpu_custom_call.1} parent=1 // pred_fallthru
      _
    %2434 = vsyncpa [#allocation6], 1
    %2435 = vsyncpa [#allocation9], 1
    %2436 = vsyncpa [#allocation7], 1
    %2437 = vsyncpa [#allocation12], 1

</llo_original>
